<compile_context>
chip_gen: v7x
topology: tpu7x:2x2x1
jax: 0.10.0
libtpu: 0.0.40
codegen_flags: <defaults>
</compile_context>

<pallas_src>
import jax
import jax.numpy as jnp
from jax.experimental import pallas as pl
from jax.experimental.pallas import tpu as pltpu

EPS = 1e-5  # nn.InstanceNorm2d default eps


def _rep(shape):
    """BlockSpec for an operand replicated across the (batch) grid."""
    nd = len(shape)
    return pl.BlockSpec(shape, lambda i, _nd=nd: (0,) * _nd)


def _in_prelu(y, g, bt, a, inv_n, mask=None):
    """Fused single-pass InstanceNorm2d(affine) + PReLU.  y: (C, N) f32; g/bt/a: (C, 1)."""
    ym = y if mask is None else jnp.where(mask, y, 0.0)
    m1 = jnp.sum(ym, axis=1, keepdims=True) * inv_n          # E[x]
    m2 = jnp.sum(ym * ym, axis=1, keepdims=True) * inv_n     # E[x^2]
    var = jnp.maximum(m2 - m1 * m1, 0.0)                     # guard catastrophic cancellation
    yn = (y - m1) * jax.lax.rsqrt(var + EPS) * g + bt
    return jnp.where(yn >= 0.0, yn, a * yn)


def _make_kernel(H, W, C, depth=4, mm_dtype=jnp.bfloat16):
    HW = H * W
    Wo = (W - 1) // 2 + 1          # conv_2 output width == number of even columns per row

    def kernel(x_ref, rowv_ref, colv_ref,
               w1_ref, b1_ref, g1_ref, bt1_ref, a1_ref,
               wd0_ref, wd1_ref, wd2_ref, wd3_ref,
               bd_ref, gd_ref, btd_ref, ad_ref,
               w2_ref, b2_ref, g2_ref, bt2_ref, a2_ref,
               o_ref, skip_ref):
        rowv = rowv_ref[...]                       # (1, HW) flat time index
        colv = colv_ref[...]                       # (1, HW) flat freq index
        inv_hw = 1.0 / HW

        # Hoisted, layer-independent frequency pad masks (ConstantPad2d (1,1,...,0)).
        col_l = colv >= 1.0                        # source col w-1 valid
        col_r = colv <= float(W - 2)               # source col w+1 valid
        # stride-2 output columns for conv_2's InstanceNorm statistics
        even_m = (colv * 0.5) == jnp.floor(colv * 0.5)

        def shift(x, dt, df, mask):
            """y[:, h*W+w] = x[:, (h+dt)*W + (w+df)], zero where the source is out of bounds.
            Roll wraps across time rows; the masks zero every wrapped lane."""
            d = dt * W + df
            r = (-d) % HW
            if r:
                x = pltpu.roll(x, r, 1)            # lane rotation (XLU slot -- cheap)
            if mask is not None:
                x = jnp.where(mask, x, jnp.zeros_like(x))
            return x

        # ---- conv_1: 1x1 conv (single matmul) + InstanceNorm + PReLU --------------------
        y = jnp.dot(w1_ref[...], x_ref[0].astype(mm_dtype),
                    preferred_element_type=jnp.float32) + b1_ref[...]
        out = _in_prelu(y, g1_ref[...], bt1_ref[...], a1_ref[...], inv_hw)
        skip_ref[depth - 1] = out.astype(mm_dtype)   # newest output -> lowest live slot later

        # ---- DilatedDenseNet(depth=4): 6 tap-accumulated matmuls per layer --------------
        wd_refs = (wd0_ref, wd1_ref, wd2_ref, wd3_ref)
        for i in range(depth):
            dil = 2 ** i
            nsl = i + 1
            # live skip slots are contiguous: [out_{i-1}, ..., out_0, conv1_out]
            slab = skip_ref[pl.ds(depth - 1 - i, nsl)].reshape(nsl * C, HW)
            row_m = rowv >= float(dil)             # causal time pad mask, shared by 3 kw taps
            masks = (jnp.logical_and(row_m, col_l), row_m, jnp.logical_and(row_m, col_r),
                     col_l, None, col_r)           # tap order: kh*3 + kw
            acc = None
            for kh in range(2):
                dt = (kh - 1) * dil
                for kw in range(3):
                    tap = kh * 3 + kw
                    piece = shift(slab, dt, kw - 1, masks[tap])
                    contrib = jnp.dot(wd_refs[i][tap], piece,
                                      preferred_element_type=jnp.float32)
                    acc = contrib if acc is None else acc + contrib
            y = acc + bd_ref[i]
            out = _in_prelu(y, gd_ref[i], btd_ref[i], ad_ref[i], inv_hw)
            if i < depth - 1:
                skip_ref[depth - 2 - i] = out.astype(mm_dtype)

        # ---- conv_2: (1,3) conv, stride (1,2), pad (0,1) + IN + PReLU --------------------
        # Computed at every freq position; IN statistics use only the stride-2 (even)
        # columns (count == H*Wo); the host keeps exactly those columns afterwards.
        out_mm = out.astype(mm_dtype)
        cmask = (col_l, None, col_r)
        acc = None
        for kw in range(3):
            piece = shift(out_mm, 0, kw - 1, cmask[kw])
            contrib = jnp.dot(w2_ref[kw], piece, preferred_element_type=jnp.float32)
            acc = contrib if acc is None else acc + contrib
        y = acc + b2_ref[...]
        y = _in_prelu(y, g2_ref[...], bt2_ref[...], a2_ref[...],
                      1.0 / (H * Wo), mask=even_m)
        o_ref[0] = y

    return kernel


def dense_encoder_forward(x_nchw, params, mm_dtype=jnp.bfloat16):
    """Fused Pallas DenseEncoder forward.  Input NCHW (B, in_channel, T, F), output NCHW.

    mm_dtype: dtype of the matmul operands (weights + skip slabs).  bf16 triples MXU
    throughput on v6e/v7x and halves the skip scratch; IN/PReLU math stays f32.
    """
    B, C0, H, W = x_nchw.shape
    C = params['w1'].shape[0]
    HW = H * W

    xf = x_nchw.astype(jnp.float32).reshape(B, C0, HW)      # channels-first, flat spatial

    # flat (time, freq) index vectors for the in-kernel pad / even-column masks
    cols = jnp.arange(HW, dtype=jnp.int32) % W
    rows = jnp.arange(HW, dtype=jnp.int32) // W
    rowv = rows.astype(jnp.float32).reshape(1, HW)
    colv = cols.astype(jnp.float32).reshape(1, HW)

    # weight-stationary per-tap layouts: (n_taps, Cout, Cin) matching the skip slab order
    w1 = params['w1'].astype(mm_dtype)                                       # (C, C0)
    wd = [jnp.transpose(params['dense'][i]['w'], (0, 1, 3, 2))
          .reshape(6, C, C * (i + 1)).astype(mm_dtype) for i in range(4)]    # (6, C, cin)
    bd = jnp.stack([params['dense'][i]['b'] for i in range(4)])              # (4, C, 1)
    gd = jnp.stack([params['dense'][i]['g'] for i in range(4)])
    btd = jnp.stack([params['dense'][i]['bt'] for i in range(4)])
    ad = jnp.stack([params['dense'][i]['a'] for i in range(4)])
    w2 = jnp.transpose(params['w2'], (0, 2, 1)).astype(mm_dtype)             # (3, Cout, Cin)

    ops = [rowv, colv,
           w1, params['b1'], params['g1'], params['bt1'], params['a1'],
           wd[0], wd[1], wd[2], wd[3], bd, gd, btd, ad,
           w2, params['b2'], params['g2'], params['bt2'], params['a2']]

    in_specs = [pl.BlockSpec((1, C0, HW), lambda i: (i, 0, 0))]
    in_specs += [_rep(o.shape) for o in ops]

    yf = pl.pallas_call(
        _make_kernel(H, W, C, depth=4, mm_dtype=mm_dtype),
        out_shape=jax.ShapeDtypeStruct((B, C, HW), jnp.float32),
        grid=(B,),
        in_specs=in_specs,
        out_specs=pl.BlockSpec((1, C, HW), lambda i: (i, 0, 0)),
        scratch_shapes=[pltpu.VMEM((4, C, HW), mm_dtype)],
        compiler_params=pltpu.CompilerParams(
            dimension_semantics=("parallel",),
            # above the 16/32 MiB default scoped limit; tune per chip (<=56 MiB on v7x,
            # up to ~100 MiB on v5e/v6e) once shapes are non-trivial.
            vmem_limit_bytes=64 * 1024 * 1024),
    )(xf, *ops)

    # stride-2 frequency selection for conv_2; must stay ::2 -- the in-kernel IN statistics
    # were computed over exactly these (even) columns.
    return yf.reshape(B, C, H, W)[:, :, :, ::2]


# ---------------- deterministic parameter init (shapes match the PyTorch module) ----------
def init_params(key, in_channel, channels):
    k = key

    def nrm(shape, scale=0.1):
        nonlocal k
        k, sub = jax.random.split(k)
        return scale * jax.random.normal(sub, shape, jnp.float32)

    params = {
        'w1': nrm((channels, in_channel)),            # Conv2d(in,C,(1,1)) weight (Cout,Cin)
        'b1': nrm((channels, 1)),
        'g1': 1.0 + nrm((channels, 1)),
        'bt1': nrm((channels, 1)),
        'a1': 0.25 * jnp.ones((channels, 1), jnp.float32),
        'dense': [],
        'w2': nrm((3, channels, channels)),           # Conv2d(C,C,(1,3)) weight (kw,Cin,Cout)
        'b2': nrm((channels, 1)),
        'g2': 1.0 + nrm((channels, 1)),
        'bt2': nrm((channels, 1)),
        'a2': 0.25 * jnp.ones((channels, 1), jnp.float32),
    }
    for i in range(4):
        cin = channels * (i + 1)
        params['dense'].append(dict(
            w=nrm((2, 3, cin, channels)),             # (kh, kw, Cin, Cout)  (HWIO)
            b=nrm((channels, 1)),
            g=1.0 + nrm((channels, 1)),
            bt=nrm((channels, 1)),
            a=0.25 * jnp.ones((channels, 1), jnp.float32),
        ))
    return params


# ---------------- pure-JAX reference (lax.conv) for correctness check ----------------------
def ref_forward(x_nchw, params):
    x = jnp.transpose(x_nchw, (0, 2, 3, 1)).astype(jnp.float32)
    dn = ('NHWC', 'HWIO', 'NHWC')

    def conv(x, w, b, stride, padding, dilation):
        y = jax.lax.conv_general_dilated(x, w, window_strides=stride, padding=padding,
                                         rhs_dilation=dilation, dimension_numbers=dn,
                                         precision=jax.lax.Precision.HIGHEST)
        return y + b.reshape(1, 1, 1, -1)

    def inp(y, g, bt, a):
        m = jnp.mean(y, axis=(1, 2), keepdims=True)
        v = jnp.mean((y - m) ** 2, axis=(1, 2), keepdims=True)
        yn = (y - m) * jax.lax.rsqrt(v + EPS) * g.reshape(1, 1, 1, -1) + bt.reshape(1, 1, 1, -1)
        return jnp.where(yn >= 0, yn, a.reshape(1, 1, 1, -1) * yn)

    w1 = jnp.transpose(params['w1'])[None, None]      # (1, 1, Cin, Cout)
    y = conv(x, w1, params['b1'], (1, 1), [(0, 0), (0, 0)], (1, 1))
    y = inp(y, params['g1'], params['bt1'], params['a1'])
    skip, out = y, y
    for i in range(4):
        dil = 2 ** i
        p = params['dense'][i]
        out = conv(skip, p['w'], p['b'], (1, 1), [(dil, 0), (1, 1)], (dil, 1))
        out = inp(out, p['g'], p['bt'], p['a'])
        skip = jnp.concatenate([out, skip], axis=-1)
    y = conv(out, params['w2'][None], params['b2'], (1, 2), [(0, 0), (1, 1)], (1, 1))
    y = inp(y, params['g2'], params['bt2'], params['a2'])
    return jnp.transpose(y, (0, 3, 1, 2))


if __name__ == "__main__":
    key = jax.random.PRNGKey(0)
    kx, kp = jax.random.split(key)
    B, in_channel, T, F = 2, 2, 8, 16
    channels = 8

    x = jax.random.normal(kx, (B, in_channel, T, F), jnp.float32)
    params = init_params(kp, in_channel, channels)
    ref = ref_forward(x, params)
    Fo = (F + 2 - 3) // 2 + 1

    # --- f32 matmul path: tight tolerance (makes real regressions measurable) ------------
    out32 = jax.jit(lambda xx: dense_encoder_forward(xx, params, jnp.float32))(x)
    out32 = jax.block_until_ready(out32)
    assert out32.shape == (B, channels, T, Fo), out32.shape
    err32 = float(jnp.max(jnp.abs(out32 - ref)))
    if not (err32 < 1e-3):
        raise AssertionError(f"Pallas (f32) vs reference mismatch: max abs err = {err32}")

    # --- bf16 matmul path (default; MXU-friendly on v6e/v7x): bf16-rounding-limited tol ---
    out16 = jax.jit(lambda xx: dense_encoder_forward(xx, params, jnp.bfloat16))(x)
    out16 = jax.block_until_ready(out16)
    assert out16.shape == (B, channels, T, Fo), out16.shape
    err16 = float(jnp.max(jnp.abs(out16 - ref)))
    if not (err16 < 1e-1):
        raise AssertionError(f"Pallas (bf16) vs reference mismatch: max abs err = {err16}")

    print("KERNEL_OK")
</pallas_src>

<mosaic_0001>
module attributes {stable_mosaic.version = 11 : i64} {
  func.func @kernel(%arg0: i32, %arg1: memref<1x2x128xf32, #tpu.memory_space<vmem>>, %arg2: memref<1x128xf32, #tpu.memory_space<vmem>>, %arg3: memref<1x128xf32, #tpu.memory_space<vmem>>, %arg4: memref<8x2xf32, #tpu.memory_space<vmem>>, %arg5: memref<8x1xf32, #tpu.memory_space<vmem>>, %arg6: memref<8x1xf32, #tpu.memory_space<vmem>>, %arg7: memref<8x1xf32, #tpu.memory_space<vmem>>, %arg8: memref<8x1xf32, #tpu.memory_space<vmem>>, %arg9: memref<6x8x8xf32, #tpu.memory_space<vmem>>, %arg10: memref<6x8x16xf32, #tpu.memory_space<vmem>>, %arg11: memref<6x8x24xf32, #tpu.memory_space<vmem>>, %arg12: memref<6x8x32xf32, #tpu.memory_space<vmem>>, %arg13: memref<4x8x1xf32, #tpu.memory_space<vmem>>, %arg14: memref<4x8x1xf32, #tpu.memory_space<vmem>>, %arg15: memref<4x8x1xf32, #tpu.memory_space<vmem>>, %arg16: memref<4x8x1xf32, #tpu.memory_space<vmem>>, %arg17: memref<3x8x8xf32, #tpu.memory_space<vmem>>, %arg18: memref<8x1xf32, #tpu.memory_space<vmem>>, %arg19: memref<8x1xf32, #tpu.memory_space<vmem>>, %arg20: memref<8x1xf32, #tpu.memory_space<vmem>>, %arg21: memref<8x1xf32, #tpu.memory_space<vmem>>, %arg22: memref<1x8x128xf32, #tpu.memory_space<vmem>>, %arg23: memref<4x8x128xf32, #tpu.memory_space<vmem>>) attributes {dimension_semantics = [#tpu.dimension_semantics<parallel>], iteration_bounds = array<i64: 2>, scalar_prefetch = 0 : i64, scratch_operands = 1 : i64, tpu.core_type = #tpu.core_type<tc>, window_params = [{transform_indices = @transform_0, window_bounds = array<i64: 1, 2, 128>}, {pipeline_mode = #tpu.pipeline_mode<synchronous>, transform_indices = @transform_1, window_bounds = array<i64: 1, 128>}, {pipeline_mode = #tpu.pipeline_mode<synchronous>, transform_indices = @transform_2, window_bounds = array<i64: 1, 128>}, {pipeline_mode = #tpu.pipeline_mode<synchronous>, transform_indices = @transform_3, window_bounds = array<i64: 8, 2>}, {pipeline_mode = #tpu.pipeline_mode<synchronous>, transform_indices = @transform_4, window_bounds = array<i64: 8, 1>}, {pipeline_mode = #tpu.pipeline_mode<synchronous>, transform_indices = @transform_5, window_bounds = array<i64: 8, 1>}, {pipeline_mode = #tpu.pipeline_mode<synchronous>, transform_indices = @transform_6, window_bounds = array<i64: 8, 1>}, {pipeline_mode = #tpu.pipeline_mode<synchronous>, transform_indices = @transform_7, window_bounds = array<i64: 8, 1>}, {pipeline_mode = #tpu.pipeline_mode<synchronous>, transform_indices = @transform_8, window_bounds = array<i64: 6, 8, 8>}, {pipeline_mode = #tpu.pipeline_mode<synchronous>, transform_indices = @transform_9, window_bounds = array<i64: 6, 8, 16>}, {pipeline_mode = #tpu.pipeline_mode<synchronous>, transform_indices = @transform_10, window_bounds = array<i64: 6, 8, 24>}, {pipeline_mode = #tpu.pipeline_mode<synchronous>, transform_indices = @transform_11, window_bounds = array<i64: 6, 8, 32>}, {pipeline_mode = #tpu.pipeline_mode<synchronous>, transform_indices = @transform_12, window_bounds = array<i64: 4, 8, 1>}, {pipeline_mode = #tpu.pipeline_mode<synchronous>, transform_indices = @transform_13, window_bounds = array<i64: 4, 8, 1>}, {pipeline_mode = #tpu.pipeline_mode<synchronous>, transform_indices = @transform_14, window_bounds = array<i64: 4, 8, 1>}, {pipeline_mode = #tpu.pipeline_mode<synchronous>, transform_indices = @transform_15, window_bounds = array<i64: 4, 8, 1>}, {pipeline_mode = #tpu.pipeline_mode<synchronous>, transform_indices = @transform_16, window_bounds = array<i64: 3, 8, 8>}, {pipeline_mode = #tpu.pipeline_mode<synchronous>, transform_indices = @transform_17, window_bounds = array<i64: 8, 1>}, {pipeline_mode = #tpu.pipeline_mode<synchronous>, transform_indices = @transform_18, window_bounds = array<i64: 8, 1>}, {pipeline_mode = #tpu.pipeline_mode<synchronous>, transform_indices = @transform_19, window_bounds = array<i64: 8, 1>}, {pipeline_mode = #tpu.pipeline_mode<synchronous>, transform_indices = @transform_20, window_bounds = array<i64: 8, 1>}, {transform_indices = @transform_21, window_bounds = array<i64: 1, 8, 128>}]} {
    %c0 = arith.constant 0 : index
    %c0_0 = arith.constant 0 : index
    %0 = vector.load %arg2[%c0, %c0_0] : memref<1x128xf32, #tpu.memory_space<vmem>>, vector<1x128xf32>
    %c0_1 = arith.constant 0 : index
    %c0_2 = arith.constant 0 : index
    %1 = vector.load %arg3[%c0_1, %c0_2] : memref<1x128xf32, #tpu.memory_space<vmem>>, vector<1x128xf32>
    %cst = arith.constant 1.000000e+00 : f32
    %2 = vector.broadcast %cst : f32 to vector<1x128xf32>
    %3 = arith.cmpf oge, %1, %2 : vector<1x128xf32>
    %cst_3 = arith.constant 1.400000e+01 : f32
    %4 = vector.broadcast %cst_3 : f32 to vector<1x128xf32>
    %5 = arith.cmpf ole, %1, %4 : vector<1x128xf32>
    %cst_4 = arith.constant 5.000000e-01 : f32
    %6 = vector.broadcast %cst_4 : f32 to vector<1x128xf32>
    %7 = arith.mulf %1, %6 : vector<1x128xf32>
    %cst_5 = arith.constant 5.000000e-01 : f32
    %8 = vector.broadcast %cst_5 : f32 to vector<1x128xf32>
    %9 = arith.mulf %1, %8 : vector<1x128xf32>
    %10 = math.floor %9 : vector<1x128xf32>
    %11 = arith.cmpf oeq, %7, %10 : vector<1x128xf32>
    %c0_6 = arith.constant 0 : index
    %c0_7 = arith.constant 0 : index
    %12 = vector.load %arg4[%c0_6, %c0_7] : memref<8x2xf32, #tpu.memory_space<vmem>>, vector<8x2xf32>
    %c0_8 = arith.constant 0 : index
    %c0_9 = arith.constant 0 : index
    %c0_10 = arith.constant 0 : index
    %13 = vector.load %arg1[%c0_8, %c0_9, %c0_10] : memref<1x2x128xf32, #tpu.memory_space<vmem>>, vector<1x2x128xf32>
    %14 = vector.shape_cast %13 : vector<1x2x128xf32> to vector<2x128xf32>
    %cst_11 = arith.constant dense<0.000000e+00> : vector<8x128xf32>
    %15 = tpu.matmul %12, %14, %cst_11 {dimension_numbers = #tpu.dot_dimension_numbers<[1], [0], [0], [1], [0, 0, 1, 1], [], []>} : vector<8x2xf32>, vector<2x128xf32>, vector<8x128xf32> -> vector<8x128xf32>
    %c0_12 = arith.constant 0 : index
    %c0_13 = arith.constant 0 : index
    %16 = vector.load %arg5[%c0_12, %c0_13] : memref<8x1xf32, #tpu.memory_space<vmem>>, vector<8x1xf32>
    %17 = vector.broadcast %16 : vector<8x1xf32> to vector<8x128xf32>
    %18 = arith.addf %15, %17 : vector<8x128xf32>
    %c0_14 = arith.constant 0 : index
    %c0_15 = arith.constant 0 : index
    %19 = vector.load %arg6[%c0_14, %c0_15] : memref<8x1xf32, #tpu.memory_space<vmem>>, vector<8x1xf32>
    %c0_16 = arith.constant 0 : index
    %c0_17 = arith.constant 0 : index
    %20 = vector.load %arg7[%c0_16, %c0_17] : memref<8x1xf32, #tpu.memory_space<vmem>>, vector<8x1xf32>
    %c0_18 = arith.constant 0 : index
    %c0_19 = arith.constant 0 : index
    %21 = vector.load %arg8[%c0_18, %c0_19] : memref<8x1xf32, #tpu.memory_space<vmem>>, vector<8x1xf32>
    %cst_20 = arith.constant dense<0.000000e+00> : vector<8xf32>
    %22 = vector.multi_reduction <add>, %18, %cst_20 [1] : vector<8x128xf32> to vector<8xf32>
    %23 = vector.shape_cast %22 : vector<8xf32> to vector<8x1xf32>
    %cst_21 = arith.constant 7.812500e-03 : f32
    %24 = vector.broadcast %cst_21 : f32 to vector<8x1xf32>
    %25 = arith.mulf %23, %24 : vector<8x1xf32>
    %26 = arith.mulf %18, %18 : vector<8x128xf32>
    %cst_22 = arith.constant dense<0.000000e+00> : vector<8xf32>
    %27 = vector.multi_reduction <add>, %26, %cst_22 [1] : vector<8x128xf32> to vector<8xf32>
    %28 = vector.shape_cast %27 : vector<8xf32> to vector<8x1xf32>
    %cst_23 = arith.constant 7.812500e-03 : f32
    %29 = vector.broadcast %cst_23 : f32 to vector<8x1xf32>
    %30 = arith.mulf %28, %29 : vector<8x1xf32>
    %31 = arith.mulf %25, %25 : vector<8x1xf32>
    %32 = arith.subf %30, %31 : vector<8x1xf32>
    %cst_24 = arith.constant 0.000000e+00 : f32
    %33 = vector.broadcast %cst_24 : f32 to vector<8x1xf32>
    %34 = arith.maximumf %32, %33 : vector<8x1xf32>
    %35 = vector.broadcast %25 : vector<8x1xf32> to vector<8x128xf32>
    %36 = arith.subf %18, %35 : vector<8x128xf32>
    %cst_25 = arith.constant 9.99999974E-6 : f32
    %37 = vector.broadcast %cst_25 : f32 to vector<8x1xf32>
    %38 = arith.addf %34, %37 : vector<8x1xf32>
    %39 = math.rsqrt %38 : vector<8x1xf32>
    %40 = vector.broadcast %39 : vector<8x1xf32> to vector<8x128xf32>
    %41 = arith.mulf %36, %40 : vector<8x128xf32>
    %42 = vector.broadcast %19 : vector<8x1xf32> to vector<8x128xf32>
    %43 = arith.mulf %41, %42 : vector<8x128xf32>
    %44 = vector.broadcast %20 : vector<8x1xf32> to vector<8x128xf32>
    %45 = arith.addf %43, %44 : vector<8x128xf32>
    %cst_26 = arith.constant 0.000000e+00 : f32
    %46 = vector.broadcast %cst_26 : f32 to vector<8x128xf32>
    %47 = arith.cmpf oge, %45, %46 : vector<8x128xf32>
    %48 = vector.broadcast %21 : vector<8x1xf32> to vector<8x128xf32>
    %49 = arith.mulf %48, %45 : vector<8x128xf32>
    %50 = arith.select %47, %45, %49 : vector<8x128xi1>, vector<8x128xf32>
    %c3 = arith.constant 3 : index
    %c0_27 = arith.constant 0 : index
    %c0_28 = arith.constant 0 : index
    %51 = vector.load %arg23[%c3, %c0_27, %c0_28] : memref<4x8x128xf32, #tpu.memory_space<vmem>>, vector<1x8x128xf32>
    %52 = vector.shape_cast %51 : vector<1x8x128xf32> to vector<8x128xf32>
    %53 = vector.shape_cast %50 : vector<8x128xf32> to vector<1x8x128xf32>
    tpu.vector_store %arg23[%c3, %c0_27, %c0_28], %53 {strides = array<i32>} : memref<4x8x128xf32, #tpu.memory_space<vmem>>, vector<1x8x128xf32>,
    %c3_29 = arith.constant 3 : index
    %c0_30 = arith.constant 0 : index
    %c0_31 = arith.constant 0 : index
    %54 = vector.load %arg23[%c3_29, %c0_30, %c0_31] : memref<4x8x128xf32, #tpu.memory_space<vmem>>, vector<1x8x128xf32>
    %55 = vector.shape_cast %54 : vector<1x8x128xf32> to vector<8x128xf32>
    %cst_32 = arith.constant 1.000000e+00 : f32
    %56 = vector.broadcast %cst_32 : f32 to vector<1x128xf32>
    %57 = arith.cmpf oge, %0, %56 : vector<1x128xf32>
    %58 = arith.andi %57, %3 : vector<1x128xi1>
    %59 = arith.andi %57, %5 : vector<1x128xi1>
    %c17_i32 = arith.constant 17 : i32
    %60 = tpu.dynamic_rotate %55 by %c17_i32 dim 1 : vector<8x128xf32>, i32 -> vector<8x128xf32>
    %cst_33 = arith.constant 0.000000e+00 : f32
    %61 = vector.broadcast %cst_33 : f32 to vector<8x128xf32>
    %62 = vector.shape_cast %58 : vector<1x128xi1> to vector<1x128xi1>
    %63 = vector.broadcast %62 : vector<1x128xi1> to vector<8x128xi1>
    %64 = arith.select %63, %60, %61 : vector<8x128xi1>, vector<8x128xf32>
    %c0_34 = arith.constant 0 : index
    %c0_35 = arith.constant 0 : index
    %c0_36 = arith.constant 0 : index
    %65 = vector.load %arg9[%c0_34, %c0_35, %c0_36] : memref<6x8x8xf32, #tpu.memory_space<vmem>>, vector<1x8x8xf32>
    %66 = vector.shape_cast %65 : vector<1x8x8xf32> to vector<8x8xf32>
    %cst_37 = arith.constant dense<0.000000e+00> : vector<8x128xf32>
    %67 = tpu.matmul %66, %64, %cst_37 {dimension_numbers = #tpu.dot_dimension_numbers<[1], [0], [0], [1], [0, 0, 1, 1], [], []>} : vector<8x8xf32>, vector<8x128xf32>, vector<8x128xf32> -> vector<8x128xf32>
    %c16_i32 = arith.constant 16 : i32
    %68 = tpu.dynamic_rotate %55 by %c16_i32 dim 1 : vector<8x128xf32>, i32 -> vector<8x128xf32>
    %cst_38 = arith.constant 0.000000e+00 : f32
    %69 = vector.broadcast %cst_38 : f32 to vector<8x128xf32>
    %70 = vector.shape_cast %57 : vector<1x128xi1> to vector<1x128xi1>
    %71 = vector.broadcast %70 : vector<1x128xi1> to vector<8x128xi1>
    %72 = arith.select %71, %68, %69 : vector<8x128xi1>, vector<8x128xf32>
    %c1 = arith.constant 1 : index
    %c0_39 = arith.constant 0 : index
    %c0_40 = arith.constant 0 : index
    %73 = vector.load %arg9[%c1, %c0_39, %c0_40] : memref<6x8x8xf32, #tpu.memory_space<vmem>>, vector<1x8x8xf32>
    %74 = vector.shape_cast %73 : vector<1x8x8xf32> to vector<8x8xf32>
    %cst_41 = arith.constant dense<0.000000e+00> : vector<8x128xf32>
    %75 = tpu.matmul %74, %72, %cst_41 {dimension_numbers = #tpu.dot_dimension_numbers<[1], [0], [0], [1], [0, 0, 1, 1], [], []>} : vector<8x8xf32>, vector<8x128xf32>, vector<8x128xf32> -> vector<8x128xf32>
    %76 = arith.addf %67, %75 : vector<8x128xf32>
    %c15_i32 = arith.constant 15 : i32
    %77 = tpu.dynamic_rotate %55 by %c15_i32 dim 1 : vector<8x128xf32>, i32 -> vector<8x128xf32>
    %cst_42 = arith.constant 0.000000e+00 : f32
    %78 = vector.broadcast %cst_42 : f32 to vector<8x128xf32>
    %79 = vector.shape_cast %59 : vector<1x128xi1> to vector<1x128xi1>
    %80 = vector.broadcast %79 : vector<1x128xi1> to vector<8x128xi1>
    %81 = arith.select %80, %77, %78 : vector<8x128xi1>, vector<8x128xf32>
    %c2 = arith.constant 2 : index
    %c0_43 = arith.constant 0 : index
    %c0_44 = arith.constant 0 : index
    %82 = vector.load %arg9[%c2, %c0_43, %c0_44] : memref<6x8x8xf32, #tpu.memory_space<vmem>>, vector<1x8x8xf32>
    %83 = vector.shape_cast %82 : vector<1x8x8xf32> to vector<8x8xf32>
    %cst_45 = arith.constant dense<0.000000e+00> : vector<8x128xf32>
    %84 = tpu.matmul %83, %81, %cst_45 {dimension_numbers = #tpu.dot_dimension_numbers<[1], [0], [0], [1], [0, 0, 1, 1], [], []>} : vector<8x8xf32>, vector<8x128xf32>, vector<8x128xf32> -> vector<8x128xf32>
    %85 = arith.addf %76, %84 : vector<8x128xf32>
    %c1_i32 = arith.constant 1 : i32
    %86 = tpu.dynamic_rotate %55 by %c1_i32 dim 1 : vector<8x128xf32>, i32 -> vector<8x128xf32>
    %cst_46 = arith.constant 0.000000e+00 : f32
    %87 = vector.broadcast %cst_46 : f32 to vector<8x128xf32>
    %88 = vector.shape_cast %3 : vector<1x128xi1> to vector<1x128xi1>
    %89 = vector.broadcast %88 : vector<1x128xi1> to vector<8x128xi1>
    %90 = arith.select %89, %86, %87 : vector<8x128xi1>, vector<8x128xf32>
    %c3_47 = arith.constant 3 : index
    %c0_48 = arith.constant 0 : index
    %c0_49 = arith.constant 0 : index
    %91 = vector.load %arg9[%c3_47, %c0_48, %c0_49] : memref<6x8x8xf32, #tpu.memory_space<vmem>>, vector<1x8x8xf32>
    %92 = vector.shape_cast %91 : vector<1x8x8xf32> to vector<8x8xf32>
    %cst_50 = arith.constant dense<0.000000e+00> : vector<8x128xf32>
    %93 = tpu.matmul %92, %90, %cst_50 {dimension_numbers = #tpu.dot_dimension_numbers<[1], [0], [0], [1], [0, 0, 1, 1], [], []>} : vector<8x8xf32>, vector<8x128xf32>, vector<8x128xf32> -> vector<8x128xf32>
    %94 = arith.addf %85, %93 : vector<8x128xf32>
    %c4 = arith.constant 4 : index
    %c0_51 = arith.constant 0 : index
    %c0_52 = arith.constant 0 : index
    %95 = vector.load %arg9[%c4, %c0_51, %c0_52] : memref<6x8x8xf32, #tpu.memory_space<vmem>>, vector<1x8x8xf32>
    %96 = vector.shape_cast %95 : vector<1x8x8xf32> to vector<8x8xf32>
    %cst_53 = arith.constant dense<0.000000e+00> : vector<8x128xf32>
    %97 = tpu.matmul %96, %55, %cst_53 {dimension_numbers = #tpu.dot_dimension_numbers<[1], [0], [0], [1], [0, 0, 1, 1], [], []>} : vector<8x8xf32>, vector<8x128xf32>, vector<8x128xf32> -> vector<8x128xf32>
    %98 = arith.addf %94, %97 : vector<8x128xf32>
    %c127_i32 = arith.constant 127 : i32
    %99 = tpu.dynamic_rotate %55 by %c127_i32 dim 1 : vector<8x128xf32>, i32 -> vector<8x128xf32>
    %cst_54 = arith.constant 0.000000e+00 : f32
    %100 = vector.broadcast %cst_54 : f32 to vector<8x128xf32>
    %101 = vector.shape_cast %5 : vector<1x128xi1> to vector<1x128xi1>
    %102 = vector.broadcast %101 : vector<1x128xi1> to vector<8x128xi1>
    %103 = arith.select %102, %99, %100 : vector<8x128xi1>, vector<8x128xf32>
    %c5 = arith.constant 5 : index
    %c0_55 = arith.constant 0 : index
    %c0_56 = arith.constant 0 : index
    %104 = vector.load %arg9[%c5, %c0_55, %c0_56] : memref<6x8x8xf32, #tpu.memory_space<vmem>>, vector<1x8x8xf32>
    %105 = vector.shape_cast %104 : vector<1x8x8xf32> to vector<8x8xf32>
    %cst_57 = arith.constant dense<0.000000e+00> : vector<8x128xf32>
    %106 = tpu.matmul %105, %103, %cst_57 {dimension_numbers = #tpu.dot_dimension_numbers<[1], [0], [0], [1], [0, 0, 1, 1], [], []>} : vector<8x8xf32>, vector<8x128xf32>, vector<8x128xf32> -> vector<8x128xf32>
    %107 = arith.addf %98, %106 : vector<8x128xf32>
    %c0_58 = arith.constant 0 : index
    %c0_59 = arith.constant 0 : index
    %c0_60 = arith.constant 0 : index
    %108 = vector.load %arg13[%c0_58, %c0_59, %c0_60] : memref<4x8x1xf32, #tpu.memory_space<vmem>>, vector<1x8x1xf32>
    %109 = vector.shape_cast %108 : vector<1x8x1xf32> to vector<8x1xf32>
    %110 = vector.broadcast %109 : vector<8x1xf32> to vector<8x128xf32>
    %111 = arith.addf %107, %110 : vector<8x128xf32>
    %c0_61 = arith.constant 0 : index
    %c0_62 = arith.constant 0 : index
    %c0_63 = arith.constant 0 : index
    %112 = vector.load %arg14[%c0_61, %c0_62, %c0_63] : memref<4x8x1xf32, #tpu.memory_space<vmem>>, vector<1x8x1xf32>
    %113 = vector.shape_cast %112 : vector<1x8x1xf32> to vector<8x1xf32>
    %c0_64 = arith.constant 0 : index
    %c0_65 = arith.constant 0 : index
    %c0_66 = arith.constant 0 : index
    %114 = vector.load %arg15[%c0_64, %c0_65, %c0_66] : memref<4x8x1xf32, #tpu.memory_space<vmem>>, vector<1x8x1xf32>
    %115 = vector.shape_cast %114 : vector<1x8x1xf32> to vector<8x1xf32>
    %c0_67 = arith.constant 0 : index
    %c0_68 = arith.constant 0 : index
    %c0_69 = arith.constant 0 : index
    %116 = vector.load %arg16[%c0_67, %c0_68, %c0_69] : memref<4x8x1xf32, #tpu.memory_space<vmem>>, vector<1x8x1xf32>
    %117 = vector.shape_cast %116 : vector<1x8x1xf32> to vector<8x1xf32>
    %cst_70 = arith.constant dense<0.000000e+00> : vector<8xf32>
    %118 = vector.multi_reduction <add>, %111, %cst_70 [1] : vector<8x128xf32> to vector<8xf32>
    %119 = vector.shape_cast %118 : vector<8xf32> to vector<8x1xf32>
    %cst_71 = arith.constant 7.812500e-03 : f32
    %120 = vector.broadcast %cst_71 : f32 to vector<8x1xf32>
    %121 = arith.mulf %119, %120 : vector<8x1xf32>
    %122 = arith.mulf %111, %111 : vector<8x128xf32>
    %cst_72 = arith.constant dense<0.000000e+00> : vector<8xf32>
    %123 = vector.multi_reduction <add>, %122, %cst_72 [1] : vector<8x128xf32> to vector<8xf32>
    %124 = vector.shape_cast %123 : vector<8xf32> to vector<8x1xf32>
    %cst_73 = arith.constant 7.812500e-03 : f32
    %125 = vector.broadcast %cst_73 : f32 to vector<8x1xf32>
    %126 = arith.mulf %124, %125 : vector<8x1xf32>
    %127 = arith.mulf %121, %121 : vector<8x1xf32>
    %128 = arith.subf %126, %127 : vector<8x1xf32>
    %cst_74 = arith.constant 0.000000e+00 : f32
    %129 = vector.broadcast %cst_74 : f32 to vector<8x1xf32>
    %130 = arith.maximumf %128, %129 : vector<8x1xf32>
    %131 = vector.broadcast %121 : vector<8x1xf32> to vector<8x128xf32>
    %132 = arith.subf %111, %131 : vector<8x128xf32>
    %cst_75 = arith.constant 9.99999974E-6 : f32
    %133 = vector.broadcast %cst_75 : f32 to vector<8x1xf32>
    %134 = arith.addf %130, %133 : vector<8x1xf32>
    %135 = math.rsqrt %134 : vector<8x1xf32>
    %136 = vector.broadcast %135 : vector<8x1xf32> to vector<8x128xf32>
    %137 = arith.mulf %132, %136 : vector<8x128xf32>
    %138 = vector.broadcast %113 : vector<8x1xf32> to vector<8x128xf32>
    %139 = arith.mulf %137, %138 : vector<8x128xf32>
    %140 = vector.broadcast %115 : vector<8x1xf32> to vector<8x128xf32>
    %141 = arith.addf %139, %140 : vector<8x128xf32>
    %cst_76 = arith.constant 0.000000e+00 : f32
    %142 = vector.broadcast %cst_76 : f32 to vector<8x128xf32>
    %143 = arith.cmpf oge, %141, %142 : vector<8x128xf32>
    %144 = vector.broadcast %117 : vector<8x1xf32> to vector<8x128xf32>
    %145 = arith.mulf %144, %141 : vector<8x128xf32>
    %146 = arith.select %143, %141, %145 : vector<8x128xi1>, vector<8x128xf32>
    %c2_77 = arith.constant 2 : index
    %c0_78 = arith.constant 0 : index
    %c0_79 = arith.constant 0 : index
    %147 = vector.load %arg23[%c2_77, %c0_78, %c0_79] : memref<4x8x128xf32, #tpu.memory_space<vmem>>, vector<1x8x128xf32>
    %148 = vector.shape_cast %147 : vector<1x8x128xf32> to vector<8x128xf32>
    %149 = vector.shape_cast %146 : vector<8x128xf32> to vector<1x8x128xf32>
    tpu.vector_store %arg23[%c2_77, %c0_78, %c0_79], %149 {strides = array<i32>} : memref<4x8x128xf32, #tpu.memory_space<vmem>>, vector<1x8x128xf32>,
    %c2_80 = arith.constant 2 : index
    %c0_81 = arith.constant 0 : index
    %c0_82 = arith.constant 0 : index
    %150 = vector.load %arg23[%c2_80, %c0_81, %c0_82] : memref<4x8x128xf32, #tpu.memory_space<vmem>>, vector<2x8x128xf32>
    %151 = vector.shape_cast %150 : vector<2x8x128xf32> to vector<16x128xf32>
    %cst_83 = arith.constant 2.000000e+00 : f32
    %152 = vector.broadcast %cst_83 : f32 to vector<1x128xf32>
    %153 = arith.cmpf oge, %0, %152 : vector<1x128xf32>
    %154 = arith.andi %153, %3 : vector<1x128xi1>
    %155 = arith.andi %153, %5 : vector<1x128xi1>
    %c33_i32 = arith.constant 33 : i32
    %156 = tpu.dynamic_rotate %151 by %c33_i32 dim 1 : vector<16x128xf32>, i32 -> vector<16x128xf32>
    %cst_84 = arith.constant 0.000000e+00 : f32
    %157 = vector.broadcast %cst_84 : f32 to vector<16x128xf32>
    %158 = vector.shape_cast %154 : vector<1x128xi1> to vector<1x128xi1>
    %159 = vector.broadcast %158 : vector<1x128xi1> to vector<16x128xi1>
    %160 = arith.select %159, %156, %157 : vector<16x128xi1>, vector<16x128xf32>
    %c0_85 = arith.constant 0 : index
    %c0_86 = arith.constant 0 : index
    %c0_87 = arith.constant 0 : index
    %161 = vector.load %arg10[%c0_85, %c0_86, %c0_87] : memref<6x8x16xf32, #tpu.memory_space<vmem>>, vector<1x8x16xf32>
    %162 = vector.shape_cast %161 : vector<1x8x16xf32> to vector<8x16xf32>
    %cst_88 = arith.constant dense<0.000000e+00> : vector<8x128xf32>
    %163 = tpu.matmul %162, %160, %cst_88 {dimension_numbers = #tpu.dot_dimension_numbers<[1], [0], [0], [1], [0, 0, 1, 1], [], []>} : vector<8x16xf32>, vector<16x128xf32>, vector<8x128xf32> -> vector<8x128xf32>
    %c32_i32 = arith.constant 32 : i32
    %164 = tpu.dynamic_rotate %151 by %c32_i32 dim 1 : vector<16x128xf32>, i32 -> vector<16x128xf32>
    %cst_89 = arith.constant 0.000000e+00 : f32
    %165 = vector.broadcast %cst_89 : f32 to vector<16x128xf32>
    %166 = vector.shape_cast %153 : vector<1x128xi1> to vector<1x128xi1>
    %167 = vector.broadcast %166 : vector<1x128xi1> to vector<16x128xi1>
    %168 = arith.select %167, %164, %165 : vector<16x128xi1>, vector<16x128xf32>
    %c1_90 = arith.constant 1 : index
    %c0_91 = arith.constant 0 : index
    %c0_92 = arith.constant 0 : index
    %169 = vector.load %arg10[%c1_90, %c0_91, %c0_92] : memref<6x8x16xf32, #tpu.memory_space<vmem>>, vector<1x8x16xf32>
    %170 = vector.shape_cast %169 : vector<1x8x16xf32> to vector<8x16xf32>
    %cst_93 = arith.constant dense<0.000000e+00> : vector<8x128xf32>
    %171 = tpu.matmul %170, %168, %cst_93 {dimension_numbers = #tpu.dot_dimension_numbers<[1], [0], [0], [1], [0, 0, 1, 1], [], []>} : vector<8x16xf32>, vector<16x128xf32>, vector<8x128xf32> -> vector<8x128xf32>
    %172 = arith.addf %163, %171 : vector<8x128xf32>
    %c31_i32 = arith.constant 31 : i32
    %173 = tpu.dynamic_rotate %151 by %c31_i32 dim 1 : vector<16x128xf32>, i32 -> vector<16x128xf32>
    %cst_94 = arith.constant 0.000000e+00 : f32
    %174 = vector.broadcast %cst_94 : f32 to vector<16x128xf32>
    %175 = vector.shape_cast %155 : vector<1x128xi1> to vector<1x128xi1>
    %176 = vector.broadcast %175 : vector<1x128xi1> to vector<16x128xi1>
    %177 = arith.select %176, %173, %174 : vector<16x128xi1>, vector<16x128xf32>
    %c2_95 = arith.constant 2 : index
    %c0_96 = arith.constant 0 : index
    %c0_97 = arith.constant 0 : index
    %178 = vector.load %arg10[%c2_95, %c0_96, %c0_97] : memref<6x8x16xf32, #tpu.memory_space<vmem>>, vector<1x8x16xf32>
    %179 = vector.shape_cast %178 : vector<1x8x16xf32> to vector<8x16xf32>
    %cst_98 = arith.constant dense<0.000000e+00> : vector<8x128xf32>
    %180 = tpu.matmul %179, %177, %cst_98 {dimension_numbers = #tpu.dot_dimension_numbers<[1], [0], [0], [1], [0, 0, 1, 1], [], []>} : vector<8x16xf32>, vector<16x128xf32>, vector<8x128xf32> -> vector<8x128xf32>
    %181 = arith.addf %172, %180 : vector<8x128xf32>
    %c1_i32_99 = arith.constant 1 : i32
    %182 = tpu.dynamic_rotate %151 by %c1_i32_99 dim 1 : vector<16x128xf32>, i32 -> vector<16x128xf32>
    %cst_100 = arith.constant 0.000000e+00 : f32
    %183 = vector.broadcast %cst_100 : f32 to vector<16x128xf32>
    %184 = vector.shape_cast %3 : vector<1x128xi1> to vector<1x128xi1>
    %185 = vector.broadcast %184 : vector<1x128xi1> to vector<16x128xi1>
    %186 = arith.select %185, %182, %183 : vector<16x128xi1>, vector<16x128xf32>
    %c3_101 = arith.constant 3 : index
    %c0_102 = arith.constant 0 : index
    %c0_103 = arith.constant 0 : index
    %187 = vector.load %arg10[%c3_101, %c0_102, %c0_103] : memref<6x8x16xf32, #tpu.memory_space<vmem>>, vector<1x8x16xf32>
    %188 = vector.shape_cast %187 : vector<1x8x16xf32> to vector<8x16xf32>
    %cst_104 = arith.constant dense<0.000000e+00> : vector<8x128xf32>
    %189 = tpu.matmul %188, %186, %cst_104 {dimension_numbers = #tpu.dot_dimension_numbers<[1], [0], [0], [1], [0, 0, 1, 1], [], []>} : vector<8x16xf32>, vector<16x128xf32>, vector<8x128xf32> -> vector<8x128xf32>
    %190 = arith.addf %181, %189 : vector<8x128xf32>
    %c4_105 = arith.constant 4 : index
    %c0_106 = arith.constant 0 : index
    %c0_107 = arith.constant 0 : index
    %191 = vector.load %arg10[%c4_105, %c0_106, %c0_107] : memref<6x8x16xf32, #tpu.memory_space<vmem>>, vector<1x8x16xf32>
    %192 = vector.shape_cast %191 : vector<1x8x16xf32> to vector<8x16xf32>
    %cst_108 = arith.constant dense<0.000000e+00> : vector<8x128xf32>
    %193 = tpu.matmul %192, %151, %cst_108 {dimension_numbers = #tpu.dot_dimension_numbers<[1], [0], [0], [1], [0, 0, 1, 1], [], []>} : vector<8x16xf32>, vector<16x128xf32>, vector<8x128xf32> -> vector<8x128xf32>
    %194 = arith.addf %190, %193 : vector<8x128xf32>
    %c127_i32_109 = arith.constant 127 : i32
    %195 = tpu.dynamic_rotate %151 by %c127_i32_109 dim 1 : vector<16x128xf32>, i32 -> vector<16x128xf32>
    %cst_110 = arith.constant 0.000000e+00 : f32
    %196 = vector.broadcast %cst_110 : f32 to vector<16x128xf32>
    %197 = vector.shape_cast %5 : vector<1x128xi1> to vector<1x128xi1>
    %198 = vector.broadcast %197 : vector<1x128xi1> to vector<16x128xi1>
    %199 = arith.select %198, %195, %196 : vector<16x128xi1>, vector<16x128xf32>
    %c5_111 = arith.constant 5 : index
    %c0_112 = arith.constant 0 : index
    %c0_113 = arith.constant 0 : index
    %200 = vector.load %arg10[%c5_111, %c0_112, %c0_113] : memref<6x8x16xf32, #tpu.memory_space<vmem>>, vector<1x8x16xf32>
    %201 = vector.shape_cast %200 : vector<1x8x16xf32> to vector<8x16xf32>
    %cst_114 = arith.constant dense<0.000000e+00> : vector<8x128xf32>
    %202 = tpu.matmul %201, %199, %cst_114 {dimension_numbers = #tpu.dot_dimension_numbers<[1], [0], [0], [1], [0, 0, 1, 1], [], []>} : vector<8x16xf32>, vector<16x128xf32>, vector<8x128xf32> -> vector<8x128xf32>
    %203 = arith.addf %194, %202 : vector<8x128xf32>
    %c1_115 = arith.constant 1 : index
    %c0_116 = arith.constant 0 : index
    %c0_117 = arith.constant 0 : index
    %204 = vector.load %arg13[%c1_115, %c0_116, %c0_117] : memref<4x8x1xf32, #tpu.memory_space<vmem>>, vector<1x8x1xf32>
    %205 = vector.shape_cast %204 : vector<1x8x1xf32> to vector<8x1xf32>
    %206 = vector.broadcast %205 : vector<8x1xf32> to vector<8x128xf32>
    %207 = arith.addf %203, %206 : vector<8x128xf32>
    %c1_118 = arith.constant 1 : index
    %c0_119 = arith.constant 0 : index
    %c0_120 = arith.constant 0 : index
    %208 = vector.load %arg14[%c1_118, %c0_119, %c0_120] : memref<4x8x1xf32, #tpu.memory_space<vmem>>, vector<1x8x1xf32>
    %209 = vector.shape_cast %208 : vector<1x8x1xf32> to vector<8x1xf32>
    %c1_121 = arith.constant 1 : index
    %c0_122 = arith.constant 0 : index
    %c0_123 = arith.constant 0 : index
    %210 = vector.load %arg15[%c1_121, %c0_122, %c0_123] : memref<4x8x1xf32, #tpu.memory_space<vmem>>, vector<1x8x1xf32>
    %211 = vector.shape_cast %210 : vector<1x8x1xf32> to vector<8x1xf32>
    %c1_124 = arith.constant 1 : index
    %c0_125 = arith.constant 0 : index
    %c0_126 = arith.constant 0 : index
    %212 = vector.load %arg16[%c1_124, %c0_125, %c0_126] : memref<4x8x1xf32, #tpu.memory_space<vmem>>, vector<1x8x1xf32>
    %213 = vector.shape_cast %212 : vector<1x8x1xf32> to vector<8x1xf32>
    %cst_127 = arith.constant dense<0.000000e+00> : vector<8xf32>
    %214 = vector.multi_reduction <add>, %207, %cst_127 [1] : vector<8x128xf32> to vector<8xf32>
    %215 = vector.shape_cast %214 : vector<8xf32> to vector<8x1xf32>
    %cst_128 = arith.constant 7.812500e-03 : f32
    %216 = vector.broadcast %cst_128 : f32 to vector<8x1xf32>
    %217 = arith.mulf %215, %216 : vector<8x1xf32>
    %218 = arith.mulf %207, %207 : vector<8x128xf32>
    %cst_129 = arith.constant dense<0.000000e+00> : vector<8xf32>
    %219 = vector.multi_reduction <add>, %218, %cst_129 [1] : vector<8x128xf32> to vector<8xf32>
    %220 = vector.shape_cast %219 : vector<8xf32> to vector<8x1xf32>
    %cst_130 = arith.constant 7.812500e-03 : f32
    %221 = vector.broadcast %cst_130 : f32 to vector<8x1xf32>
    %222 = arith.mulf %220, %221 : vector<8x1xf32>
    %223 = arith.mulf %217, %217 : vector<8x1xf32>
    %224 = arith.subf %222, %223 : vector<8x1xf32>
    %cst_131 = arith.constant 0.000000e+00 : f32
    %225 = vector.broadcast %cst_131 : f32 to vector<8x1xf32>
    %226 = arith.maximumf %224, %225 : vector<8x1xf32>
    %227 = vector.broadcast %217 : vector<8x1xf32> to vector<8x128xf32>
    %228 = arith.subf %207, %227 : vector<8x128xf32>
    %cst_132 = arith.constant 9.99999974E-6 : f32
    %229 = vector.broadcast %cst_132 : f32 to vector<8x1xf32>
    %230 = arith.addf %226, %229 : vector<8x1xf32>
    %231 = math.rsqrt %230 : vector<8x1xf32>
    %232 = vector.broadcast %231 : vector<8x1xf32> to vector<8x128xf32>
    %233 = arith.mulf %228, %232 : vector<8x128xf32>
    %234 = vector.broadcast %209 : vector<8x1xf32> to vector<8x128xf32>
    %235 = arith.mulf %233, %234 : vector<8x128xf32>
    %236 = vector.broadcast %211 : vector<8x1xf32> to vector<8x128xf32>
    %237 = arith.addf %235, %236 : vector<8x128xf32>
    %cst_133 = arith.constant 0.000000e+00 : f32
    %238 = vector.broadcast %cst_133 : f32 to vector<8x128xf32>
    %239 = arith.cmpf oge, %237, %238 : vector<8x128xf32>
    %240 = vector.broadcast %213 : vector<8x1xf32> to vector<8x128xf32>
    %241 = arith.mulf %240, %237 : vector<8x128xf32>
    %242 = arith.select %239, %237, %241 : vector<8x128xi1>, vector<8x128xf32>
    %c1_134 = arith.constant 1 : index
    %c0_135 = arith.constant 0 : index
    %c0_136 = arith.constant 0 : index
    %243 = vector.load %arg23[%c1_134, %c0_135, %c0_136] : memref<4x8x128xf32, #tpu.memory_space<vmem>>, vector<1x8x128xf32>
    %244 = vector.shape_cast %243 : vector<1x8x128xf32> to vector<8x128xf32>
    %245 = vector.shape_cast %242 : vector<8x128xf32> to vector<1x8x128xf32>
    tpu.vector_store %arg23[%c1_134, %c0_135, %c0_136], %245 {strides = array<i32>} : memref<4x8x128xf32, #tpu.memory_space<vmem>>, vector<1x8x128xf32>,
    %c1_137 = arith.constant 1 : index
    %c0_138 = arith.constant 0 : index
    %c0_139 = arith.constant 0 : index
    %246 = vector.load %arg23[%c1_137, %c0_138, %c0_139] : memref<4x8x128xf32, #tpu.memory_space<vmem>>, vector<3x8x128xf32>
    %247 = vector.shape_cast %246 : vector<3x8x128xf32> to vector<24x128xf32>
    %cst_140 = arith.constant 4.000000e+00 : f32
    %248 = vector.broadcast %cst_140 : f32 to vector<1x128xf32>
    %249 = arith.cmpf oge, %0, %248 : vector<1x128xf32>
    %250 = arith.andi %249, %3 : vector<1x128xi1>
    %251 = arith.andi %249, %5 : vector<1x128xi1>
    %c65_i32 = arith.constant 65 : i32
    %252 = tpu.dynamic_rotate %247 by %c65_i32 dim 1 : vector<24x128xf32>, i32 -> vector<24x128xf32>
    %cst_141 = arith.constant 0.000000e+00 : f32
    %253 = vector.broadcast %cst_141 : f32 to vector<24x128xf32>
    %254 = vector.shape_cast %250 : vector<1x128xi1> to vector<1x128xi1>
    %255 = vector.broadcast %254 : vector<1x128xi1> to vector<24x128xi1>
    %256 = arith.select %255, %252, %253 : vector<24x128xi1>, vector<24x128xf32>
    %c0_142 = arith.constant 0 : index
    %c0_143 = arith.constant 0 : index
    %c0_144 = arith.constant 0 : index
    %257 = vector.load %arg11[%c0_142, %c0_143, %c0_144] : memref<6x8x24xf32, #tpu.memory_space<vmem>>, vector<1x8x24xf32>
    %258 = vector.shape_cast %257 : vector<1x8x24xf32> to vector<8x24xf32>
    %cst_145 = arith.constant dense<0.000000e+00> : vector<8x128xf32>
    %259 = tpu.matmul %258, %256, %cst_145 {dimension_numbers = #tpu.dot_dimension_numbers<[1], [0], [0], [1], [0, 0, 1, 1], [], []>} : vector<8x24xf32>, vector<24x128xf32>, vector<8x128xf32> -> vector<8x128xf32>
    %c64_i32 = arith.constant 64 : i32
    %260 = tpu.dynamic_rotate %247 by %c64_i32 dim 1 : vector<24x128xf32>, i32 -> vector<24x128xf32>
    %cst_146 = arith.constant 0.000000e+00 : f32
    %261 = vector.broadcast %cst_146 : f32 to vector<24x128xf32>
    %262 = vector.shape_cast %249 : vector<1x128xi1> to vector<1x128xi1>
    %263 = vector.broadcast %262 : vector<1x128xi1> to vector<24x128xi1>
    %264 = arith.select %263, %260, %261 : vector<24x128xi1>, vector<24x128xf32>
    %c1_147 = arith.constant 1 : index
    %c0_148 = arith.constant 0 : index
    %c0_149 = arith.constant 0 : index
    %265 = vector.load %arg11[%c1_147, %c0_148, %c0_149] : memref<6x8x24xf32, #tpu.memory_space<vmem>>, vector<1x8x24xf32>
    %266 = vector.shape_cast %265 : vector<1x8x24xf32> to vector<8x24xf32>
    %cst_150 = arith.constant dense<0.000000e+00> : vector<8x128xf32>
    %267 = tpu.matmul %266, %264, %cst_150 {dimension_numbers = #tpu.dot_dimension_numbers<[1], [0], [0], [1], [0, 0, 1, 1], [], []>} : vector<8x24xf32>, vector<24x128xf32>, vector<8x128xf32> -> vector<8x128xf32>
    %268 = arith.addf %259, %267 : vector<8x128xf32>
    %c63_i32 = arith.constant 63 : i32
    %269 = tpu.dynamic_rotate %247 by %c63_i32 dim 1 : vector<24x128xf32>, i32 -> vector<24x128xf32>
    %cst_151 = arith.constant 0.000000e+00 : f32
    %270 = vector.broadcast %cst_151 : f32 to vector<24x128xf32>
    %271 = vector.shape_cast %251 : vector<1x128xi1> to vector<1x128xi1>
    %272 = vector.broadcast %271 : vector<1x128xi1> to vector<24x128xi1>
    %273 = arith.select %272, %269, %270 : vector<24x128xi1>, vector<24x128xf32>
    %c2_152 = arith.constant 2 : index
    %c0_153 = arith.constant 0 : index
    %c0_154 = arith.constant 0 : index
    %274 = vector.load %arg11[%c2_152, %c0_153, %c0_154] : memref<6x8x24xf32, #tpu.memory_space<vmem>>, vector<1x8x24xf32>
    %275 = vector.shape_cast %274 : vector<1x8x24xf32> to vector<8x24xf32>
    %cst_155 = arith.constant dense<0.000000e+00> : vector<8x128xf32>
    %276 = tpu.matmul %275, %273, %cst_155 {dimension_numbers = #tpu.dot_dimension_numbers<[1], [0], [0], [1], [0, 0, 1, 1], [], []>} : vector<8x24xf32>, vector<24x128xf32>, vector<8x128xf32> -> vector<8x128xf32>
    %277 = arith.addf %268, %276 : vector<8x128xf32>
    %c1_i32_156 = arith.constant 1 : i32
    %278 = tpu.dynamic_rotate %247 by %c1_i32_156 dim 1 : vector<24x128xf32>, i32 -> vector<24x128xf32>
    %cst_157 = arith.constant 0.000000e+00 : f32
    %279 = vector.broadcast %cst_157 : f32 to vector<24x128xf32>
    %280 = vector.shape_cast %3 : vector<1x128xi1> to vector<1x128xi1>
    %281 = vector.broadcast %280 : vector<1x128xi1> to vector<24x128xi1>
    %282 = arith.select %281, %278, %279 : vector<24x128xi1>, vector<24x128xf32>
    %c3_158 = arith.constant 3 : index
    %c0_159 = arith.constant 0 : index
    %c0_160 = arith.constant 0 : index
    %283 = vector.load %arg11[%c3_158, %c0_159, %c0_160] : memref<6x8x24xf32, #tpu.memory_space<vmem>>, vector<1x8x24xf32>
    %284 = vector.shape_cast %283 : vector<1x8x24xf32> to vector<8x24xf32>
    %cst_161 = arith.constant dense<0.000000e+00> : vector<8x128xf32>
    %285 = tpu.matmul %284, %282, %cst_161 {dimension_numbers = #tpu.dot_dimension_numbers<[1], [0], [0], [1], [0, 0, 1, 1], [], []>} : vector<8x24xf32>, vector<24x128xf32>, vector<8x128xf32> -> vector<8x128xf32>
    %286 = arith.addf %277, %285 : vector<8x128xf32>
    %c4_162 = arith.constant 4 : index
    %c0_163 = arith.constant 0 : index
    %c0_164 = arith.constant 0 : index
    %287 = vector.load %arg11[%c4_162, %c0_163, %c0_164] : memref<6x8x24xf32, #tpu.memory_space<vmem>>, vector<1x8x24xf32>
    %288 = vector.shape_cast %287 : vector<1x8x24xf32> to vector<8x24xf32>
    %cst_165 = arith.constant dense<0.000000e+00> : vector<8x128xf32>
    %289 = tpu.matmul %288, %247, %cst_165 {dimension_numbers = #tpu.dot_dimension_numbers<[1], [0], [0], [1], [0, 0, 1, 1], [], []>} : vector<8x24xf32>, vector<24x128xf32>, vector<8x128xf32> -> vector<8x128xf32>
    %290 = arith.addf %286, %289 : vector<8x128xf32>
    %c127_i32_166 = arith.constant 127 : i32
    %291 = tpu.dynamic_rotate %247 by %c127_i32_166 dim 1 : vector<24x128xf32>, i32 -> vector<24x128xf32>
    %cst_167 = arith.constant 0.000000e+00 : f32
    %292 = vector.broadcast %cst_167 : f32 to vector<24x128xf32>
    %293 = vector.shape_cast %5 : vector<1x128xi1> to vector<1x128xi1>
    %294 = vector.broadcast %293 : vector<1x128xi1> to vector<24x128xi1>
    %295 = arith.select %294, %291, %292 : vector<24x128xi1>, vector<24x128xf32>
    %c5_168 = arith.constant 5 : index
    %c0_169 = arith.constant 0 : index
    %c0_170 = arith.constant 0 : index
    %296 = vector.load %arg11[%c5_168, %c0_169, %c0_170] : memref<6x8x24xf32, #tpu.memory_space<vmem>>, vector<1x8x24xf32>
    %297 = vector.shape_cast %296 : vector<1x8x24xf32> to vector<8x24xf32>
    %cst_171 = arith.constant dense<0.000000e+00> : vector<8x128xf32>
    %298 = tpu.matmul %297, %295, %cst_171 {dimension_numbers = #tpu.dot_dimension_numbers<[1], [0], [0], [1], [0, 0, 1, 1], [], []>} : vector<8x24xf32>, vector<24x128xf32>, vector<8x128xf32> -> vector<8x128xf32>
    %299 = arith.addf %290, %298 : vector<8x128xf32>
    %c2_172 = arith.constant 2 : index
    %c0_173 = arith.constant 0 : index
    %c0_174 = arith.constant 0 : index
    %300 = vector.load %arg13[%c2_172, %c0_173, %c0_174] : memref<4x8x1xf32, #tpu.memory_space<vmem>>, vector<1x8x1xf32>
    %301 = vector.shape_cast %300 : vector<1x8x1xf32> to vector<8x1xf32>
    %302 = vector.broadcast %301 : vector<8x1xf32> to vector<8x128xf32>
    %303 = arith.addf %299, %302 : vector<8x128xf32>
    %c2_175 = arith.constant 2 : index
    %c0_176 = arith.constant 0 : index
    %c0_177 = arith.constant 0 : index
    %304 = vector.load %arg14[%c2_175, %c0_176, %c0_177] : memref<4x8x1xf32, #tpu.memory_space<vmem>>, vector<1x8x1xf32>
    %305 = vector.shape_cast %304 : vector<1x8x1xf32> to vector<8x1xf32>
    %c2_178 = arith.constant 2 : index
    %c0_179 = arith.constant 0 : index
    %c0_180 = arith.constant 0 : index
    %306 = vector.load %arg15[%c2_178, %c0_179, %c0_180] : memref<4x8x1xf32, #tpu.memory_space<vmem>>, vector<1x8x1xf32>
    %307 = vector.shape_cast %306 : vector<1x8x1xf32> to vector<8x1xf32>
    %c2_181 = arith.constant 2 : index
    %c0_182 = arith.constant 0 : index
    %c0_183 = arith.constant 0 : index
    %308 = vector.load %arg16[%c2_181, %c0_182, %c0_183] : memref<4x8x1xf32, #tpu.memory_space<vmem>>, vector<1x8x1xf32>
    %309 = vector.shape_cast %308 : vector<1x8x1xf32> to vector<8x1xf32>
    %cst_184 = arith.constant dense<0.000000e+00> : vector<8xf32>
    %310 = vector.multi_reduction <add>, %303, %cst_184 [1] : vector<8x128xf32> to vector<8xf32>
    %311 = vector.shape_cast %310 : vector<8xf32> to vector<8x1xf32>
    %cst_185 = arith.constant 7.812500e-03 : f32
    %312 = vector.broadcast %cst_185 : f32 to vector<8x1xf32>
    %313 = arith.mulf %311, %312 : vector<8x1xf32>
    %314 = arith.mulf %303, %303 : vector<8x128xf32>
    %cst_186 = arith.constant dense<0.000000e+00> : vector<8xf32>
    %315 = vector.multi_reduction <add>, %314, %cst_186 [1] : vector<8x128xf32> to vector<8xf32>
    %316 = vector.shape_cast %315 : vector<8xf32> to vector<8x1xf32>
    %cst_187 = arith.constant 7.812500e-03 : f32
    %317 = vector.broadcast %cst_187 : f32 to vector<8x1xf32>
    %318 = arith.mulf %316, %317 : vector<8x1xf32>
    %319 = arith.mulf %313, %313 : vector<8x1xf32>
    %320 = arith.subf %318, %319 : vector<8x1xf32>
    %cst_188 = arith.constant 0.000000e+00 : f32
    %321 = vector.broadcast %cst_188 : f32 to vector<8x1xf32>
    %322 = arith.maximumf %320, %321 : vector<8x1xf32>
    %323 = vector.broadcast %313 : vector<8x1xf32> to vector<8x128xf32>
    %324 = arith.subf %303, %323 : vector<8x128xf32>
    %cst_189 = arith.constant 9.99999974E-6 : f32
    %325 = vector.broadcast %cst_189 : f32 to vector<8x1xf32>
    %326 = arith.addf %322, %325 : vector<8x1xf32>
    %327 = math.rsqrt %326 : vector<8x1xf32>
    %328 = vector.broadcast %327 : vector<8x1xf32> to vector<8x128xf32>
    %329 = arith.mulf %324, %328 : vector<8x128xf32>
    %330 = vector.broadcast %305 : vector<8x1xf32> to vector<8x128xf32>
    %331 = arith.mulf %329, %330 : vector<8x128xf32>
    %332 = vector.broadcast %307 : vector<8x1xf32> to vector<8x128xf32>
    %333 = arith.addf %331, %332 : vector<8x128xf32>
    %cst_190 = arith.constant 0.000000e+00 : f32
    %334 = vector.broadcast %cst_190 : f32 to vector<8x128xf32>
    %335 = arith.cmpf oge, %333, %334 : vector<8x128xf32>
    %336 = vector.broadcast %309 : vector<8x1xf32> to vector<8x128xf32>
    %337 = arith.mulf %336, %333 : vector<8x128xf32>
    %338 = arith.select %335, %333, %337 : vector<8x128xi1>, vector<8x128xf32>
    %c0_191 = arith.constant 0 : index
    %c0_192 = arith.constant 0 : index
    %c0_193 = arith.constant 0 : index
    %339 = vector.load %arg23[%c0_191, %c0_192, %c0_193] : memref<4x8x128xf32, #tpu.memory_space<vmem>>, vector<1x8x128xf32>
    %340 = vector.shape_cast %339 : vector<1x8x128xf32> to vector<8x128xf32>
    %341 = vector.shape_cast %338 : vector<8x128xf32> to vector<1x8x128xf32>
    tpu.vector_store %arg23[%c0_191, %c0_192, %c0_193], %341 {strides = array<i32>} : memref<4x8x128xf32, #tpu.memory_space<vmem>>, vector<1x8x128xf32>,
    %c0_194 = arith.constant 0 : index
    %c0_195 = arith.constant 0 : index
    %c0_196 = arith.constant 0 : index
    %342 = vector.load %arg23[%c0_194, %c0_195, %c0_196] : memref<4x8x128xf32, #tpu.memory_space<vmem>>, vector<4x8x128xf32>
    %343 = vector.shape_cast %342 : vector<4x8x128xf32> to vector<32x128xf32>
    %cst_197 = arith.constant 8.000000e+00 : f32
    %344 = vector.broadcast %cst_197 : f32 to vector<1x128xf32>
    %345 = arith.cmpf oge, %0, %344 : vector<1x128xf32>
    %346 = arith.andi %345, %3 : vector<1x128xi1>
    %347 = arith.andi %345, %5 : vector<1x128xi1>
    %c1_i32_198 = arith.constant 1 : i32
    %348 = tpu.dynamic_rotate %343 by %c1_i32_198 dim 1 : vector<32x128xf32>, i32 -> vector<32x128xf32>
    %cst_199 = arith.constant 0.000000e+00 : f32
    %349 = vector.broadcast %cst_199 : f32 to vector<32x128xf32>
    %350 = vector.shape_cast %346 : vector<1x128xi1> to vector<1x128xi1>
    %351 = vector.broadcast %350 : vector<1x128xi1> to vector<32x128xi1>
    %352 = arith.select %351, %348, %349 : vector<32x128xi1>, vector<32x128xf32>
    %c0_200 = arith.constant 0 : index
    %c0_201 = arith.constant 0 : index
    %c0_202 = arith.constant 0 : index
    %353 = vector.load %arg12[%c0_200, %c0_201, %c0_202] : memref<6x8x32xf32, #tpu.memory_space<vmem>>, vector<1x8x32xf32>
    %354 = vector.shape_cast %353 : vector<1x8x32xf32> to vector<8x32xf32>
    %cst_203 = arith.constant dense<0.000000e+00> : vector<8x128xf32>
    %355 = tpu.matmul %354, %352, %cst_203 {dimension_numbers = #tpu.dot_dimension_numbers<[1], [0], [0], [1], [0, 0, 1, 1], [], []>} : vector<8x32xf32>, vector<32x128xf32>, vector<8x128xf32> -> vector<8x128xf32>
    %cst_204 = arith.constant 0.000000e+00 : f32
    %356 = vector.broadcast %cst_204 : f32 to vector<32x128xf32>
    %357 = vector.shape_cast %345 : vector<1x128xi1> to vector<1x128xi1>
    %358 = vector.broadcast %357 : vector<1x128xi1> to vector<32x128xi1>
    %359 = arith.select %358, %343, %356 : vector<32x128xi1>, vector<32x128xf32>
    %c1_205 = arith.constant 1 : index
    %c0_206 = arith.constant 0 : index
    %c0_207 = arith.constant 0 : index
    %360 = vector.load %arg12[%c1_205, %c0_206, %c0_207] : memref<6x8x32xf32, #tpu.memory_space<vmem>>, vector<1x8x32xf32>
    %361 = vector.shape_cast %360 : vector<1x8x32xf32> to vector<8x32xf32>
    %cst_208 = arith.constant dense<0.000000e+00> : vector<8x128xf32>
    %362 = tpu.matmul %361, %359, %cst_208 {dimension_numbers = #tpu.dot_dimension_numbers<[1], [0], [0], [1], [0, 0, 1, 1], [], []>} : vector<8x32xf32>, vector<32x128xf32>, vector<8x128xf32> -> vector<8x128xf32>
    %363 = arith.addf %355, %362 : vector<8x128xf32>
    %c127_i32_209 = arith.constant 127 : i32
    %364 = tpu.dynamic_rotate %343 by %c127_i32_209 dim 1 : vector<32x128xf32>, i32 -> vector<32x128xf32>
    %cst_210 = arith.constant 0.000000e+00 : f32
    %365 = vector.broadcast %cst_210 : f32 to vector<32x128xf32>
    %366 = vector.shape_cast %347 : vector<1x128xi1> to vector<1x128xi1>
    %367 = vector.broadcast %366 : vector<1x128xi1> to vector<32x128xi1>
    %368 = arith.select %367, %364, %365 : vector<32x128xi1>, vector<32x128xf32>
    %c2_211 = arith.constant 2 : index
    %c0_212 = arith.constant 0 : index
    %c0_213 = arith.constant 0 : index
    %369 = vector.load %arg12[%c2_211, %c0_212, %c0_213] : memref<6x8x32xf32, #tpu.memory_space<vmem>>, vector<1x8x32xf32>
    %370 = vector.shape_cast %369 : vector<1x8x32xf32> to vector<8x32xf32>
    %cst_214 = arith.constant dense<0.000000e+00> : vector<8x128xf32>
    %371 = tpu.matmul %370, %368, %cst_214 {dimension_numbers = #tpu.dot_dimension_numbers<[1], [0], [0], [1], [0, 0, 1, 1], [], []>} : vector<8x32xf32>, vector<32x128xf32>, vector<8x128xf32> -> vector<8x128xf32>
    %372 = arith.addf %363, %371 : vector<8x128xf32>
    %c1_i32_215 = arith.constant 1 : i32
    %373 = tpu.dynamic_rotate %343 by %c1_i32_215 dim 1 : vector<32x128xf32>, i32 -> vector<32x128xf32>
    %cst_216 = arith.constant 0.000000e+00 : f32
    %374 = vector.broadcast %cst_216 : f32 to vector<32x128xf32>
    %375 = vector.shape_cast %3 : vector<1x128xi1> to vector<1x128xi1>
    %376 = vector.broadcast %375 : vector<1x128xi1> to vector<32x128xi1>
    %377 = arith.select %376, %373, %374 : vector<32x128xi1>, vector<32x128xf32>
    %c3_217 = arith.constant 3 : index
    %c0_218 = arith.constant 0 : index
    %c0_219 = arith.constant 0 : index
    %378 = vector.load %arg12[%c3_217, %c0_218, %c0_219] : memref<6x8x32xf32, #tpu.memory_space<vmem>>, vector<1x8x32xf32>
    %379 = vector.shape_cast %378 : vector<1x8x32xf32> to vector<8x32xf32>
    %cst_220 = arith.constant dense<0.000000e+00> : vector<8x128xf32>
    %380 = tpu.matmul %379, %377, %cst_220 {dimension_numbers = #tpu.dot_dimension_numbers<[1], [0], [0], [1], [0, 0, 1, 1], [], []>} : vector<8x32xf32>, vector<32x128xf32>, vector<8x128xf32> -> vector<8x128xf32>
    %381 = arith.addf %372, %380 : vector<8x128xf32>
    %c4_221 = arith.constant 4 : index
    %c0_222 = arith.constant 0 : index
    %c0_223 = arith.constant 0 : index
    %382 = vector.load %arg12[%c4_221, %c0_222, %c0_223] : memref<6x8x32xf32, #tpu.memory_space<vmem>>, vector<1x8x32xf32>
    %383 = vector.shape_cast %382 : vector<1x8x32xf32> to vector<8x32xf32>
    %cst_224 = arith.constant dense<0.000000e+00> : vector<8x128xf32>
    %384 = tpu.matmul %383, %343, %cst_224 {dimension_numbers = #tpu.dot_dimension_numbers<[1], [0], [0], [1], [0, 0, 1, 1], [], []>} : vector<8x32xf32>, vector<32x128xf32>, vector<8x128xf32> -> vector<8x128xf32>
    %385 = arith.addf %381, %384 : vector<8x128xf32>
    %c127_i32_225 = arith.constant 127 : i32
    %386 = tpu.dynamic_rotate %343 by %c127_i32_225 dim 1 : vector<32x128xf32>, i32 -> vector<32x128xf32>
    %cst_226 = arith.constant 0.000000e+00 : f32
    %387 = vector.broadcast %cst_226 : f32 to vector<32x128xf32>
    %388 = vector.shape_cast %5 : vector<1x128xi1> to vector<1x128xi1>
    %389 = vector.broadcast %388 : vector<1x128xi1> to vector<32x128xi1>
    %390 = arith.select %389, %386, %387 : vector<32x128xi1>, vector<32x128xf32>
    %c5_227 = arith.constant 5 : index
    %c0_228 = arith.constant 0 : index
    %c0_229 = arith.constant 0 : index
    %391 = vector.load %arg12[%c5_227, %c0_228, %c0_229] : memref<6x8x32xf32, #tpu.memory_space<vmem>>, vector<1x8x32xf32>
    %392 = vector.shape_cast %391 : vector<1x8x32xf32> to vector<8x32xf32>
    %cst_230 = arith.constant dense<0.000000e+00> : vector<8x128xf32>
    %393 = tpu.matmul %392, %390, %cst_230 {dimension_numbers = #tpu.dot_dimension_numbers<[1], [0], [0], [1], [0, 0, 1, 1], [], []>} : vector<8x32xf32>, vector<32x128xf32>, vector<8x128xf32> -> vector<8x128xf32>
    %394 = arith.addf %385, %393 : vector<8x128xf32>
    %c3_231 = arith.constant 3 : index
    %c0_232 = arith.constant 0 : index
    %c0_233 = arith.constant 0 : index
    %395 = vector.load %arg13[%c3_231, %c0_232, %c0_233] : memref<4x8x1xf32, #tpu.memory_space<vmem>>, vector<1x8x1xf32>
    %396 = vector.shape_cast %395 : vector<1x8x1xf32> to vector<8x1xf32>
    %397 = vector.broadcast %396 : vector<8x1xf32> to vector<8x128xf32>
    %398 = arith.addf %394, %397 : vector<8x128xf32>
    %c3_234 = arith.constant 3 : index
    %c0_235 = arith.constant 0 : index
    %c0_236 = arith.constant 0 : index
    %399 = vector.load %arg14[%c3_234, %c0_235, %c0_236] : memref<4x8x1xf32, #tpu.memory_space<vmem>>, vector<1x8x1xf32>
    %400 = vector.shape_cast %399 : vector<1x8x1xf32> to vector<8x1xf32>
    %c3_237 = arith.constant 3 : index
    %c0_238 = arith.constant 0 : index
    %c0_239 = arith.constant 0 : index
    %401 = vector.load %arg15[%c3_237, %c0_238, %c0_239] : memref<4x8x1xf32, #tpu.memory_space<vmem>>, vector<1x8x1xf32>
    %402 = vector.shape_cast %401 : vector<1x8x1xf32> to vector<8x1xf32>
    %c3_240 = arith.constant 3 : index
    %c0_241 = arith.constant 0 : index
    %c0_242 = arith.constant 0 : index
    %403 = vector.load %arg16[%c3_240, %c0_241, %c0_242] : memref<4x8x1xf32, #tpu.memory_space<vmem>>, vector<1x8x1xf32>
    %404 = vector.shape_cast %403 : vector<1x8x1xf32> to vector<8x1xf32>
    %cst_243 = arith.constant dense<0.000000e+00> : vector<8xf32>
    %405 = vector.multi_reduction <add>, %398, %cst_243 [1] : vector<8x128xf32> to vector<8xf32>
    %406 = vector.shape_cast %405 : vector<8xf32> to vector<8x1xf32>
    %cst_244 = arith.constant 7.812500e-03 : f32
    %407 = vector.broadcast %cst_244 : f32 to vector<8x1xf32>
    %408 = arith.mulf %406, %407 : vector<8x1xf32>
    %409 = arith.mulf %398, %398 : vector<8x128xf32>
    %cst_245 = arith.constant dense<0.000000e+00> : vector<8xf32>
    %410 = vector.multi_reduction <add>, %409, %cst_245 [1] : vector<8x128xf32> to vector<8xf32>
    %411 = vector.shape_cast %410 : vector<8xf32> to vector<8x1xf32>
    %cst_246 = arith.constant 7.812500e-03 : f32
    %412 = vector.broadcast %cst_246 : f32 to vector<8x1xf32>
    %413 = arith.mulf %411, %412 : vector<8x1xf32>
    %414 = arith.mulf %408, %408 : vector<8x1xf32>
    %415 = arith.subf %413, %414 : vector<8x1xf32>
    %cst_247 = arith.constant 0.000000e+00 : f32
    %416 = vector.broadcast %cst_247 : f32 to vector<8x1xf32>
    %417 = arith.maximumf %415, %416 : vector<8x1xf32>
    %418 = vector.broadcast %408 : vector<8x1xf32> to vector<8x128xf32>
    %419 = arith.subf %398, %418 : vector<8x128xf32>
    %cst_248 = arith.constant 9.99999974E-6 : f32
    %420 = vector.broadcast %cst_248 : f32 to vector<8x1xf32>
    %421 = arith.addf %417, %420 : vector<8x1xf32>
    %422 = math.rsqrt %421 : vector<8x1xf32>
    %423 = vector.broadcast %422 : vector<8x1xf32> to vector<8x128xf32>
    %424 = arith.mulf %419, %423 : vector<8x128xf32>
    %425 = vector.broadcast %400 : vector<8x1xf32> to vector<8x128xf32>
    %426 = arith.mulf %424, %425 : vector<8x128xf32>
    %427 = vector.broadcast %402 : vector<8x1xf32> to vector<8x128xf32>
    %428 = arith.addf %426, %427 : vector<8x128xf32>
    %cst_249 = arith.constant 0.000000e+00 : f32
    %429 = vector.broadcast %cst_249 : f32 to vector<8x128xf32>
    %430 = arith.cmpf oge, %428, %429 : vector<8x128xf32>
    %431 = vector.broadcast %404 : vector<8x1xf32> to vector<8x128xf32>
    %432 = arith.mulf %431, %428 : vector<8x128xf32>
    %433 = arith.select %430, %428, %432 : vector<8x128xi1>, vector<8x128xf32>
    %c1_i32_250 = arith.constant 1 : i32
    %434 = tpu.dynamic_rotate %433 by %c1_i32_250 dim 1 : vector<8x128xf32>, i32 -> vector<8x128xf32>
    %cst_251 = arith.constant 0.000000e+00 : f32
    %435 = vector.broadcast %cst_251 : f32 to vector<8x128xf32>
    %436 = vector.shape_cast %3 : vector<1x128xi1> to vector<1x128xi1>
    %437 = vector.broadcast %436 : vector<1x128xi1> to vector<8x128xi1>
    %438 = arith.select %437, %434, %435 : vector<8x128xi1>, vector<8x128xf32>
    %c0_252 = arith.constant 0 : index
    %c0_253 = arith.constant 0 : index
    %c0_254 = arith.constant 0 : index
    %439 = vector.load %arg17[%c0_252, %c0_253, %c0_254] : memref<3x8x8xf32, #tpu.memory_space<vmem>>, vector<1x8x8xf32>
    %440 = vector.shape_cast %439 : vector<1x8x8xf32> to vector<8x8xf32>
    %cst_255 = arith.constant dense<0.000000e+00> : vector<8x128xf32>
    %441 = tpu.matmul %440, %438, %cst_255 {dimension_numbers = #tpu.dot_dimension_numbers<[1], [0], [0], [1], [0, 0, 1, 1], [], []>} : vector<8x8xf32>, vector<8x128xf32>, vector<8x128xf32> -> vector<8x128xf32>
    %c1_256 = arith.constant 1 : index
    %c0_257 = arith.constant 0 : index
    %c0_258 = arith.constant 0 : index
    %442 = vector.load %arg17[%c1_256, %c0_257, %c0_258] : memref<3x8x8xf32, #tpu.memory_space<vmem>>, vector<1x8x8xf32>
    %443 = vector.shape_cast %442 : vector<1x8x8xf32> to vector<8x8xf32>
    %cst_259 = arith.constant dense<0.000000e+00> : vector<8x128xf32>
    %444 = tpu.matmul %443, %433, %cst_259 {dimension_numbers = #tpu.dot_dimension_numbers<[1], [0], [0], [1], [0, 0, 1, 1], [], []>} : vector<8x8xf32>, vector<8x128xf32>, vector<8x128xf32> -> vector<8x128xf32>
    %445 = arith.addf %441, %444 : vector<8x128xf32>
    %c127_i32_260 = arith.constant 127 : i32
    %446 = tpu.dynamic_rotate %433 by %c127_i32_260 dim 1 : vector<8x128xf32>, i32 -> vector<8x128xf32>
    %cst_261 = arith.constant 0.000000e+00 : f32
    %447 = vector.broadcast %cst_261 : f32 to vector<8x128xf32>
    %448 = vector.shape_cast %5 : vector<1x128xi1> to vector<1x128xi1>
    %449 = vector.broadcast %448 : vector<1x128xi1> to vector<8x128xi1>
    %450 = arith.select %449, %446, %447 : vector<8x128xi1>, vector<8x128xf32>
    %c2_262 = arith.constant 2 : index
    %c0_263 = arith.constant 0 : index
    %c0_264 = arith.constant 0 : index
    %451 = vector.load %arg17[%c2_262, %c0_263, %c0_264] : memref<3x8x8xf32, #tpu.memory_space<vmem>>, vector<1x8x8xf32>
    %452 = vector.shape_cast %451 : vector<1x8x8xf32> to vector<8x8xf32>
    %cst_265 = arith.constant dense<0.000000e+00> : vector<8x128xf32>
    %453 = tpu.matmul %452, %450, %cst_265 {dimension_numbers = #tpu.dot_dimension_numbers<[1], [0], [0], [1], [0, 0, 1, 1], [], []>} : vector<8x8xf32>, vector<8x128xf32>, vector<8x128xf32> -> vector<8x128xf32>
    %454 = arith.addf %445, %453 : vector<8x128xf32>
    %c0_266 = arith.constant 0 : index
    %c0_267 = arith.constant 0 : index
    %455 = vector.load %arg18[%c0_266, %c0_267] : memref<8x1xf32, #tpu.memory_space<vmem>>, vector<8x1xf32>
    %456 = vector.broadcast %455 : vector<8x1xf32> to vector<8x128xf32>
    %457 = arith.addf %454, %456 : vector<8x128xf32>
    %c0_268 = arith.constant 0 : index
    %c0_269 = arith.constant 0 : index
    %458 = vector.load %arg19[%c0_268, %c0_269] : memref<8x1xf32, #tpu.memory_space<vmem>>, vector<8x1xf32>
    %c0_270 = arith.constant 0 : index
    %c0_271 = arith.constant 0 : index
    %459 = vector.load %arg20[%c0_270, %c0_271] : memref<8x1xf32, #tpu.memory_space<vmem>>, vector<8x1xf32>
    %c0_272 = arith.constant 0 : index
    %c0_273 = arith.constant 0 : index
    %460 = vector.load %arg21[%c0_272, %c0_273] : memref<8x1xf32, #tpu.memory_space<vmem>>, vector<8x1xf32>
    %cst_274 = arith.constant 0.000000e+00 : f32
    %461 = vector.shape_cast %11 : vector<1x128xi1> to vector<1x128xi1>
    %462 = vector.broadcast %461 : vector<1x128xi1> to vector<8x128xi1>
    %463 = vector.broadcast %cst_274 : f32 to vector<8x128xf32>
    %464 = arith.select %462, %457, %463 : vector<8x128xi1>, vector<8x128xf32>
    %cst_275 = arith.constant dense<0.000000e+00> : vector<8xf32>
    %465 = vector.multi_reduction <add>, %464, %cst_275 [1] : vector<8x128xf32> to vector<8xf32>
    %466 = vector.shape_cast %465 : vector<8xf32> to vector<8x1xf32>
    %cst_276 = arith.constant 1.562500e-02 : f32
    %467 = vector.broadcast %cst_276 : f32 to vector<8x1xf32>
    %468 = arith.mulf %466, %467 : vector<8x1xf32>
    %469 = arith.mulf %464, %464 : vector<8x128xf32>
    %cst_277 = arith.constant dense<0.000000e+00> : vector<8xf32>
    %470 = vector.multi_reduction <add>, %469, %cst_277 [1] : vector<8x128xf32> to vector<8xf32>
    %471 = vector.shape_cast %470 : vector<8xf32> to vector<8x1xf32>
    %cst_278 = arith.constant 1.562500e-02 : f32
    %472 = vector.broadcast %cst_278 : f32 to vector<8x1xf32>
    %473 = arith.mulf %471, %472 : vector<8x1xf32>
    %474 = arith.mulf %468, %468 : vector<8x1xf32>
    %475 = arith.subf %473, %474 : vector<8x1xf32>
    %cst_279 = arith.constant 0.000000e+00 : f32
    %476 = vector.broadcast %cst_279 : f32 to vector<8x1xf32>
    %477 = arith.maximumf %475, %476 : vector<8x1xf32>
    %478 = vector.broadcast %468 : vector<8x1xf32> to vector<8x128xf32>
    %479 = arith.subf %457, %478 : vector<8x128xf32>
    %cst_280 = arith.constant 9.99999974E-6 : f32
    %480 = vector.broadcast %cst_280 : f32 to vector<8x1xf32>
    %481 = arith.addf %477, %480 : vector<8x1xf32>
    %482 = math.rsqrt %481 : vector<8x1xf32>
    %483 = vector.broadcast %482 : vector<8x1xf32> to vector<8x128xf32>
    %484 = arith.mulf %479, %483 : vector<8x128xf32>
    %485 = vector.broadcast %458 : vector<8x1xf32> to vector<8x128xf32>
    %486 = arith.mulf %484, %485 : vector<8x128xf32>
    %487 = vector.broadcast %459 : vector<8x1xf32> to vector<8x128xf32>
    %488 = arith.addf %486, %487 : vector<8x128xf32>
    %cst_281 = arith.constant 0.000000e+00 : f32
    %489 = vector.broadcast %cst_281 : f32 to vector<8x128xf32>
    %490 = arith.cmpf oge, %488, %489 : vector<8x128xf32>
    %491 = vector.broadcast %460 : vector<8x1xf32> to vector<8x128xf32>
    %492 = arith.mulf %491, %488 : vector<8x128xf32>
    %493 = arith.select %490, %488, %492 : vector<8x128xi1>, vector<8x128xf32>
    %c0_282 = arith.constant 0 : index
    %c0_283 = arith.constant 0 : index
    %c0_284 = arith.constant 0 : index
    %494 = vector.load %arg22[%c0_282, %c0_283, %c0_284] : memref<1x8x128xf32, #tpu.memory_space<vmem>>, vector<1x8x128xf32>
    %495 = vector.shape_cast %494 : vector<1x8x128xf32> to vector<8x128xf32>
    %496 = vector.shape_cast %493 : vector<8x128xf32> to vector<1x8x128xf32>
    tpu.vector_store %arg22[%c0_282, %c0_283, %c0_284], %496 {strides = array<i32>} : memref<1x8x128xf32, #tpu.memory_space<vmem>>, vector<1x8x128xf32>,
    return
  }
  func.func @transform_0(%arg0: i32) -> (i32, i32, i32) {
    %c0_i32 = arith.constant 0 : i32
    %c0_i32_0 = arith.constant 0 : i32
    %c0_i32_1 = arith.constant 0 : i32
    return %arg0, %c0_i32, %c0_i32_0 : i32, i32, i32
  }
  func.func @transform_1(%arg0: i32) -> (i32, i32) {
    %c0_i32 = arith.constant 0 : i32
    %c0_i32_0 = arith.constant 0 : i32
    %c0_i32_1 = arith.constant 0 : i32
    return %c0_i32, %c0_i32_0 : i32, i32
  }
  func.func @transform_2(%arg0: i32) -> (i32, i32) {
    %c0_i32 = arith.constant 0 : i32
    %c0_i32_0 = arith.constant 0 : i32
    %c0_i32_1 = arith.constant 0 : i32
    return %c0_i32, %c0_i32_0 : i32, i32
  }
  func.func @transform_3(%arg0: i32) -> (i32, i32) {
    %c0_i32 = arith.constant 0 : i32
    %c0_i32_0 = arith.constant 0 : i32
    %c0_i32_1 = arith.constant 0 : i32
    return %c0_i32, %c0_i32_0 : i32, i32
  }
  func.func @transform_4(%arg0: i32) -> (i32, i32) {
    %c0_i32 = arith.constant 0 : i32
    %c0_i32_0 = arith.constant 0 : i32
    %c0_i32_1 = arith.constant 0 : i32
    return %c0_i32, %c0_i32_0 : i32, i32
  }
  func.func @transform_5(%arg0: i32) -> (i32, i32) {
    %c0_i32 = arith.constant 0 : i32
    %c0_i32_0 = arith.constant 0 : i32
    %c0_i32_1 = arith.constant 0 : i32
    return %c0_i32, %c0_i32_0 : i32, i32
  }
  func.func @transform_6(%arg0: i32) -> (i32, i32) {
    %c0_i32 = arith.constant 0 : i32
    %c0_i32_0 = arith.constant 0 : i32
    %c0_i32_1 = arith.constant 0 : i32
    return %c0_i32, %c0_i32_0 : i32, i32
  }
  func.func @transform_7(%arg0: i32) -> (i32, i32) {
    %c0_i32 = arith.constant 0 : i32
    %c0_i32_0 = arith.constant 0 : i32
    %c0_i32_1 = arith.constant 0 : i32
    return %c0_i32, %c0_i32_0 : i32, i32
  }
  func.func @transform_8(%arg0: i32) -> (i32, i32, i32) {
    %c0_i32 = arith.constant 0 : i32
    %c0_i32_0 = arith.constant 0 : i32
    %c0_i32_1 = arith.constant 0 : i32
    %c0_i32_2 = arith.constant 0 : i32
    return %c0_i32, %c0_i32_0, %c0_i32_1 : i32, i32, i32
  }
  func.func @transform_9(%arg0: i32) -> (i32, i32, i32) {
    %c0_i32 = arith.constant 0 : i32
    %c0_i32_0 = arith.constant 0 : i32
    %c0_i32_1 = arith.constant 0 : i32
    %c0_i32_2 = arith.constant 0 : i32
    return %c0_i32, %c0_i32_0, %c0_i32_1 : i32, i32, i32
  }
  func.func @transform_10(%arg0: i32) -> (i32, i32, i32) {
    %c0_i32 = arith.constant 0 : i32
    %c0_i32_0 = arith.constant 0 : i32
    %c0_i32_1 = arith.constant 0 : i32
    %c0_i32_2 = arith.constant 0 : i32
    return %c0_i32, %c0_i32_0, %c0_i32_1 : i32, i32, i32
  }
  func.func @transform_11(%arg0: i32) -> (i32, i32, i32) {
    %c0_i32 = arith.constant 0 : i32
    %c0_i32_0 = arith.constant 0 : i32
    %c0_i32_1 = arith.constant 0 : i32
    %c0_i32_2 = arith.constant 0 : i32
    return %c0_i32, %c0_i32_0, %c0_i32_1 : i32, i32, i32
  }
  func.func @transform_12(%arg0: i32) -> (i32, i32, i32) {
    %c0_i32 = arith.constant 0 : i32
    %c0_i32_0 = arith.constant 0 : i32
    %c0_i32_1 = arith.constant 0 : i32
    %c0_i32_2 = arith.constant 0 : i32
    return %c0_i32, %c0_i32_0, %c0_i32_1 : i32, i32, i32
  }
  func.func @transform_13(%arg0: i32) -> (i32, i32, i32) {
    %c0_i32 = arith.constant 0 : i32
    %c0_i32_0 = arith.constant 0 : i32
    %c0_i32_1 = arith.constant 0 : i32
    %c0_i32_2 = arith.constant 0 : i32
    return %c0_i32, %c0_i32_0, %c0_i32_1 : i32, i32, i32
  }
  func.func @transform_14(%arg0: i32) -> (i32, i32, i32) {
    %c0_i32 = arith.constant 0 : i32
    %c0_i32_0 = arith.constant 0 : i32
    %c0_i32_1 = arith.constant 0 : i32
    %c0_i32_2 = arith.constant 0 : i32
    return %c0_i32, %c0_i32_0, %c0_i32_1 : i32, i32, i32
  }
  func.func @transform_15(%arg0: i32) -> (i32, i32, i32) {
    %c0_i32 = arith.constant 0 : i32
    %c0_i32_0 = arith.constant 0 : i32
    %c0_i32_1 = arith.constant 0 : i32
    %c0_i32_2 = arith.constant 0 : i32
    return %c0_i32, %c0_i32_0, %c0_i32_1 : i32, i32, i32
  }
  func.func @transform_16(%arg0: i32) -> (i32, i32, i32) {
    %c0_i32 = arith.constant 0 : i32
    %c0_i32_0 = arith.constant 0 : i32
    %c0_i32_1 = arith.constant 0 : i32
    %c0_i32_2 = arith.constant 0 : i32
    return %c0_i32, %c0_i32_0, %c0_i32_1 : i32, i32, i32
  }
  func.func @transform_17(%arg0: i32) -> (i32, i32) {
    %c0_i32 = arith.constant 0 : i32
    %c0_i32_0 = arith.constant 0 : i32
    %c0_i32_1 = arith.constant 0 : i32
    return %c0_i32, %c0_i32_0 : i32, i32
  }
  func.func @transform_18(%arg0: i32) -> (i32, i32) {
    %c0_i32 = arith.constant 0 : i32
    %c0_i32_0 = arith.constant 0 : i32
    %c0_i32_1 = arith.constant 0 : i32
    return %c0_i32, %c0_i32_0 : i32, i32
  }
  func.func @transform_19(%arg0: i32) -> (i32, i32) {
    %c0_i32 = arith.constant 0 : i32
    %c0_i32_0 = arith.constant 0 : i32
    %c0_i32_1 = arith.constant 0 : i32
    return %c0_i32, %c0_i32_0 : i32, i32
  }
  func.func @transform_20(%arg0: i32) -> (i32, i32) {
    %c0_i32 = arith.constant 0 : i32
    %c0_i32_0 = arith.constant 0 : i32
    %c0_i32_1 = arith.constant 0 : i32
    return %c0_i32, %c0_i32_0 : i32, i32
  }
  func.func @transform_21(%arg0: i32) -> (i32, i32, i32) {
    %c0_i32 = arith.constant 0 : i32
    %c0_i32_0 = arith.constant 0 : i32
    %c0_i32_1 = arith.constant 0 : i32
    return %arg0, %c0_i32, %c0_i32_0 : i32, i32, i32
  }
}

</mosaic_0001>

<llo_original>
// kernel: _lambda_.1
$region0: #{_lambda_.1}
  #allocation0 [shape = 'u32[]', space=smem, size = 0x4, offset = 0x4, fixed_abs, tag = 'smem constant byte address 0x4 - core index']
  #allocation1 [shape = 'u32[144,128]{1,0:T(1,128)}', space=vmem, size = 0x12000, scoped, tag = 'internal scratch']
  #allocation2 [shape = 'f32[4,8,128]{2,1,0:T(8,128)}', space=vmem, size = 0x4000, scoped, tag = 'scratch operand']
  %s0 = inlined_call_operand.hbm [shape: f32[2,2,128], index: 0, kind: input, shape index: {}]
  %s1 = inlined_call_operand.hbm [shape: f32[1,128], index: 1, kind: input, shape index: {}]
  %s2 = inlined_call_operand.hbm [shape: f32[1,128], index: 2, kind: input, shape index: {}]
  %s3 = inlined_call_operand.hbm [shape: f32[8,2], index: 3, kind: input, shape index: {}]
  %s4 = inlined_call_operand.hbm [shape: f32[8,1], index: 4, kind: input, shape index: {}]
  %s5 = inlined_call_operand.hbm [shape: f32[8,1], index: 5, kind: input, shape index: {}]
  %s6 = inlined_call_operand.hbm [shape: f32[8,1], index: 6, kind: input, shape index: {}]
  %s7 = inlined_call_operand.hbm [shape: f32[8,1], index: 7, kind: input, shape index: {}, may-alias: {7,20}]
  %s8 = inlined_call_operand.hbm [shape: f32[6,8,8], index: 8, kind: input, shape index: {}]
  %s9 = inlined_call_operand.hbm [shape: f32[6,8,16], index: 9, kind: input, shape index: {}]
  %s10 = inlined_call_operand.hbm [shape: f32[6,8,24], index: 10, kind: input, shape index: {}]
  %s11 = inlined_call_operand.hbm [shape: f32[6,8,32], index: 11, kind: input, shape index: {}]
  %s12 = inlined_call_operand.hbm [shape: f32[4,8,1], index: 12, kind: input, shape index: {}]
  %s13 = inlined_call_operand.hbm [shape: f32[4,8,1], index: 13, kind: input, shape index: {}]
  %s14 = inlined_call_operand.hbm [shape: f32[4,8,1], index: 14, kind: input, shape index: {}]
  %s15 = inlined_call_operand.hbm [shape: f32[4,8,1], index: 15, kind: input, shape index: {}]
  %s16 = inlined_call_operand.hbm [shape: f32[3,8,8], index: 16, kind: input, shape index: {}]
  %s17 = inlined_call_operand.hbm [shape: f32[8,1], index: 17, kind: input, shape index: {}]
  %s18 = inlined_call_operand.hbm [shape: f32[8,1], index: 18, kind: input, shape index: {}]
  %s19 = inlined_call_operand.hbm [shape: f32[8,1], index: 19, kind: input, shape index: {}]
  %s20 = inlined_call_operand.hbm [shape: f32[8,1], index: 20, kind: input, shape index: {}, may-alias: {7,20}]
  %s21 = inlined_call_operand.hbm [shape: f32[2,8,128], index: 21, kind: output, shape index: {}]
  %s22 = sld [smem:[#allocation0]]
  $region201: #{_lambda_.1} parent=0
    _
  %s24 = ssub.s32 1, %s22
  %s25 = scalar_select 0, %s24, %s22
  $region1: #{_lambda_.1} parent=0
    #allocation3 [shape = 'u8[2048]{0}', space=vmem, size = 0x800, scoped, tag = 'input window, operand 0']
    #allocation4 [shape = 's32[2]{0}', space=sflag, size = 0x8, scoped, tag = 'scoped memory for _lambda_.1']
    #allocation5 [shape = 's32[2]{0}', space=sflag, size = 0x8, scoped, tag = 'scoped memory for _lambda_.1']
    #allocation6 [shape = 'u8[512]{0}', space=vmem, size = 0x400, scoped, tag = 'input window, operand 1, single buffered']
    #allocation7 [shape = 's32[1]{0}', space=sflag, size = 0x4, scoped, tag = 'scoped memory for _lambda_.1']
    #allocation8 [shape = 'u8[512]{0}', space=vmem, size = 0x400, scoped, tag = 'input window, operand 2, single buffered']
    #allocation9 [shape = 'u8[4096]{0}', space=vmem, size = 0x1000, scoped, tag = 'input window, operand 3, single buffered']
    #allocation10 [shape = 's32[1]{0}', space=sflag, size = 0x4, scoped, tag = 'scoped memory for _lambda_.1']
    #allocation11 [shape = 'u8[4096]{0}', space=vmem, size = 0x1000, scoped, tag = 'input window, operand 4, single buffered']
    #allocation12 [shape = 'u8[4096]{0}', space=vmem, size = 0x1000, scoped, tag = 'input window, operand 5, single buffered']
    #allocation13 [shape = 's32[1]{0}', space=sflag, size = 0x4, scoped, tag = 'scoped memory for _lambda_.1']
    #allocation14 [shape = 'u8[4096]{0}', space=vmem, size = 0x1000, scoped, tag = 'input window, operand 6, single buffered']
    #allocation15 [shape = 'u8[4096]{0}', space=vmem, size = 0x1000, scoped, tag = 'input window, operand 7, single buffered']
    #allocation16 [shape = 's32[1]{0}', space=sflag, size = 0x4, scoped, tag = 'scoped memory for _lambda_.1']
    #allocation17 [shape = 'u8[24576]{0}', space=vmem, size = 0x6000, scoped, tag = 'input window, operand 8, single buffered']
    #allocation18 [shape = 'u8[24576]{0}', space=vmem, size = 0x6000, scoped, tag = 'input window, operand 9, single buffered']
    #allocation19 [shape = 's32[1]{0}', space=sflag, size = 0x4, scoped, tag = 'scoped memory for _lambda_.1']
    #allocation20 [shape = 'u8[24576]{0}', space=vmem, size = 0x6000, scoped, tag = 'input window, operand 10, single buffered']
    #allocation21 [shape = 'u8[24576]{0}', space=vmem, size = 0x6000, scoped, tag = 'input window, operand 11, single buffered']
    #allocation22 [shape = 's32[1]{0}', space=sflag, size = 0x4, scoped, tag = 'scoped memory for _lambda_.1']
    #allocation23 [shape = 'u8[16384]{0}', space=vmem, size = 0x4000, scoped, tag = 'input window, operand 12, single buffered']
    #allocation24 [shape = 'u8[16384]{0}', space=vmem, size = 0x4000, scoped, tag = 'input window, operand 13, single buffered']
    #allocation25 [shape = 's32[1]{0}', space=sflag, size = 0x4, scoped, tag = 'scoped memory for _lambda_.1']
    #allocation26 [shape = 'u8[16384]{0}', space=vmem, size = 0x4000, scoped, tag = 'input window, operand 14, single buffered']
    #allocation27 [shape = 'u8[16384]{0}', space=vmem, size = 0x4000, scoped, tag = 'input window, operand 15, single buffered']
    #allocation28 [shape = 's32[1]{0}', space=sflag, size = 0x4, scoped, tag = 'scoped memory for _lambda_.1']
    #allocation29 [shape = 'u8[12288]{0}', space=vmem, size = 0x3000, scoped, tag = 'input window, operand 16, single buffered']
    #allocation30 [shape = 'u8[4096]{0}', space=vmem, size = 0x1000, scoped, tag = 'input window, operand 17, single buffered']
    #allocation31 [shape = 's32[1]{0}', space=sflag, size = 0x4, scoped, tag = 'scoped memory for _lambda_.1']
    #allocation32 [shape = 'u8[4096]{0}', space=vmem, size = 0x1000, scoped, tag = 'input window, operand 18, single buffered']
    #allocation33 [shape = 'u8[4096]{0}', space=vmem, size = 0x1000, scoped, tag = 'input window, operand 19, single buffered']
    #allocation34 [shape = 's32[1]{0}', space=sflag, size = 0x4, scoped, tag = 'scoped memory for _lambda_.1']
    #allocation35 [shape = 'u8[4096]{0}', space=vmem, size = 0x1000, scoped, tag = 'input window, operand 20, single buffered']
    #allocation36 [shape = 'u8[8192]{0}', space=vmem, size = 0x2000, scoped, tag = 'output window, operand 0']
    %26 = vsyncpa [#allocation4], 0
    %s27 = scalar_lea.sflag [#allocation4], 1
    %28 = vsyncpa %s27, 0
    %29 = vsyncpa [#allocation7], 0
    %30 = vsyncpa [#allocation10], 0
    %31 = vsyncpa [#allocation13], 0
    %32 = vsyncpa [#allocation16], 0
    %33 = vsyncpa [#allocation19], 0
    %34 = vsyncpa [#allocation22], 0
    %35 = vsyncpa [#allocation25], 0
    %36 = vsyncpa [#allocation28], 0
    %37 = vsyncpa [#allocation31], 0
    %38 = vsyncpa [#allocation34], 0
    %39 = vsyncpa [#allocation5], 0
    %s40 = scalar_lea.sflag [#allocation5], 1
    %41 = vsyncpa %s40, 0
    loop: start=0, step=1, limit=4
    $region2: #{_lambda_.1} parent=1 // loop_pre_header
      _
    $region3: #{_lambda_.1} parent=1 // loop_header
      %s43 = sphi 0, %s47
      %p44 = scmp.ge.s32.totalorder %s43, 4
      %s53 = sphi 0, %s55
      %s56 = sphi 0, %s53
      %s57 = sphi 0, %s56
      %s73 = sphi 0, %s57
      %s77 = sphi 0, %s77
      %s79 = sphi 0, %s77
      %s80 = sphi 0, %s79
      %s94 = sphi 0, %s80
      %s98 = sphi 0, %s98
      %s100 = sphi 0, %s98
      %s101 = sphi 0, %s100
      %s115 = sphi 0, %s101
      %s119 = sphi 0, %s119
      %s121 = sphi 0, %s119
      %s122 = sphi 0, %s121
      %s136 = sphi 0, %s122
      %s140 = sphi 0, %s140
      %s142 = sphi 0, %s140
      %s143 = sphi 0, %s142
      %s157 = sphi 0, %s143
      %s161 = sphi 0, %s161
      %s163 = sphi 0, %s161
      %s164 = sphi 0, %s163
      %s178 = sphi 0, %s164
      %s182 = sphi 0, %s182
      %s184 = sphi 0, %s182
      %s185 = sphi 0, %s184
      %s199 = sphi 0, %s185
      %s203 = sphi 0, %s203
      %s205 = sphi 0, %s203
      %s206 = sphi 0, %s205
      %s220 = sphi 0, %s206
      %s224 = sphi 0, %s224
      %s226 = sphi 0, %s224
      %s227 = sphi 0, %s226
      %s241 = sphi 0, %s227
      %s245 = sphi 0, %s245
      %s247 = sphi 0, %s245
      %s248 = sphi 0, %s247
      %s262 = sphi 0, %s248
      %s266 = sphi 0, %s266
      %s268 = sphi 0, %s266
      %s269 = sphi 0, %s268
      %s283 = sphi 0, %s269
      %s287 = sphi 0, %s287
      %s289 = sphi 0, %s287
      %s290 = sphi 0, %s289
      %s304 = sphi 0, %s290
      %s308 = sphi 0, %s308
      %s310 = sphi 0, %s308
      %s311 = sphi 0, %s310
      %s325 = sphi 0, %s311
      %s329 = sphi 0, %s329
      %s331 = sphi 0, %s329
      %s332 = sphi 0, %s331
      %s346 = sphi 0, %s332
      %s350 = sphi 0, %s350
      %s352 = sphi 0, %s350
      %s353 = sphi 0, %s352
      %s367 = sphi 0, %s353
      %s371 = sphi 0, %s371
      %s373 = sphi 0, %s371
      %s374 = sphi 0, %s373
      %s388 = sphi 0, %s374
      %s392 = sphi 0, %s392
      %s394 = sphi 0, %s392
      %s395 = sphi 0, %s394
      %s409 = sphi 0, %s395
      %s413 = sphi 0, %s413
      %s415 = sphi 0, %s413
      %s416 = sphi 0, %s415
      %s430 = sphi 0, %s416
      %s434 = sphi 0, %s434
      %s436 = sphi 0, %s434
      %s437 = sphi 0, %s436
      %s451 = sphi 0, %s437
      %s455 = sphi 0, %s455
      %s457 = sphi 0, %s455
      %s458 = sphi 0, %s457
      %s472 = sphi 0, %s458
      %s476 = sphi 0, %s476
      %s478 = sphi 0, %s476
      %s479 = sphi 0, %s478
      %s493 = sphi 0, %s479
      %s499 = sphi 0, %s501
      %s502 = sphi 0, %s499
      %s503 = sphi 0, %s502
      %s519 = sphi 0, %s503
    $region4: #{_lambda_.1} parent=1 // loop_header_branch
      %46 = sbr.rel (%p44) target = $region8
    $region5: #{_lambda_.1} parent=1 // loop_body
      %s48 = ssub.s32 %s43, 1
      %s49 = ssub.s32 %s43, 2
      %s50 = sadd.s32 %s43, 1
      %s51 = ssub.s32 %s43, %s50
      %p52 = scmp.eq.s32.totalorder %s51, 0
      %s54 = sadd.s32 %s53, 1
      %s55 = scalar_select %p52, %s53, %s54
      %p58 = pneg %p52
      %p59 = scmp.eq.s32.totalorder %s43, 1
      %p60 = por %p58, %p59
      %p61 = scmp.ne.s32.totalorder %s53, %s56
      %p62 = scmp.eq.s32.totalorder %s43, 0
      %p63 = por %p61, %p62
      %p64 = scmp.ne.s32.totalorder %s53, %s56
      %p65 = scmp.eq.s32.totalorder %s48, 1
      %p66 = por %p64, %p65
      %p67 = scmp.ne.s32.totalorder %s56, %s57
      %p68 = scmp.eq.s32.totalorder %s48, 0
      %p69 = por %p67, %p68
      %p70 = scmp.ne.s32.totalorder %s56, %s57
      %p71 = scmp.eq.s32.totalorder %s49, 1
      %p72 = por %p70, %p71
      %p74 = scmp.ne.s32.totalorder %s57, %s73
      %p75 = scmp.eq.s32.totalorder %s49, 0
      %p76 = por %p74, %p75
      %s78 = sadd.s32 %s77, 1
      %p81 = scmp.eq.s32.totalorder %s43, 1
      %p82 = scmp.ne.s32.totalorder %s77, %s79
      %p83 = scmp.eq.s32.totalorder %s43, 0
      %p84 = por %p82, %p83
      %p85 = scmp.ne.s32.totalorder %s77, %s79
      %p86 = scmp.eq.s32.totalorder %s48, 1
      %p87 = por %p85, %p86
      %p88 = scmp.ne.s32.totalorder %s79, %s80
      %p89 = scmp.eq.s32.totalorder %s48, 0
      %p90 = por %p88, %p89
      %p91 = scmp.ne.s32.totalorder %s79, %s80
      %p92 = scmp.eq.s32.totalorder %s49, 1
      %p93 = por %p91, %p92
      %p95 = scmp.ne.s32.totalorder %s80, %s94
      %p96 = scmp.eq.s32.totalorder %s49, 0
      %p97 = por %p95, %p96
      %s99 = sadd.s32 %s98, 1
      %p102 = scmp.eq.s32.totalorder %s43, 1
      %p103 = scmp.ne.s32.totalorder %s98, %s100
      %p104 = scmp.eq.s32.totalorder %s43, 0
      %p105 = por %p103, %p104
      %p106 = scmp.ne.s32.totalorder %s98, %s100
      %p107 = scmp.eq.s32.totalorder %s48, 1
      %p108 = por %p106, %p107
      %p109 = scmp.ne.s32.totalorder %s100, %s101
      %p110 = scmp.eq.s32.totalorder %s48, 0
      %p111 = por %p109, %p110
      %p112 = scmp.ne.s32.totalorder %s100, %s101
      %p113 = scmp.eq.s32.totalorder %s49, 1
      %p114 = por %p112, %p113
      %p116 = scmp.ne.s32.totalorder %s101, %s115
      %p117 = scmp.eq.s32.totalorder %s49, 0
      %p118 = por %p116, %p117
      %s120 = sadd.s32 %s119, 1
      %p123 = scmp.eq.s32.totalorder %s43, 1
      %p124 = scmp.ne.s32.totalorder %s119, %s121
      %p125 = scmp.eq.s32.totalorder %s43, 0
      %p126 = por %p124, %p125
      %p127 = scmp.ne.s32.totalorder %s119, %s121
      %p128 = scmp.eq.s32.totalorder %s48, 1
      %p129 = por %p127, %p128
      %p130 = scmp.ne.s32.totalorder %s121, %s122
      %p131 = scmp.eq.s32.totalorder %s48, 0
      %p132 = por %p130, %p131
      %p133 = scmp.ne.s32.totalorder %s121, %s122
      %p134 = scmp.eq.s32.totalorder %s49, 1
      %p135 = por %p133, %p134
      %p137 = scmp.ne.s32.totalorder %s122, %s136
      %p138 = scmp.eq.s32.totalorder %s49, 0
      %p139 = por %p137, %p138
      %s141 = sadd.s32 %s140, 1
      %p144 = scmp.eq.s32.totalorder %s43, 1
      %p145 = scmp.ne.s32.totalorder %s140, %s142
      %p146 = scmp.eq.s32.totalorder %s43, 0
      %p147 = por %p145, %p146
      %p148 = scmp.ne.s32.totalorder %s140, %s142
      %p149 = scmp.eq.s32.totalorder %s48, 1
      %p150 = por %p148, %p149
      %p151 = scmp.ne.s32.totalorder %s142, %s143
      %p152 = scmp.eq.s32.totalorder %s48, 0
      %p153 = por %p151, %p152
      %p154 = scmp.ne.s32.totalorder %s142, %s143
      %p155 = scmp.eq.s32.totalorder %s49, 1
      %p156 = por %p154, %p155
      %p158 = scmp.ne.s32.totalorder %s143, %s157
      %p159 = scmp.eq.s32.totalorder %s49, 0
      %p160 = por %p158, %p159
      %s162 = sadd.s32 %s161, 1
      %p165 = scmp.eq.s32.totalorder %s43, 1
      %p166 = scmp.ne.s32.totalorder %s161, %s163
      %p167 = scmp.eq.s32.totalorder %s43, 0
      %p168 = por %p166, %p167
      %p169 = scmp.ne.s32.totalorder %s161, %s163
      %p170 = scmp.eq.s32.totalorder %s48, 1
      %p171 = por %p169, %p170
      %p172 = scmp.ne.s32.totalorder %s163, %s164
      %p173 = scmp.eq.s32.totalorder %s48, 0
      %p174 = por %p172, %p173
      %p175 = scmp.ne.s32.totalorder %s163, %s164
      %p176 = scmp.eq.s32.totalorder %s49, 1
      %p177 = por %p175, %p176
      %p179 = scmp.ne.s32.totalorder %s164, %s178
      %p180 = scmp.eq.s32.totalorder %s49, 0
      %p181 = por %p179, %p180
      %s183 = sadd.s32 %s182, 1
      %p186 = scmp.eq.s32.totalorder %s43, 1
      %p187 = scmp.ne.s32.totalorder %s182, %s184
      %p188 = scmp.eq.s32.totalorder %s43, 0
      %p189 = por %p187, %p188
      %p190 = scmp.ne.s32.totalorder %s182, %s184
      %p191 = scmp.eq.s32.totalorder %s48, 1
      %p192 = por %p190, %p191
      %p193 = scmp.ne.s32.totalorder %s184, %s185
      %p194 = scmp.eq.s32.totalorder %s48, 0
      %p195 = por %p193, %p194
      %p196 = scmp.ne.s32.totalorder %s184, %s185
      %p197 = scmp.eq.s32.totalorder %s49, 1
      %p198 = por %p196, %p197
      %p200 = scmp.ne.s32.totalorder %s185, %s199
      %p201 = scmp.eq.s32.totalorder %s49, 0
      %p202 = por %p200, %p201
      %s204 = sadd.s32 %s203, 1
      %p207 = scmp.eq.s32.totalorder %s43, 1
      %p208 = scmp.ne.s32.totalorder %s203, %s205
      %p209 = scmp.eq.s32.totalorder %s43, 0
      %p210 = por %p208, %p209
      %p211 = scmp.ne.s32.totalorder %s203, %s205
      %p212 = scmp.eq.s32.totalorder %s48, 1
      %p213 = por %p211, %p212
      %p214 = scmp.ne.s32.totalorder %s205, %s206
      %p215 = scmp.eq.s32.totalorder %s48, 0
      %p216 = por %p214, %p215
      %p217 = scmp.ne.s32.totalorder %s205, %s206
      %p218 = scmp.eq.s32.totalorder %s49, 1
      %p219 = por %p217, %p218
      %p221 = scmp.ne.s32.totalorder %s206, %s220
      %p222 = scmp.eq.s32.totalorder %s49, 0
      %p223 = por %p221, %p222
      %s225 = sadd.s32 %s224, 1
      %p228 = scmp.eq.s32.totalorder %s43, 1
      %p229 = scmp.ne.s32.totalorder %s224, %s226
      %p230 = scmp.eq.s32.totalorder %s43, 0
      %p231 = por %p229, %p230
      %p232 = scmp.ne.s32.totalorder %s224, %s226
      %p233 = scmp.eq.s32.totalorder %s48, 1
      %p234 = por %p232, %p233
      %p235 = scmp.ne.s32.totalorder %s226, %s227
      %p236 = scmp.eq.s32.totalorder %s48, 0
      %p237 = por %p235, %p236
      %p238 = scmp.ne.s32.totalorder %s226, %s227
      %p239 = scmp.eq.s32.totalorder %s49, 1
      %p240 = por %p238, %p239
      %p242 = scmp.ne.s32.totalorder %s227, %s241
      %p243 = scmp.eq.s32.totalorder %s49, 0
      %p244 = por %p242, %p243
      %s246 = sadd.s32 %s245, 1
      %p249 = scmp.eq.s32.totalorder %s43, 1
      %p250 = scmp.ne.s32.totalorder %s245, %s247
      %p251 = scmp.eq.s32.totalorder %s43, 0
      %p252 = por %p250, %p251
      %p253 = scmp.ne.s32.totalorder %s245, %s247
      %p254 = scmp.eq.s32.totalorder %s48, 1
      %p255 = por %p253, %p254
      %p256 = scmp.ne.s32.totalorder %s247, %s248
      %p257 = scmp.eq.s32.totalorder %s48, 0
      %p258 = por %p256, %p257
      %p259 = scmp.ne.s32.totalorder %s247, %s248
      %p260 = scmp.eq.s32.totalorder %s49, 1
      %p261 = por %p259, %p260
      %p263 = scmp.ne.s32.totalorder %s248, %s262
      %p264 = scmp.eq.s32.totalorder %s49, 0
      %p265 = por %p263, %p264
      %s267 = sadd.s32 %s266, 1
      %p270 = scmp.eq.s32.totalorder %s43, 1
      %p271 = scmp.ne.s32.totalorder %s266, %s268
      %p272 = scmp.eq.s32.totalorder %s43, 0
      %p273 = por %p271, %p272
      %p274 = scmp.ne.s32.totalorder %s266, %s268
      %p275 = scmp.eq.s32.totalorder %s48, 1
      %p276 = por %p274, %p275
      %p277 = scmp.ne.s32.totalorder %s268, %s269
      %p278 = scmp.eq.s32.totalorder %s48, 0
      %p279 = por %p277, %p278
      %p280 = scmp.ne.s32.totalorder %s268, %s269
      %p281 = scmp.eq.s32.totalorder %s49, 1
      %p282 = por %p280, %p281
      %p284 = scmp.ne.s32.totalorder %s269, %s283
      %p285 = scmp.eq.s32.totalorder %s49, 0
      %p286 = por %p284, %p285
      %s288 = sadd.s32 %s287, 1
      %p291 = scmp.eq.s32.totalorder %s43, 1
      %p292 = scmp.ne.s32.totalorder %s287, %s289
      %p293 = scmp.eq.s32.totalorder %s43, 0
      %p294 = por %p292, %p293
      %p295 = scmp.ne.s32.totalorder %s287, %s289
      %p296 = scmp.eq.s32.totalorder %s48, 1
      %p297 = por %p295, %p296
      %p298 = scmp.ne.s32.totalorder %s289, %s290
      %p299 = scmp.eq.s32.totalorder %s48, 0
      %p300 = por %p298, %p299
      %p301 = scmp.ne.s32.totalorder %s289, %s290
      %p302 = scmp.eq.s32.totalorder %s49, 1
      %p303 = por %p301, %p302
      %p305 = scmp.ne.s32.totalorder %s290, %s304
      %p306 = scmp.eq.s32.totalorder %s49, 0
      %p307 = por %p305, %p306
      %s309 = sadd.s32 %s308, 1
      %p312 = scmp.eq.s32.totalorder %s43, 1
      %p313 = scmp.ne.s32.totalorder %s308, %s310
      %p314 = scmp.eq.s32.totalorder %s43, 0
      %p315 = por %p313, %p314
      %p316 = scmp.ne.s32.totalorder %s308, %s310
      %p317 = scmp.eq.s32.totalorder %s48, 1
      %p318 = por %p316, %p317
      %p319 = scmp.ne.s32.totalorder %s310, %s311
      %p320 = scmp.eq.s32.totalorder %s48, 0
      %p321 = por %p319, %p320
      %p322 = scmp.ne.s32.totalorder %s310, %s311
      %p323 = scmp.eq.s32.totalorder %s49, 1
      %p324 = por %p322, %p323
      %p326 = scmp.ne.s32.totalorder %s311, %s325
      %p327 = scmp.eq.s32.totalorder %s49, 0
      %p328 = por %p326, %p327
      %s330 = sadd.s32 %s329, 1
      %p333 = scmp.eq.s32.totalorder %s43, 1
      %p334 = scmp.ne.s32.totalorder %s329, %s331
      %p335 = scmp.eq.s32.totalorder %s43, 0
      %p336 = por %p334, %p335
      %p337 = scmp.ne.s32.totalorder %s329, %s331
      %p338 = scmp.eq.s32.totalorder %s48, 1
      %p339 = por %p337, %p338
      %p340 = scmp.ne.s32.totalorder %s331, %s332
      %p341 = scmp.eq.s32.totalorder %s48, 0
      %p342 = por %p340, %p341
      %p343 = scmp.ne.s32.totalorder %s331, %s332
      %p344 = scmp.eq.s32.totalorder %s49, 1
      %p345 = por %p343, %p344
      %p347 = scmp.ne.s32.totalorder %s332, %s346
      %p348 = scmp.eq.s32.totalorder %s49, 0
      %p349 = por %p347, %p348
      %s351 = sadd.s32 %s350, 1
      %p354 = scmp.eq.s32.totalorder %s43, 1
      %p355 = scmp.ne.s32.totalorder %s350, %s352
      %p356 = scmp.eq.s32.totalorder %s43, 0
      %p357 = por %p355, %p356
      %p358 = scmp.ne.s32.totalorder %s350, %s352
      %p359 = scmp.eq.s32.totalorder %s48, 1
      %p360 = por %p358, %p359
      %p361 = scmp.ne.s32.totalorder %s352, %s353
      %p362 = scmp.eq.s32.totalorder %s48, 0
      %p363 = por %p361, %p362
      %p364 = scmp.ne.s32.totalorder %s352, %s353
      %p365 = scmp.eq.s32.totalorder %s49, 1
      %p366 = por %p364, %p365
      %p368 = scmp.ne.s32.totalorder %s353, %s367
      %p369 = scmp.eq.s32.totalorder %s49, 0
      %p370 = por %p368, %p369
      %s372 = sadd.s32 %s371, 1
      %p375 = scmp.eq.s32.totalorder %s43, 1
      %p376 = scmp.ne.s32.totalorder %s371, %s373
      %p377 = scmp.eq.s32.totalorder %s43, 0
      %p378 = por %p376, %p377
      %p379 = scmp.ne.s32.totalorder %s371, %s373
      %p380 = scmp.eq.s32.totalorder %s48, 1
      %p381 = por %p379, %p380
      %p382 = scmp.ne.s32.totalorder %s373, %s374
      %p383 = scmp.eq.s32.totalorder %s48, 0
      %p384 = por %p382, %p383
      %p385 = scmp.ne.s32.totalorder %s373, %s374
      %p386 = scmp.eq.s32.totalorder %s49, 1
      %p387 = por %p385, %p386
      %p389 = scmp.ne.s32.totalorder %s374, %s388
      %p390 = scmp.eq.s32.totalorder %s49, 0
      %p391 = por %p389, %p390
      %s393 = sadd.s32 %s392, 1
      %p396 = scmp.eq.s32.totalorder %s43, 1
      %p397 = scmp.ne.s32.totalorder %s392, %s394
      %p398 = scmp.eq.s32.totalorder %s43, 0
      %p399 = por %p397, %p398
      %p400 = scmp.ne.s32.totalorder %s392, %s394
      %p401 = scmp.eq.s32.totalorder %s48, 1
      %p402 = por %p400, %p401
      %p403 = scmp.ne.s32.totalorder %s394, %s395
      %p404 = scmp.eq.s32.totalorder %s48, 0
      %p405 = por %p403, %p404
      %p406 = scmp.ne.s32.totalorder %s394, %s395
      %p407 = scmp.eq.s32.totalorder %s49, 1
      %p408 = por %p406, %p407
      %p410 = scmp.ne.s32.totalorder %s395, %s409
      %p411 = scmp.eq.s32.totalorder %s49, 0
      %p412 = por %p410, %p411
      %s414 = sadd.s32 %s413, 1
      %p417 = scmp.eq.s32.totalorder %s43, 1
      %p418 = scmp.ne.s32.totalorder %s413, %s415
      %p419 = scmp.eq.s32.totalorder %s43, 0
      %p420 = por %p418, %p419
      %p421 = scmp.ne.s32.totalorder %s413, %s415
      %p422 = scmp.eq.s32.totalorder %s48, 1
      %p423 = por %p421, %p422
      %p424 = scmp.ne.s32.totalorder %s415, %s416
      %p425 = scmp.eq.s32.totalorder %s48, 0
      %p426 = por %p424, %p425
      %p427 = scmp.ne.s32.totalorder %s415, %s416
      %p428 = scmp.eq.s32.totalorder %s49, 1
      %p429 = por %p427, %p428
      %p431 = scmp.ne.s32.totalorder %s416, %s430
      %p432 = scmp.eq.s32.totalorder %s49, 0
      %p433 = por %p431, %p432
      %s435 = sadd.s32 %s434, 1
      %p438 = scmp.eq.s32.totalorder %s43, 1
      %p439 = scmp.ne.s32.totalorder %s434, %s436
      %p440 = scmp.eq.s32.totalorder %s43, 0
      %p441 = por %p439, %p440
      %p442 = scmp.ne.s32.totalorder %s434, %s436
      %p443 = scmp.eq.s32.totalorder %s48, 1
      %p444 = por %p442, %p443
      %p445 = scmp.ne.s32.totalorder %s436, %s437
      %p446 = scmp.eq.s32.totalorder %s48, 0
      %p447 = por %p445, %p446
      %p448 = scmp.ne.s32.totalorder %s436, %s437
      %p449 = scmp.eq.s32.totalorder %s49, 1
      %p450 = por %p448, %p449
      %p452 = scmp.ne.s32.totalorder %s437, %s451
      %p453 = scmp.eq.s32.totalorder %s49, 0
      %p454 = por %p452, %p453
      %s456 = sadd.s32 %s455, 1
      %p459 = scmp.eq.s32.totalorder %s43, 1
      %p460 = scmp.ne.s32.totalorder %s455, %s457
      %p461 = scmp.eq.s32.totalorder %s43, 0
      %p462 = por %p460, %p461
      %p463 = scmp.ne.s32.totalorder %s455, %s457
      %p464 = scmp.eq.s32.totalorder %s48, 1
      %p465 = por %p463, %p464
      %p466 = scmp.ne.s32.totalorder %s457, %s458
      %p467 = scmp.eq.s32.totalorder %s48, 0
      %p468 = por %p466, %p467
      %p469 = scmp.ne.s32.totalorder %s457, %s458
      %p470 = scmp.eq.s32.totalorder %s49, 1
      %p471 = por %p469, %p470
      %p473 = scmp.ne.s32.totalorder %s458, %s472
      %p474 = scmp.eq.s32.totalorder %s49, 0
      %p475 = por %p473, %p474
      %s477 = sadd.s32 %s476, 1
      %p480 = scmp.eq.s32.totalorder %s43, 1
      %p481 = scmp.ne.s32.totalorder %s476, %s478
      %p482 = scmp.eq.s32.totalorder %s43, 0
      %p483 = por %p481, %p482
      %p484 = scmp.ne.s32.totalorder %s476, %s478
      %p485 = scmp.eq.s32.totalorder %s48, 1
      %p486 = por %p484, %p485
      %p487 = scmp.ne.s32.totalorder %s478, %s479
      %p488 = scmp.eq.s32.totalorder %s48, 0
      %p489 = por %p487, %p488
      %p490 = scmp.ne.s32.totalorder %s478, %s479
      %p491 = scmp.eq.s32.totalorder %s49, 1
      %p492 = por %p490, %p491
      %p494 = scmp.ne.s32.totalorder %s479, %s493
      %p495 = scmp.eq.s32.totalorder %s49, 0
      %p496 = por %p494, %p495
      %s497 = ssub.s32 %s43, %s50
      %p498 = scmp.eq.s32.totalorder %s497, 0
      %s500 = sadd.s32 %s499, 1
      %s501 = scalar_select %p498, %s499, %s500
      %p504 = pneg %p498
      %p505 = scmp.eq.s32.totalorder %s43, 1
      %p506 = por %p504, %p505
      %p507 = scmp.ne.s32.totalorder %s499, %s502
      %p508 = scmp.eq.s32.totalorder %s43, 0
      %p509 = por %p507, %p508
      %p510 = scmp.ne.s32.totalorder %s499, %s502
      %p511 = scmp.eq.s32.totalorder %s48, 1
      %p512 = por %p510, %p511
      %p513 = scmp.ne.s32.totalorder %s502, %s503
      %p514 = scmp.eq.s32.totalorder %s48, 0
      %p515 = por %p513, %p514
      %p516 = scmp.ne.s32.totalorder %s502, %s503
      %p517 = scmp.eq.s32.totalorder %s49, 1
      %p518 = por %p516, %p517
      %p520 = scmp.ne.s32.totalorder %s503, %s519
      %p521 = scmp.eq.s32.totalorder %s49, 0
      %p522 = por %p520, %p521
      %p523 = scmp.le.s32.totalorder 1, %s43
      %p524 = scmp.lt.s32.totalorder %s43, 3
      %p525 = pnand %p523, %p524
      %p526 = pneg %p525
      // Predicated region
      $region9: #{_lambda_.1} parent=5 // pred_check
        _
      $region10: #{_lambda_.1} parent=5 // pred_check_branch
        %528 = sbr.rel (%p525) target = $region12
      $region11: #{_lambda_.1} parent=5 // pred_region
        %s529 = ssub.s32 %s43, 1
        // Predicated region
        $region13: #{_lambda_.1} parent=11 // pred_check
          %p530 = pneg %p90
        $region14: #{_lambda_.1} parent=11 // pred_check_branch
          %532 = sbr.rel (%p530) target = $region16
        $region15: #{_lambda_.1} parent=11 // pred_region
          %s534 = ssub.s32 16, 16
          %535 = vsyncadd [#allocation7], %s534
          %s537 = sshll.u32 [#allocation6], 4
          %s538 = int_to_ptr.vmem [resolvable:$true] %s537
          %540 = dma.hbm_to_vmem [thread:$0]  %s1, 16, %s538, [#allocation7]
        $region16: #{_lambda_.1} parent=11 // pred_fallthru
          _
        // Predicated region
        $region17: #{_lambda_.1} parent=11 // pred_check
          %p541 = pneg %p111
        $region18: #{_lambda_.1} parent=11 // pred_check_branch
          %543 = sbr.rel (%p541) target = $region20
        $region19: #{_lambda_.1} parent=11 // pred_region
          %s545 = ssub.s32 16, 16
          %546 = vsyncadd [#allocation7], %s545
          %s548 = sshll.u32 [#allocation8], 4
          %s549 = int_to_ptr.vmem [resolvable:$true] %s548
          %551 = dma.hbm_to_vmem [thread:$0]  %s2, 16, %s549, [#allocation7]
        $region20: #{_lambda_.1} parent=11 // pred_fallthru
          _
        // Predicated region
        $region21: #{_lambda_.1} parent=11 // pred_check
          %p552 = pneg %p132
        $region22: #{_lambda_.1} parent=11 // pred_check_branch
          %554 = sbr.rel (%p552) target = $region24
        $region23: #{_lambda_.1} parent=11 // pred_region
          %s556 = ssub.s32 128, 128
          %557 = vsyncadd [#allocation10], %s556
          %s559 = sshll.u32 [#allocation9], 4
          %s560 = int_to_ptr.vmem [resolvable:$true] %s559
          %562 = dma.hbm_to_vmem [thread:$0]  %s3, 128, %s560, [#allocation10]
        $region24: #{_lambda_.1} parent=11 // pred_fallthru
          _
        // Predicated region
        $region25: #{_lambda_.1} parent=11 // pred_check
          %p563 = pneg %p153
        $region26: #{_lambda_.1} parent=11 // pred_check_branch
          %565 = sbr.rel (%p563) target = $region28
        $region27: #{_lambda_.1} parent=11 // pred_region
          %s567 = ssub.s32 128, 128
          %568 = vsyncadd [#allocation10], %s567
          %s570 = sshll.u32 [#allocation11], 4
          %s571 = int_to_ptr.vmem [resolvable:$true] %s570
          %573 = dma.hbm_to_vmem [thread:$0]  %s4, 128, %s571, [#allocation10]
        $region28: #{_lambda_.1} parent=11 // pred_fallthru
          _
        // Predicated region
        $region29: #{_lambda_.1} parent=11 // pred_check
          %p574 = pneg %p174
        $region30: #{_lambda_.1} parent=11 // pred_check_branch
          %576 = sbr.rel (%p574) target = $region32
        $region31: #{_lambda_.1} parent=11 // pred_region
          %s578 = ssub.s32 128, 128
          %579 = vsyncadd [#allocation13], %s578
          %s581 = sshll.u32 [#allocation12], 4
          %s582 = int_to_ptr.vmem [resolvable:$true] %s581
          %584 = dma.hbm_to_vmem [thread:$0]  %s5, 128, %s582, [#allocation13]
        $region32: #{_lambda_.1} parent=11 // pred_fallthru
          _
        // Predicated region
        $region33: #{_lambda_.1} parent=11 // pred_check
          %p585 = pneg %p195
        $region34: #{_lambda_.1} parent=11 // pred_check_branch
          %587 = sbr.rel (%p585) target = $region36
        $region35: #{_lambda_.1} parent=11 // pred_region
          %s589 = ssub.s32 128, 128
          %590 = vsyncadd [#allocation13], %s589
          %s592 = sshll.u32 [#allocation14], 4
          %s593 = int_to_ptr.vmem [resolvable:$true] %s592
          %595 = dma.hbm_to_vmem [thread:$0]  %s6, 128, %s593, [#allocation13]
        $region36: #{_lambda_.1} parent=11 // pred_fallthru
          _
        // Predicated region
        $region37: #{_lambda_.1} parent=11 // pred_check
          %p596 = pneg %p216
        $region38: #{_lambda_.1} parent=11 // pred_check_branch
          %598 = sbr.rel (%p596) target = $region40
        $region39: #{_lambda_.1} parent=11 // pred_region
          %s600 = ssub.s32 128, 128
          %601 = vsyncadd [#allocation16], %s600
          %s603 = sshll.u32 [#allocation15], 4
          %s604 = int_to_ptr.vmem [resolvable:$true] %s603
          %606 = dma.hbm_to_vmem [thread:$0]  %s7, 128, %s604, [#allocation16]
        $region40: #{_lambda_.1} parent=11 // pred_fallthru
          _
        // Predicated region
        $region41: #{_lambda_.1} parent=11 // pred_check
          %p607 = pneg %p237
        $region42: #{_lambda_.1} parent=11 // pred_check_branch
          %609 = sbr.rel (%p607) target = $region44
        $region43: #{_lambda_.1} parent=11 // pred_region
          %s611 = ssub.s32 768, 768
          %612 = vsyncadd [#allocation16], %s611
          %s613 = sshll.u32 [#allocation17], 4
          %s614 = int_to_ptr.vmem [resolvable:$true] %s613
          %619 = dma.hbm_to_vmem [thread:$0]  %s8, 768, %s614, [#allocation16], 128, 128, 8
        $region44: #{_lambda_.1} parent=11 // pred_fallthru
          _
        // Predicated region
        $region45: #{_lambda_.1} parent=11 // pred_check
          %p620 = pneg %p258
        $region46: #{_lambda_.1} parent=11 // pred_check_branch
          %622 = sbr.rel (%p620) target = $region48
        $region47: #{_lambda_.1} parent=11 // pred_region
          %s624 = ssub.s32 768, 768
          %625 = vsyncadd [#allocation19], %s624
          %s626 = sshll.u32 [#allocation18], 4
          %s627 = int_to_ptr.vmem [resolvable:$true] %s626
          %632 = dma.hbm_to_vmem [thread:$0]  %s9, 768, %s627, [#allocation19], 128, 128, 8
        $region48: #{_lambda_.1} parent=11 // pred_fallthru
          _
        // Predicated region
        $region49: #{_lambda_.1} parent=11 // pred_check
          %p633 = pneg %p279
        $region50: #{_lambda_.1} parent=11 // pred_check_branch
          %635 = sbr.rel (%p633) target = $region52
        $region51: #{_lambda_.1} parent=11 // pred_region
          %s637 = ssub.s32 768, 768
          %638 = vsyncadd [#allocation19], %s637
          %s639 = sshll.u32 [#allocation20], 4
          %s640 = int_to_ptr.vmem [resolvable:$true] %s639
          %645 = dma.hbm_to_vmem [thread:$0]  %s10, 768, %s640, [#allocation19], 128, 128, 8
        $region52: #{_lambda_.1} parent=11 // pred_fallthru
          _
        // Predicated region
        $region53: #{_lambda_.1} parent=11 // pred_check
          %p646 = pneg %p300
        $region54: #{_lambda_.1} parent=11 // pred_check_branch
          %648 = sbr.rel (%p646) target = $region56
        $region55: #{_lambda_.1} parent=11 // pred_region
          %s650 = ssub.s32 768, 768
          %651 = vsyncadd [#allocation22], %s650
          %s652 = sshll.u32 [#allocation21], 4
          %s653 = int_to_ptr.vmem [resolvable:$true] %s652
          %658 = dma.hbm_to_vmem [thread:$0]  %s11, 768, %s653, [#allocation22], 128, 128, 8
        $region56: #{_lambda_.1} parent=11 // pred_fallthru
          _
        // Predicated region
        $region57: #{_lambda_.1} parent=11 // pred_check
          %p659 = pneg %p321
        $region58: #{_lambda_.1} parent=11 // pred_check_branch
          %661 = sbr.rel (%p659) target = $region60
        $region59: #{_lambda_.1} parent=11 // pred_region
          %s663 = ssub.s32 512, 512
          %664 = vsyncadd [#allocation22], %s663
          %s665 = sshll.u32 [#allocation23], 4
          %s666 = int_to_ptr.vmem [resolvable:$true] %s665
          %671 = dma.hbm_to_vmem [thread:$0]  %s12, 512, %s666, [#allocation22], 128, 128, 8
        $region60: #{_lambda_.1} parent=11 // pred_fallthru
          _
        // Predicated region
        $region61: #{_lambda_.1} parent=11 // pred_check
          %p672 = pneg %p342
        $region62: #{_lambda_.1} parent=11 // pred_check_branch
          %674 = sbr.rel (%p672) target = $region64
        $region63: #{_lambda_.1} parent=11 // pred_region
          %s676 = ssub.s32 512, 512
          %677 = vsyncadd [#allocation25], %s676
          %s678 = sshll.u32 [#allocation24], 4
          %s679 = int_to_ptr.vmem [resolvable:$true] %s678
          %684 = dma.hbm_to_vmem [thread:$0]  %s13, 512, %s679, [#allocation25], 128, 128, 8
        $region64: #{_lambda_.1} parent=11 // pred_fallthru
          _
        // Predicated region
        $region65: #{_lambda_.1} parent=11 // pred_check
          %p685 = pneg %p363
        $region66: #{_lambda_.1} parent=11 // pred_check_branch
          %687 = sbr.rel (%p685) target = $region68
        $region67: #{_lambda_.1} parent=11 // pred_region
          %s689 = ssub.s32 512, 512
          %690 = vsyncadd [#allocation25], %s689
          %s691 = sshll.u32 [#allocation26], 4
          %s692 = int_to_ptr.vmem [resolvable:$true] %s691
          %697 = dma.hbm_to_vmem [thread:$0]  %s14, 512, %s692, [#allocation25], 128, 128, 8
        $region68: #{_lambda_.1} parent=11 // pred_fallthru
          _
        // Predicated region
        $region69: #{_lambda_.1} parent=11 // pred_check
          %p698 = pneg %p384
        $region70: #{_lambda_.1} parent=11 // pred_check_branch
          %700 = sbr.rel (%p698) target = $region72
        $region71: #{_lambda_.1} parent=11 // pred_region
          %s702 = ssub.s32 512, 512
          %703 = vsyncadd [#allocation28], %s702
          %s704 = sshll.u32 [#allocation27], 4
          %s705 = int_to_ptr.vmem [resolvable:$true] %s704
          %710 = dma.hbm_to_vmem [thread:$0]  %s15, 512, %s705, [#allocation28], 128, 128, 8
        $region72: #{_lambda_.1} parent=11 // pred_fallthru
          _
        // Predicated region
        $region73: #{_lambda_.1} parent=11 // pred_check
          %p711 = pneg %p405
        $region74: #{_lambda_.1} parent=11 // pred_check_branch
          %713 = sbr.rel (%p711) target = $region76
        $region75: #{_lambda_.1} parent=11 // pred_region
          %s715 = ssub.s32 384, 384
          %716 = vsyncadd [#allocation28], %s715
          %s717 = sshll.u32 [#allocation29], 4
          %s718 = int_to_ptr.vmem [resolvable:$true] %s717
          %723 = dma.hbm_to_vmem [thread:$0]  %s16, 384, %s718, [#allocation28], 128, 128, 8
        $region76: #{_lambda_.1} parent=11 // pred_fallthru
          _
        // Predicated region
        $region77: #{_lambda_.1} parent=11 // pred_check
          %p724 = pneg %p426
        $region78: #{_lambda_.1} parent=11 // pred_check_branch
          %726 = sbr.rel (%p724) target = $region80
        $region79: #{_lambda_.1} parent=11 // pred_region
          %s728 = ssub.s32 128, 128
          %729 = vsyncadd [#allocation31], %s728
          %s731 = sshll.u32 [#allocation30], 4
          %s732 = int_to_ptr.vmem [resolvable:$true] %s731
          %734 = dma.hbm_to_vmem [thread:$0]  %s17, 128, %s732, [#allocation31]
        $region80: #{_lambda_.1} parent=11 // pred_fallthru
          _
        // Predicated region
        $region81: #{_lambda_.1} parent=11 // pred_check
          %p735 = pneg %p447
        $region82: #{_lambda_.1} parent=11 // pred_check_branch
          %737 = sbr.rel (%p735) target = $region84
        $region83: #{_lambda_.1} parent=11 // pred_region
          %s739 = ssub.s32 128, 128
          %740 = vsyncadd [#allocation31], %s739
          %s742 = sshll.u32 [#allocation32], 4
          %s743 = int_to_ptr.vmem [resolvable:$true] %s742
          %745 = dma.hbm_to_vmem [thread:$0]  %s18, 128, %s743, [#allocation31]
        $region84: #{_lambda_.1} parent=11 // pred_fallthru
          _
        // Predicated region
        $region85: #{_lambda_.1} parent=11 // pred_check
          %p746 = pneg %p468
        $region86: #{_lambda_.1} parent=11 // pred_check_branch
          %748 = sbr.rel (%p746) target = $region88
        $region87: #{_lambda_.1} parent=11 // pred_region
          %s750 = ssub.s32 128, 128
          %751 = vsyncadd [#allocation34], %s750
          %s753 = sshll.u32 [#allocation33], 4
          %s754 = int_to_ptr.vmem [resolvable:$true] %s753
          %756 = dma.hbm_to_vmem [thread:$0]  %s19, 128, %s754, [#allocation34]
        $region88: #{_lambda_.1} parent=11 // pred_fallthru
          _
        // Predicated region
        $region89: #{_lambda_.1} parent=11 // pred_check
          %p757 = pneg %p489
        $region90: #{_lambda_.1} parent=11 // pred_check_branch
          %759 = sbr.rel (%p757) target = $region92
        $region91: #{_lambda_.1} parent=11 // pred_region
          %s761 = ssub.s32 128, 128
          %762 = vsyncadd [#allocation34], %s761
          %s764 = sshll.u32 [#allocation35], 4
          %s765 = int_to_ptr.vmem [resolvable:$true] %s764
          %767 = dma.hbm_to_vmem [thread:$0]  %s20, 128, %s765, [#allocation34]
        $region92: #{_lambda_.1} parent=11 // pred_fallthru
          _
      $region12: #{_lambda_.1} parent=5 // pred_fallthru
        _
      %p768 = scmp.lt.s32.totalorder %s43, 2
      // Predicated region
      $region93: #{_lambda_.1} parent=5 // pred_check
        %p769 = pneg %p768
      $region94: #{_lambda_.1} parent=5 // pred_check_branch
        %771 = sbr.rel (%p769) target = $region96
      $region95: #{_lambda_.1} parent=5 // pred_region
        // Predicated region
        $region97: #{_lambda_.1} parent=95 // pred_check
          %p772 = pneg %p63
        $region98: #{_lambda_.1} parent=95 // pred_check_branch
          %774 = sbr.rel (%p772) target = $region100
        $region99: #{_lambda_.1} parent=95 // pred_region
          %s775 = sand.u32 %s53, 1
          %s776 = scalar_lea.sflag [#allocation4], %s775
          %s777 = sand.u32 %s53, 1
          %s778 = smul.addr %s777, 2
          %s779 = scalar_lea.vmem [#allocation3], %s778
          %s781 = ssub.s32 32, 32
          %782 = vsyncadd %s776, %s781
          %s783 = smul.addr %s43, 32
          %s784 = scalar_lea.hbm %s0, %s783
          %s786 = sshll.u32 %s779, 4
          %s787 = int_to_ptr.vmem [resolvable:$true] %s786
          %789 = dma.hbm_to_vmem [thread:$0]  %s784, 32, %s787, %s776
        $region100: #{_lambda_.1} parent=95 // pred_fallthru
          _
      $region96: #{_lambda_.1} parent=5 // pred_fallthru
        _
      %p790 = scmp.le.s32.totalorder 1, %s43
      %p791 = scmp.lt.s32.totalorder %s43, 3
      %p792 = pnand %p790, %p791
      %p793 = pneg %p792
      // Predicated region
      $region101: #{_lambda_.1} parent=5 // pred_check
        _
      $region102: #{_lambda_.1} parent=5 // pred_check_branch
        %795 = sbr.rel (%p792) target = $region104
      $region103: #{_lambda_.1} parent=5 // pred_region
        %s796 = ssub.s32 %s43, 1
        %s797 = sand.u32 %s56, 1
        %s798 = scalar_lea.sflag [#allocation4], %s797
        %s799 = sand.u32 %s56, 1
        %s800 = smul.addr %s799, 2
        %s801 = scalar_lea.vmem [#allocation3], %s800
        // Predicated region
        $region105: #{_lambda_.1} parent=103 // pred_check
          %p802 = pneg %p69
        $region106: #{_lambda_.1} parent=103 // pred_check_branch
          %804 = sbr.rel (%p802) target = $region108
        $region107: #{_lambda_.1} parent=103 // pred_region
          %805 = dma.done %s798, 32
        $region108: #{_lambda_.1} parent=103 // pred_fallthru
          _
        // Predicated region
        $region109: #{_lambda_.1} parent=103 // pred_check
          %p806 = pneg %p90
        $region110: #{_lambda_.1} parent=103 // pred_check_branch
          %808 = sbr.rel (%p806) target = $region112
        $region111: #{_lambda_.1} parent=103 // pred_region
          %809 = dma.done [#allocation7], 16
        $region112: #{_lambda_.1} parent=103 // pred_fallthru
          _
        // Predicated region
        $region113: #{_lambda_.1} parent=103 // pred_check
          %p810 = pneg %p111
        $region114: #{_lambda_.1} parent=103 // pred_check_branch
          %812 = sbr.rel (%p810) target = $region116
        $region115: #{_lambda_.1} parent=103 // pred_region
          %813 = dma.done [#allocation7], 16
        $region116: #{_lambda_.1} parent=103 // pred_fallthru
          _
        // Predicated region
        $region117: #{_lambda_.1} parent=103 // pred_check
          %p814 = pneg %p132
        $region118: #{_lambda_.1} parent=103 // pred_check_branch
          %816 = sbr.rel (%p814) target = $region120
        $region119: #{_lambda_.1} parent=103 // pred_region
          %817 = dma.done [#allocation10], 128
        $region120: #{_lambda_.1} parent=103 // pred_fallthru
          _
        // Predicated region
        $region121: #{_lambda_.1} parent=103 // pred_check
          %p818 = pneg %p153
        $region122: #{_lambda_.1} parent=103 // pred_check_branch
          %820 = sbr.rel (%p818) target = $region124
        $region123: #{_lambda_.1} parent=103 // pred_region
          %821 = dma.done [#allocation10], 128
        $region124: #{_lambda_.1} parent=103 // pred_fallthru
          _
        // Predicated region
        $region125: #{_lambda_.1} parent=103 // pred_check
          %p822 = pneg %p174
        $region126: #{_lambda_.1} parent=103 // pred_check_branch
          %824 = sbr.rel (%p822) target = $region128
        $region127: #{_lambda_.1} parent=103 // pred_region
          %825 = dma.done [#allocation13], 128
        $region128: #{_lambda_.1} parent=103 // pred_fallthru
          _
        // Predicated region
        $region129: #{_lambda_.1} parent=103 // pred_check
          %p826 = pneg %p195
        $region130: #{_lambda_.1} parent=103 // pred_check_branch
          %828 = sbr.rel (%p826) target = $region132
        $region131: #{_lambda_.1} parent=103 // pred_region
          %829 = dma.done [#allocation13], 128
        $region132: #{_lambda_.1} parent=103 // pred_fallthru
          _
        // Predicated region
        $region133: #{_lambda_.1} parent=103 // pred_check
          %p830 = pneg %p216
        $region134: #{_lambda_.1} parent=103 // pred_check_branch
          %832 = sbr.rel (%p830) target = $region136
        $region135: #{_lambda_.1} parent=103 // pred_region
          %833 = dma.done [#allocation16], 128
        $region136: #{_lambda_.1} parent=103 // pred_fallthru
          _
        // Predicated region
        $region137: #{_lambda_.1} parent=103 // pred_check
          %p834 = pneg %p237
        $region138: #{_lambda_.1} parent=103 // pred_check_branch
          %836 = sbr.rel (%p834) target = $region140
        $region139: #{_lambda_.1} parent=103 // pred_region
          %837 = dma.done [#allocation16], 768
        $region140: #{_lambda_.1} parent=103 // pred_fallthru
          _
        // Predicated region
        $region141: #{_lambda_.1} parent=103 // pred_check
          %p838 = pneg %p258
        $region142: #{_lambda_.1} parent=103 // pred_check_branch
          %840 = sbr.rel (%p838) target = $region144
        $region143: #{_lambda_.1} parent=103 // pred_region
          %841 = dma.done [#allocation19], 768
        $region144: #{_lambda_.1} parent=103 // pred_fallthru
          _
        // Predicated region
        $region145: #{_lambda_.1} parent=103 // pred_check
          %p842 = pneg %p279
        $region146: #{_lambda_.1} parent=103 // pred_check_branch
          %844 = sbr.rel (%p842) target = $region148
        $region147: #{_lambda_.1} parent=103 // pred_region
          %845 = dma.done [#allocation19], 768
        $region148: #{_lambda_.1} parent=103 // pred_fallthru
          _
        // Predicated region
        $region149: #{_lambda_.1} parent=103 // pred_check
          %p846 = pneg %p300
        $region150: #{_lambda_.1} parent=103 // pred_check_branch
          %848 = sbr.rel (%p846) target = $region152
        $region151: #{_lambda_.1} parent=103 // pred_region
          %849 = dma.done [#allocation22], 768
        $region152: #{_lambda_.1} parent=103 // pred_fallthru
          _
        // Predicated region
        $region153: #{_lambda_.1} parent=103 // pred_check
          %p850 = pneg %p321
        $region154: #{_lambda_.1} parent=103 // pred_check_branch
          %852 = sbr.rel (%p850) target = $region156
        $region155: #{_lambda_.1} parent=103 // pred_region
          %853 = dma.done [#allocation22], 512
        $region156: #{_lambda_.1} parent=103 // pred_fallthru
          _
        // Predicated region
        $region157: #{_lambda_.1} parent=103 // pred_check
          %p854 = pneg %p342
        $region158: #{_lambda_.1} parent=103 // pred_check_branch
          %856 = sbr.rel (%p854) target = $region160
        $region159: #{_lambda_.1} parent=103 // pred_region
          %857 = dma.done [#allocation25], 512
        $region160: #{_lambda_.1} parent=103 // pred_fallthru
          _
        // Predicated region
        $region161: #{_lambda_.1} parent=103 // pred_check
          %p858 = pneg %p363
        $region162: #{_lambda_.1} parent=103 // pred_check_branch
          %860 = sbr.rel (%p858) target = $region164
        $region163: #{_lambda_.1} parent=103 // pred_region
          %861 = dma.done [#allocation25], 512
        $region164: #{_lambda_.1} parent=103 // pred_fallthru
          _
        // Predicated region
        $region165: #{_lambda_.1} parent=103 // pred_check
          %p862 = pneg %p384
        $region166: #{_lambda_.1} parent=103 // pred_check_branch
          %864 = sbr.rel (%p862) target = $region168
        $region167: #{_lambda_.1} parent=103 // pred_region
          %865 = dma.done [#allocation28], 512
        $region168: #{_lambda_.1} parent=103 // pred_fallthru
          _
        // Predicated region
        $region169: #{_lambda_.1} parent=103 // pred_check
          %p866 = pneg %p405
        $region170: #{_lambda_.1} parent=103 // pred_check_branch
          %868 = sbr.rel (%p866) target = $region172
        $region171: #{_lambda_.1} parent=103 // pred_region
          %869 = dma.done [#allocation28], 384
        $region172: #{_lambda_.1} parent=103 // pred_fallthru
          _
        // Predicated region
        $region173: #{_lambda_.1} parent=103 // pred_check
          %p870 = pneg %p426
        $region174: #{_lambda_.1} parent=103 // pred_check_branch
          %872 = sbr.rel (%p870) target = $region176
        $region175: #{_lambda_.1} parent=103 // pred_region
          %873 = dma.done [#allocation31], 128
        $region176: #{_lambda_.1} parent=103 // pred_fallthru
          _
        // Predicated region
        $region177: #{_lambda_.1} parent=103 // pred_check
          %p874 = pneg %p447
        $region178: #{_lambda_.1} parent=103 // pred_check_branch
          %876 = sbr.rel (%p874) target = $region180
        $region179: #{_lambda_.1} parent=103 // pred_region
          %877 = dma.done [#allocation31], 128
        $region180: #{_lambda_.1} parent=103 // pred_fallthru
          _
        // Predicated region
        $region181: #{_lambda_.1} parent=103 // pred_check
          %p878 = pneg %p468
        $region182: #{_lambda_.1} parent=103 // pred_check_branch
          %880 = sbr.rel (%p878) target = $region184
        $region183: #{_lambda_.1} parent=103 // pred_region
          %881 = dma.done [#allocation34], 128
        $region184: #{_lambda_.1} parent=103 // pred_fallthru
          _
        // Predicated region
        $region185: #{_lambda_.1} parent=103 // pred_check
          %p882 = pneg %p489
        $region186: #{_lambda_.1} parent=103 // pred_check_branch
          %884 = sbr.rel (%p882) target = $region188
        $region187: #{_lambda_.1} parent=103 // pred_region
          %885 = dma.done [#allocation34], 128
        $region188: #{_lambda_.1} parent=103 // pred_fallthru
          _
        %s886 = sand.u32 %s56, 1
        %s887 = scalar_lea.sflag [#allocation4], %s886
        %s888 = sand.u32 %s56, 1
        %s889 = smul.addr %s888, 2
        %s890 = scalar_lea.vmem [#allocation3], %s889
        %p891 = pneg %p69
        %p892 = pneg %p66
        %p893 = pneg %p90
        %p894 = pneg %p87
        %p895 = pneg %p111
        %p896 = pneg %p108
        %p897 = pneg %p132
        %p898 = pneg %p129
        %p899 = pneg %p153
        %p900 = pneg %p150
        %p901 = pneg %p174
        %p902 = pneg %p171
        %p903 = pneg %p195
        %p904 = pneg %p192
        %p905 = pneg %p216
        %p906 = pneg %p213
        %p907 = pneg %p237
        %p908 = pneg %p234
        %p909 = pneg %p258
        %p910 = pneg %p255
        %p911 = pneg %p279
        %p912 = pneg %p276
        %p913 = pneg %p300
        %p914 = pneg %p297
        %p915 = pneg %p321
        %p916 = pneg %p318
        %p917 = pneg %p342
        %p918 = pneg %p339
        %p919 = pneg %p363
        %p920 = pneg %p360
        %p921 = pneg %p384
        %p922 = pneg %p381
        %p923 = pneg %p405
        %p924 = pneg %p402
        %p925 = pneg %p426
        %p926 = pneg %p423
        %p927 = pneg %p447
        %p928 = pneg %p444
        %p929 = pneg %p468
        %p930 = pneg %p465
        %p931 = pneg %p489
        %p932 = pneg %p486
        %p933 = pneg %p515
        %p934 = pneg %p512
        %s935 = sand.u32 %s502, 1
        %s936 = scalar_lea.sflag [#allocation5], %s935
        %s937 = sand.u32 %s502, 1
        %s938 = smul.addr %s937, 8
        %s939 = scalar_lea.vmem [#allocation36], %s938
        %v940 = vld [vmem:[#allocation6] sm:$0x1]
        %v941 = vld [vmem:[#allocation8] sm:$0x1]
        %vm942 = vcmp.ge.f32.partialorder %v941, 1.0
        %vm943 = vcmp.le.f32.partialorder %v941, 14.0
        %v944 = vmul.f32 %v941, 0.5
        %v945 = vfloor.f32 %v944
        %vm946 = vcmp.eq.f32.partialorder %v944, %v945
        %v947 = vld [vmem:[#allocation9] sm:$0xff]
        %v948 = vld [vmem:[%s801] sm:$0x3]
        %v949 = vld [vmem:[#allocation11] sm:$0xff]
        %951 = vset.pattern.permute.xlu0 0
        %952 = vperm.xlu0 %951, %v949
        %v953 = vpop.permute.xlu0 %952
        %vm955 = vcmask 15360
        %v957 = vsel %vm955, %v947, 0
        %vm959 = vcmask 1041408
        %v961 = vsel %vm959, %v948, 0
        %963 = vmatprep.subr.mxu0 0.0
        %964 = vmatpush1.msra.mxu0 %v961
        %965 = vmatprep.subr.mxu0 0.0
        %966 = vmatpush1.msra.mxu0 0.0
        %967 = vmatprep.subr.mxu0 0.0
        %968 = vmatpush1.msra.mxu0 0.0
        %969 = vmatprep.subr.mxu0 0.0
        %970 = vmatpush1.msra.mxu0 0.0
        %971 = vmatprep.subr.mxu0 0.0
        %972 = vmatpush1.msra.mxu0 0.0
        %973 = vmatprep.subr.mxu0 0.0
        %974 = vmatpush1.msra.mxu0 0.0
        %975 = vmatprep.subr.mxu0 0.0
        %976 = vmatpush1.msra.mxu0 0.0
        %977 = vmatprep.subr.mxu0 0.0
        %978 = vmatpush1.msra.mxu0 0.0
        %979 = vmatprep.subr.mxu0 0.0
        %980 = vmatpush1.msra.mxu0 0.0
        %981 = vmatprep.subr.mxu0 0.0
        %982 = vmatpush1.msra.mxu0 0.0
        %983 = vmatprep.subr.mxu0 0.0
        %984 = vmatpush1.msra.mxu0 0.0
        %985 = vmatprep.subr.mxu0 0.0
        %986 = vmatpush1.msra.mxu0 0.0
        %987 = vmatprep.subr.mxu0 0.0
        %988 = vmatpush1.msra.mxu0 0.0
        %989 = vmatprep.subr.mxu0 0.0
        %990 = vmatpush1.msra.mxu0 0.0
        %991 = vmatprep.subr.mxu0 0.0
        %992 = vmatpush1.msra.mxu0 0.0
        %993 = vmatprep.subr.mxu0 0.0
        %994 = vmatpush1.msra.mxu0 0.0
        %995 = vmatprep.subr.mxu0 0.0
        %996 = vmatpush1.msra.mxu0 0.0
        %997 = vmatprep.subr.mxu0 0.0
        %998 = vmatpush1.msra.mxu0 0.0
        %999 = vmatprep.subr.mxu0 0.0
        %1000 = vmatpush1.msra.mxu0 0.0
        %1001 = vmatprep.subr.mxu0 0.0
        %1002 = vmatpush1.msra.mxu0 0.0
        %1003 = vmatprep.subr.mxu0 0.0
        %1004 = vmatpush1.msra.mxu0 0.0
        %1005 = vmatprep.subr.mxu0 0.0
        %1006 = vmatpush1.msra.mxu0 0.0
        %1007 = vmatprep.subr.mxu0 0.0
        %1008 = vmatpush1.msra.mxu0 0.0
        %1009 = vmatprep.subr.mxu0 0.0
        %1010 = vmatpush1.msra.mxu0 0.0
        %1011 = vmatprep.subr.mxu0 0.0
        %1012 = vmatpush1.msra.mxu0 0.0
        %1013 = vmatprep.subr.mxu0 0.0
        %1014 = vmatpush1.msra.mxu0 0.0
        %1015 = vmatprep.subr.mxu0 0.0
        %1016 = vmatpush1.msra.mxu0 0.0
        %1017 = vmatprep.subr.mxu0 0.0
        %1018 = vmatpush1.msra.mxu0 0.0
        %1019 = vmatprep.subr.mxu0 0.0
        %1020 = vmatpush1.msra.mxu0 0.0
        %1021 = vmatprep.subr.mxu0 0.0
        %1022 = vmatpush1.msra.mxu0 0.0
        %1023 = vmatprep.subr.mxu0 0.0
        %1024 = vmatpush1.msra.mxu0 0.0
        %1025 = vmatprep.subr.mxu0 0.0
        %1026 = vmatpush1.msra.mxu0 0.0
        %1027 = vmatprep.mubr.f32.mxu0 0.0
        %1028 = vmatmul.mubr.f32.gmra.mrb[0].mxu0 %v957
        %v1029 = vpop.f32.mrb[0].mxu0
        %v1030 = vadd.f32 %v953, %v1029
        %v1031 = vpop.f32.mrb[0].mxu0
        %1032 = vdwg.mxu0
        %v1033 = vld [vmem:[#allocation12] sm:$0xff]
        %v1034 = vld [vmem:[#allocation14] sm:$0xff]
        %v1035 = vld [vmem:[#allocation15] sm:$0xff]
        %1036 = vadd.xlane.f32.xlu0 %v1030
        %v1037 = vpop.xlane.xlu0 %1036
        %v1038 = vmul.f32 %v1037, 0.0078125
        %v1039 = vmul.f32 %v1030, %v1030
        %1040 = vadd.xlane.f32.xlu0 %v1039
        %v1041 = vpop.xlane.xlu0 %1040
        %v1042 = vmul.f32 %v1041, 0.0078125
        %v1043 = vmul.f32 %v1038, %v1038
        %v1044 = vsub.f32 %v1042, %v1043
        %v1045 = vmax.f32 %v1044, 0.0
        %v1046 = vsub.f32 %v1030, %v1038
        %v1047 = vadd.f32 %v1045, 1e-05
        %v1048 = vrsqrt.pop %v1047
        %v1049 = vmul.f32 %v1046, %v1048
        %1051 = vset.pattern.permute.xlu0 0
        %1052 = vperm.xlu0 %1051, %v1033
        %v1053 = vpop.permute.xlu0 %1052
        %v1055 = vmul.f32 %v1049, %v1053
        %1057 = vset.pattern.permute.xlu0 0
        %1058 = vperm.xlu0 %1057, %v1034
        %v1059 = vpop.permute.xlu0 %1058
        %v1061 = vadd.f32 %v1055, %v1059
        %vm1062 = vcmp.ge.f32.partialorder %v1061, 0.0
        %1064 = vset.pattern.permute.xlu0 0
        %1065 = vperm.xlu0 %1064, %v1035
        %v1066 = vpop.permute.xlu0 %1065
        %v1068 = vmul.f32 %v1066, %v1061
        %v1069 = vsel %vm1062, %v1061, %v1068
        %s1070 = scalar_lea.vmem [#allocation2], 24
        %1071 = vst [vmem:[%s1070] sm:$0xff] %v1069
        %v1072 = vld [vmem:[%s1070] sm:$0xff]
        %vm1073 = vcmp.ge.f32.partialorder %v940, 1.0
        %vm1074 = vmand %vm1073, %vm942
        %vm1075 = vmand %vm1073, %vm943
        %1076 = vrot.lane.b32.xlu0 %v1072, 17
        %v1077 = vpop.permute.xlu0 %1076
        %v1078 = vsel %vm1074, 1, 0
        %v1079 = vlaneseq
        %v1080 = vshrl.u32 %v1079, 7
        %v1081 = vsub.s32 0, %v1080
        %v1082 = vrot.slane %v1078, %v1081
        %vm1083 = vcmp.eq.s32.totalorder %v1082, 1
        %v1084 = vsel %vm1083, %v1077, 0.0
        %v1085 = vld [vmem:[#allocation17] sm:$0xff]
        %1086 = vrot.lane.b32.xlu0 %v1072, 16
        %v1087 = vpop.permute.xlu0 %1086
        %v1088 = vsel %vm1073, 1, 0
        %v1089 = vlaneseq
        %v1090 = vshrl.u32 %v1089, 7
        %v1091 = vsub.s32 0, %v1090
        %v1092 = vrot.slane %v1088, %v1091
        %vm1093 = vcmp.eq.s32.totalorder %v1092, 1
        %v1094 = vsel %vm1093, %v1087, 0.0
        %s1095 = scalar_lea.vmem [#allocation17], 8
        %v1096 = vld [vmem:[%s1095] sm:$0xff]
        %vm1097 = vcmask 64512
        %v1099 = vsel %vm1097, %v1096, 0
        %1101 = vmatprep.subr.mxu0 0.0
        %1102 = vmatpush1.msra.mxu0 %v1094
        %1103 = vmatprep.subr.mxu0 0.0
        %1104 = vmatpush1.msra.mxu0 0.0
        %1105 = vmatprep.subr.mxu0 0.0
        %1106 = vmatpush1.msra.mxu0 0.0
        %1107 = vmatprep.subr.mxu0 0.0
        %1108 = vmatpush1.msra.mxu0 0.0
        %1109 = vmatprep.subr.mxu0 0.0
        %1110 = vmatpush1.msra.mxu0 0.0
        %1111 = vmatprep.subr.mxu0 0.0
        %1112 = vmatpush1.msra.mxu0 0.0
        %1113 = vmatprep.subr.mxu0 0.0
        %1114 = vmatpush1.msra.mxu0 0.0
        %1115 = vmatprep.subr.mxu0 0.0
        %1116 = vmatpush1.msra.mxu0 0.0
        %1117 = vmatprep.subr.mxu0 0.0
        %1118 = vmatpush1.msra.mxu0 0.0
        %1119 = vmatprep.subr.mxu0 0.0
        %1120 = vmatpush1.msra.mxu0 0.0
        %1121 = vmatprep.subr.mxu0 0.0
        %1122 = vmatpush1.msra.mxu0 0.0
        %1123 = vmatprep.subr.mxu0 0.0
        %1124 = vmatpush1.msra.mxu0 0.0
        %1125 = vmatprep.subr.mxu0 0.0
        %1126 = vmatpush1.msra.mxu0 0.0
        %1127 = vmatprep.subr.mxu0 0.0
        %1128 = vmatpush1.msra.mxu0 0.0
        %1129 = vmatprep.subr.mxu0 0.0
        %1130 = vmatpush1.msra.mxu0 0.0
        %1131 = vmatprep.subr.mxu0 0.0
        %1132 = vmatpush1.msra.mxu0 0.0
        %1133 = vmatprep.subr.mxu0 0.0
        %1134 = vmatpush1.msra.mxu0 0.0
        %1135 = vmatprep.subr.mxu0 0.0
        %1136 = vmatpush1.msra.mxu0 0.0
        %1137 = vmatprep.subr.mxu0 0.0
        %1138 = vmatpush1.msra.mxu0 0.0
        %1139 = vmatprep.subr.mxu0 0.0
        %1140 = vmatpush1.msra.mxu0 0.0
        %1141 = vmatprep.subr.mxu0 0.0
        %1142 = vmatpush1.msra.mxu0 0.0
        %1143 = vmatprep.subr.mxu0 0.0
        %1144 = vmatpush1.msra.mxu0 0.0
        %1145 = vmatprep.subr.mxu0 0.0
        %1146 = vmatpush1.msra.mxu0 0.0
        %1147 = vmatprep.subr.mxu0 0.0
        %1148 = vmatpush1.msra.mxu0 0.0
        %1149 = vmatprep.subr.mxu0 0.0
        %1150 = vmatpush1.msra.mxu0 0.0
        %1151 = vmatprep.subr.mxu0 0.0
        %1152 = vmatpush1.msra.mxu0 0.0
        %1153 = vmatprep.subr.mxu0 0.0
        %1154 = vmatpush1.msra.mxu0 0.0
        %1155 = vmatprep.subr.mxu0 0.0
        %1156 = vmatpush1.msra.mxu0 0.0
        %1157 = vmatprep.subr.mxu0 0.0
        %1158 = vmatpush1.msra.mxu0 0.0
        %1159 = vmatprep.subr.mxu0 0.0
        %1160 = vmatpush1.msra.mxu0 0.0
        %1161 = vmatprep.subr.mxu0 0.0
        %1162 = vmatpush1.msra.mxu0 0.0
        %1163 = vmatprep.subr.mxu0 0.0
        %1164 = vmatpush1.msra.mxu0 0.0
        %1165 = vmatprep.mubr.f32.mxu0 0.0
        %1166 = vmatmul.mubr.f32.gmra.mrb[0].mxu0 %v1099
        %v1167 = vpop.f32.mrb[0].mxu0
        %v1168 = vadd.f32 0.0, %v1167
        %v1169 = vpop.f32.mrb[0].mxu0
        %1170 = vdwg.mxu0
        %v1172 = vsel %vm1097, %v1085, 0
        %1174 = vmatprep.subr.mxu0 0.0
        %1175 = vmatpush1.msra.mxu0 %v1084
        %1176 = vmatprep.subr.mxu0 0.0
        %1177 = vmatpush1.msra.mxu0 0.0
        %1178 = vmatprep.subr.mxu0 0.0
        %1179 = vmatpush1.msra.mxu0 0.0
        %1180 = vmatprep.subr.mxu0 0.0
        %1181 = vmatpush1.msra.mxu0 0.0
        %1182 = vmatprep.subr.mxu0 0.0
        %1183 = vmatpush1.msra.mxu0 0.0
        %1184 = vmatprep.subr.mxu0 0.0
        %1185 = vmatpush1.msra.mxu0 0.0
        %1186 = vmatprep.subr.mxu0 0.0
        %1187 = vmatpush1.msra.mxu0 0.0
        %1188 = vmatprep.subr.mxu0 0.0
        %1189 = vmatpush1.msra.mxu0 0.0
        %1190 = vmatprep.subr.mxu0 0.0
        %1191 = vmatpush1.msra.mxu0 0.0
        %1192 = vmatprep.subr.mxu0 0.0
        %1193 = vmatpush1.msra.mxu0 0.0
        %1194 = vmatprep.subr.mxu0 0.0
        %1195 = vmatpush1.msra.mxu0 0.0
        %1196 = vmatprep.subr.mxu0 0.0
        %1197 = vmatpush1.msra.mxu0 0.0
        %1198 = vmatprep.subr.mxu0 0.0
        %1199 = vmatpush1.msra.mxu0 0.0
        %1200 = vmatprep.subr.mxu0 0.0
        %1201 = vmatpush1.msra.mxu0 0.0
        %1202 = vmatprep.subr.mxu0 0.0
        %1203 = vmatpush1.msra.mxu0 0.0
        %1204 = vmatprep.subr.mxu0 0.0
        %1205 = vmatpush1.msra.mxu0 0.0
        %1206 = vmatprep.subr.mxu0 0.0
        %1207 = vmatpush1.msra.mxu0 0.0
        %1208 = vmatprep.subr.mxu0 0.0
        %1209 = vmatpush1.msra.mxu0 0.0
        %1210 = vmatprep.subr.mxu0 0.0
        %1211 = vmatpush1.msra.mxu0 0.0
        %1212 = vmatprep.subr.mxu0 0.0
        %1213 = vmatpush1.msra.mxu0 0.0
        %1214 = vmatprep.subr.mxu0 0.0
        %1215 = vmatpush1.msra.mxu0 0.0
        %1216 = vmatprep.subr.mxu0 0.0
        %1217 = vmatpush1.msra.mxu0 0.0
        %1218 = vmatprep.subr.mxu0 0.0
        %1219 = vmatpush1.msra.mxu0 0.0
        %1220 = vmatprep.subr.mxu0 0.0
        %1221 = vmatpush1.msra.mxu0 0.0
        %1222 = vmatprep.subr.mxu0 0.0
        %1223 = vmatpush1.msra.mxu0 0.0
        %1224 = vmatprep.subr.mxu0 0.0
        %1225 = vmatpush1.msra.mxu0 0.0
        %1226 = vmatprep.subr.mxu0 0.0
        %1227 = vmatpush1.msra.mxu0 0.0
        %1228 = vmatprep.subr.mxu0 0.0
        %1229 = vmatpush1.msra.mxu0 0.0
        %1230 = vmatprep.subr.mxu0 0.0
        %1231 = vmatpush1.msra.mxu0 0.0
        %1232 = vmatprep.subr.mxu0 0.0
        %1233 = vmatpush1.msra.mxu0 0.0
        %1234 = vmatprep.subr.mxu0 0.0
        %1235 = vmatpush1.msra.mxu0 0.0
        %1236 = vmatprep.subr.mxu0 0.0
        %1237 = vmatpush1.msra.mxu0 0.0
        %1238 = vmatprep.mubr.f32.mxu0 0.0
        %1239 = vmatmul.mubr.f32.gmra.mrb[0].mxu0 %v1172
        %v1240 = vpop.f32.mrb[0].mxu0
        %v1241 = vadd.f32 %v1168, %v1240
        %v1242 = vpop.f32.mrb[0].mxu0
        %1243 = vdwg.mxu0
        %1244 = vrot.lane.b32.xlu0 %v1072, 15
        %v1245 = vpop.permute.xlu0 %1244
        %v1246 = vsel %vm1075, 1, 0
        %v1247 = vlaneseq
        %v1248 = vshrl.u32 %v1247, 7
        %v1249 = vsub.s32 0, %v1248
        %v1250 = vrot.slane %v1246, %v1249
        %vm1251 = vcmp.eq.s32.totalorder %v1250, 1
        %v1252 = vsel %vm1251, %v1245, 0.0
        %s1253 = scalar_lea.vmem [#allocation17], 16
        %v1254 = vld [vmem:[%s1253] sm:$0xff]
        %v1256 = vsel %vm1097, %v1254, 0
        %1258 = vmatprep.subr.mxu0 0.0
        %1259 = vmatpush1.msra.mxu0 %v1252
        %1260 = vmatprep.subr.mxu0 0.0
        %1261 = vmatpush1.msra.mxu0 0.0
        %1262 = vmatprep.subr.mxu0 0.0
        %1263 = vmatpush1.msra.mxu0 0.0
        %1264 = vmatprep.subr.mxu0 0.0
        %1265 = vmatpush1.msra.mxu0 0.0
        %1266 = vmatprep.subr.mxu0 0.0
        %1267 = vmatpush1.msra.mxu0 0.0
        %1268 = vmatprep.subr.mxu0 0.0
        %1269 = vmatpush1.msra.mxu0 0.0
        %1270 = vmatprep.subr.mxu0 0.0
        %1271 = vmatpush1.msra.mxu0 0.0
        %1272 = vmatprep.subr.mxu0 0.0
        %1273 = vmatpush1.msra.mxu0 0.0
        %1274 = vmatprep.subr.mxu0 0.0
        %1275 = vmatpush1.msra.mxu0 0.0
        %1276 = vmatprep.subr.mxu0 0.0
        %1277 = vmatpush1.msra.mxu0 0.0
        %1278 = vmatprep.subr.mxu0 0.0
        %1279 = vmatpush1.msra.mxu0 0.0
        %1280 = vmatprep.subr.mxu0 0.0
        %1281 = vmatpush1.msra.mxu0 0.0
        %1282 = vmatprep.subr.mxu0 0.0
        %1283 = vmatpush1.msra.mxu0 0.0
        %1284 = vmatprep.subr.mxu0 0.0
        %1285 = vmatpush1.msra.mxu0 0.0
        %1286 = vmatprep.subr.mxu0 0.0
        %1287 = vmatpush1.msra.mxu0 0.0
        %1288 = vmatprep.subr.mxu0 0.0
        %1289 = vmatpush1.msra.mxu0 0.0
        %1290 = vmatprep.subr.mxu0 0.0
        %1291 = vmatpush1.msra.mxu0 0.0
        %1292 = vmatprep.subr.mxu0 0.0
        %1293 = vmatpush1.msra.mxu0 0.0
        %1294 = vmatprep.subr.mxu0 0.0
        %1295 = vmatpush1.msra.mxu0 0.0
        %1296 = vmatprep.subr.mxu0 0.0
        %1297 = vmatpush1.msra.mxu0 0.0
        %1298 = vmatprep.subr.mxu0 0.0
        %1299 = vmatpush1.msra.mxu0 0.0
        %1300 = vmatprep.subr.mxu0 0.0
        %1301 = vmatpush1.msra.mxu0 0.0
        %1302 = vmatprep.subr.mxu0 0.0
        %1303 = vmatpush1.msra.mxu0 0.0
        %1304 = vmatprep.subr.mxu0 0.0
        %1305 = vmatpush1.msra.mxu0 0.0
        %1306 = vmatprep.subr.mxu0 0.0
        %1307 = vmatpush1.msra.mxu0 0.0
        %1308 = vmatprep.subr.mxu0 0.0
        %1309 = vmatpush1.msra.mxu0 0.0
        %1310 = vmatprep.subr.mxu0 0.0
        %1311 = vmatpush1.msra.mxu0 0.0
        %1312 = vmatprep.subr.mxu0 0.0
        %1313 = vmatpush1.msra.mxu0 0.0
        %1314 = vmatprep.subr.mxu0 0.0
        %1315 = vmatpush1.msra.mxu0 0.0
        %1316 = vmatprep.subr.mxu0 0.0
        %1317 = vmatpush1.msra.mxu0 0.0
        %1318 = vmatprep.subr.mxu0 0.0
        %1319 = vmatpush1.msra.mxu0 0.0
        %1320 = vmatprep.subr.mxu0 0.0
        %1321 = vmatpush1.msra.mxu0 0.0
        %1322 = vmatprep.mubr.f32.mxu0 0.0
        %1323 = vmatmul.mubr.f32.gmra.mrb[0].mxu0 %v1256
        %v1324 = vpop.f32.mrb[0].mxu0
        %v1325 = vadd.f32 0.0, %v1324
        %v1326 = vpop.f32.mrb[0].mxu0
        %1327 = vdwg.mxu0
        %v1328 = vadd.f32 %v1241, %v1325
        %1329 = vrot.lane.b32.xlu0 %v1072, 1
        %v1330 = vpop.permute.xlu0 %1329
        %v1331 = vsel %vm942, 1, 0
        %v1332 = vlaneseq
        %v1333 = vshrl.u32 %v1332, 7
        %v1334 = vsub.s32 0, %v1333
        %v1335 = vrot.slane %v1331, %v1334
        %vm1336 = vcmp.eq.s32.totalorder %v1335, 1
        %v1337 = vsel %vm1336, %v1330, 0.0
        %s1338 = scalar_lea.vmem [#allocation17], 24
        %v1339 = vld [vmem:[%s1338] sm:$0xff]
        %v1341 = vsel %vm1097, %v1339, 0
        %1343 = vmatprep.subr.mxu0 0.0
        %1344 = vmatpush1.msra.mxu0 %v1337
        %1345 = vmatprep.subr.mxu0 0.0
        %1346 = vmatpush1.msra.mxu0 0.0
        %1347 = vmatprep.subr.mxu0 0.0
        %1348 = vmatpush1.msra.mxu0 0.0
        %1349 = vmatprep.subr.mxu0 0.0
        %1350 = vmatpush1.msra.mxu0 0.0
        %1351 = vmatprep.subr.mxu0 0.0
        %1352 = vmatpush1.msra.mxu0 0.0
        %1353 = vmatprep.subr.mxu0 0.0
        %1354 = vmatpush1.msra.mxu0 0.0
        %1355 = vmatprep.subr.mxu0 0.0
        %1356 = vmatpush1.msra.mxu0 0.0
        %1357 = vmatprep.subr.mxu0 0.0
        %1358 = vmatpush1.msra.mxu0 0.0
        %1359 = vmatprep.subr.mxu0 0.0
        %1360 = vmatpush1.msra.mxu0 0.0
        %1361 = vmatprep.subr.mxu0 0.0
        %1362 = vmatpush1.msra.mxu0 0.0
        %1363 = vmatprep.subr.mxu0 0.0
        %1364 = vmatpush1.msra.mxu0 0.0
        %1365 = vmatprep.subr.mxu0 0.0
        %1366 = vmatpush1.msra.mxu0 0.0
        %1367 = vmatprep.subr.mxu0 0.0
        %1368 = vmatpush1.msra.mxu0 0.0
        %1369 = vmatprep.subr.mxu0 0.0
        %1370 = vmatpush1.msra.mxu0 0.0
        %1371 = vmatprep.subr.mxu0 0.0
        %1372 = vmatpush1.msra.mxu0 0.0
        %1373 = vmatprep.subr.mxu0 0.0
        %1374 = vmatpush1.msra.mxu0 0.0
        %1375 = vmatprep.subr.mxu0 0.0
        %1376 = vmatpush1.msra.mxu0 0.0
        %1377 = vmatprep.subr.mxu0 0.0
        %1378 = vmatpush1.msra.mxu0 0.0
        %1379 = vmatprep.subr.mxu0 0.0
        %1380 = vmatpush1.msra.mxu0 0.0
        %1381 = vmatprep.subr.mxu0 0.0
        %1382 = vmatpush1.msra.mxu0 0.0
        %1383 = vmatprep.subr.mxu0 0.0
        %1384 = vmatpush1.msra.mxu0 0.0
        %1385 = vmatprep.subr.mxu0 0.0
        %1386 = vmatpush1.msra.mxu0 0.0
        %1387 = vmatprep.subr.mxu0 0.0
        %1388 = vmatpush1.msra.mxu0 0.0
        %1389 = vmatprep.subr.mxu0 0.0
        %1390 = vmatpush1.msra.mxu0 0.0
        %1391 = vmatprep.subr.mxu0 0.0
        %1392 = vmatpush1.msra.mxu0 0.0
        %1393 = vmatprep.subr.mxu0 0.0
        %1394 = vmatpush1.msra.mxu0 0.0
        %1395 = vmatprep.subr.mxu0 0.0
        %1396 = vmatpush1.msra.mxu0 0.0
        %1397 = vmatprep.subr.mxu0 0.0
        %1398 = vmatpush1.msra.mxu0 0.0
        %1399 = vmatprep.subr.mxu0 0.0
        %1400 = vmatpush1.msra.mxu0 0.0
        %1401 = vmatprep.subr.mxu0 0.0
        %1402 = vmatpush1.msra.mxu0 0.0
        %1403 = vmatprep.subr.mxu0 0.0
        %1404 = vmatpush1.msra.mxu0 0.0
        %1405 = vmatprep.subr.mxu0 0.0
        %1406 = vmatpush1.msra.mxu0 0.0
        %1407 = vmatprep.mubr.f32.mxu0 0.0
        %1408 = vmatmul.mubr.f32.gmra.mrb[0].mxu0 %v1341
        %v1409 = vpop.f32.mrb[0].mxu0
        %v1410 = vadd.f32 0.0, %v1409
        %v1411 = vpop.f32.mrb[0].mxu0
        %1412 = vdwg.mxu0
        %v1413 = vadd.f32 %v1328, %v1410
        %s1414 = scalar_lea.vmem [#allocation17], 32
        %v1415 = vld [vmem:[%s1414] sm:$0xff]
        %v1417 = vsel %vm1097, %v1415, 0
        %1419 = vmatprep.subr.mxu0 0.0
        %1420 = vmatpush1.msra.mxu0 %v1072
        %1421 = vmatprep.subr.mxu0 0.0
        %1422 = vmatpush1.msra.mxu0 0.0
        %1423 = vmatprep.subr.mxu0 0.0
        %1424 = vmatpush1.msra.mxu0 0.0
        %1425 = vmatprep.subr.mxu0 0.0
        %1426 = vmatpush1.msra.mxu0 0.0
        %1427 = vmatprep.subr.mxu0 0.0
        %1428 = vmatpush1.msra.mxu0 0.0
        %1429 = vmatprep.subr.mxu0 0.0
        %1430 = vmatpush1.msra.mxu0 0.0
        %1431 = vmatprep.subr.mxu0 0.0
        %1432 = vmatpush1.msra.mxu0 0.0
        %1433 = vmatprep.subr.mxu0 0.0
        %1434 = vmatpush1.msra.mxu0 0.0
        %1435 = vmatprep.subr.mxu0 0.0
        %1436 = vmatpush1.msra.mxu0 0.0
        %1437 = vmatprep.subr.mxu0 0.0
        %1438 = vmatpush1.msra.mxu0 0.0
        %1439 = vmatprep.subr.mxu0 0.0
        %1440 = vmatpush1.msra.mxu0 0.0
        %1441 = vmatprep.subr.mxu0 0.0
        %1442 = vmatpush1.msra.mxu0 0.0
        %1443 = vmatprep.subr.mxu0 0.0
        %1444 = vmatpush1.msra.mxu0 0.0
        %1445 = vmatprep.subr.mxu0 0.0
        %1446 = vmatpush1.msra.mxu0 0.0
        %1447 = vmatprep.subr.mxu0 0.0
        %1448 = vmatpush1.msra.mxu0 0.0
        %1449 = vmatprep.subr.mxu0 0.0
        %1450 = vmatpush1.msra.mxu0 0.0
        %1451 = vmatprep.subr.mxu0 0.0
        %1452 = vmatpush1.msra.mxu0 0.0
        %1453 = vmatprep.subr.mxu0 0.0
        %1454 = vmatpush1.msra.mxu0 0.0
        %1455 = vmatprep.subr.mxu0 0.0
        %1456 = vmatpush1.msra.mxu0 0.0
        %1457 = vmatprep.subr.mxu0 0.0
        %1458 = vmatpush1.msra.mxu0 0.0
        %1459 = vmatprep.subr.mxu0 0.0
        %1460 = vmatpush1.msra.mxu0 0.0
        %1461 = vmatprep.subr.mxu0 0.0
        %1462 = vmatpush1.msra.mxu0 0.0
        %1463 = vmatprep.subr.mxu0 0.0
        %1464 = vmatpush1.msra.mxu0 0.0
        %1465 = vmatprep.subr.mxu0 0.0
        %1466 = vmatpush1.msra.mxu0 0.0
        %1467 = vmatprep.subr.mxu0 0.0
        %1468 = vmatpush1.msra.mxu0 0.0
        %1469 = vmatprep.subr.mxu0 0.0
        %1470 = vmatpush1.msra.mxu0 0.0
        %1471 = vmatprep.subr.mxu0 0.0
        %1472 = vmatpush1.msra.mxu0 0.0
        %1473 = vmatprep.subr.mxu0 0.0
        %1474 = vmatpush1.msra.mxu0 0.0
        %1475 = vmatprep.subr.mxu0 0.0
        %1476 = vmatpush1.msra.mxu0 0.0
        %1477 = vmatprep.subr.mxu0 0.0
        %1478 = vmatpush1.msra.mxu0 0.0
        %1479 = vmatprep.subr.mxu0 0.0
        %1480 = vmatpush1.msra.mxu0 0.0
        %1481 = vmatprep.subr.mxu0 0.0
        %1482 = vmatpush1.msra.mxu0 0.0
        %1483 = vmatprep.mubr.f32.mxu0 0.0
        %1484 = vmatmul.mubr.f32.gmra.mrb[0].mxu0 %v1417
        %v1485 = vpop.f32.mrb[0].mxu0
        %v1486 = vadd.f32 0.0, %v1485
        %v1487 = vpop.f32.mrb[0].mxu0
        %1488 = vdwg.mxu0
        %v1489 = vadd.f32 %v1413, %v1486
        %1490 = vrot.lane.b32.xlu0 %v1072, 127
        %v1491 = vpop.permute.xlu0 %1490
        %v1492 = vsel %vm943, 1, 0
        %v1493 = vlaneseq
        %v1494 = vshrl.u32 %v1493, 7
        %v1495 = vsub.s32 0, %v1494
        %v1496 = vrot.slane %v1492, %v1495
        %vm1497 = vcmp.eq.s32.totalorder %v1496, 1
        %v1498 = vsel %vm1497, %v1491, 0.0
        %s1499 = scalar_lea.vmem [#allocation17], 40
        %v1500 = vld [vmem:[%s1499] sm:$0xff]
        %v1502 = vsel %vm1097, %v1500, 0
        %1504 = vmatprep.subr.mxu0 0.0
        %1505 = vmatpush1.msra.mxu0 %v1498
        %1506 = vmatprep.subr.mxu0 0.0
        %1507 = vmatpush1.msra.mxu0 0.0
        %1508 = vmatprep.subr.mxu0 0.0
        %1509 = vmatpush1.msra.mxu0 0.0
        %1510 = vmatprep.subr.mxu0 0.0
        %1511 = vmatpush1.msra.mxu0 0.0
        %1512 = vmatprep.subr.mxu0 0.0
        %1513 = vmatpush1.msra.mxu0 0.0
        %1514 = vmatprep.subr.mxu0 0.0
        %1515 = vmatpush1.msra.mxu0 0.0
        %1516 = vmatprep.subr.mxu0 0.0
        %1517 = vmatpush1.msra.mxu0 0.0
        %1518 = vmatprep.subr.mxu0 0.0
        %1519 = vmatpush1.msra.mxu0 0.0
        %1520 = vmatprep.subr.mxu0 0.0
        %1521 = vmatpush1.msra.mxu0 0.0
        %1522 = vmatprep.subr.mxu0 0.0
        %1523 = vmatpush1.msra.mxu0 0.0
        %1524 = vmatprep.subr.mxu0 0.0
        %1525 = vmatpush1.msra.mxu0 0.0
        %1526 = vmatprep.subr.mxu0 0.0
        %1527 = vmatpush1.msra.mxu0 0.0
        %1528 = vmatprep.subr.mxu0 0.0
        %1529 = vmatpush1.msra.mxu0 0.0
        %1530 = vmatprep.subr.mxu0 0.0
        %1531 = vmatpush1.msra.mxu0 0.0
        %1532 = vmatprep.subr.mxu0 0.0
        %1533 = vmatpush1.msra.mxu0 0.0
        %1534 = vmatprep.subr.mxu0 0.0
        %1535 = vmatpush1.msra.mxu0 0.0
        %1536 = vmatprep.subr.mxu0 0.0
        %1537 = vmatpush1.msra.mxu0 0.0
        %1538 = vmatprep.subr.mxu0 0.0
        %1539 = vmatpush1.msra.mxu0 0.0
        %1540 = vmatprep.subr.mxu0 0.0
        %1541 = vmatpush1.msra.mxu0 0.0
        %1542 = vmatprep.subr.mxu0 0.0
        %1543 = vmatpush1.msra.mxu0 0.0
        %1544 = vmatprep.subr.mxu0 0.0
        %1545 = vmatpush1.msra.mxu0 0.0
        %1546 = vmatprep.subr.mxu0 0.0
        %1547 = vmatpush1.msra.mxu0 0.0
        %1548 = vmatprep.subr.mxu0 0.0
        %1549 = vmatpush1.msra.mxu0 0.0
        %1550 = vmatprep.subr.mxu0 0.0
        %1551 = vmatpush1.msra.mxu0 0.0
        %1552 = vmatprep.subr.mxu0 0.0
        %1553 = vmatpush1.msra.mxu0 0.0
        %1554 = vmatprep.subr.mxu0 0.0
        %1555 = vmatpush1.msra.mxu0 0.0
        %1556 = vmatprep.subr.mxu0 0.0
        %1557 = vmatpush1.msra.mxu0 0.0
        %1558 = vmatprep.subr.mxu0 0.0
        %1559 = vmatpush1.msra.mxu0 0.0
        %1560 = vmatprep.subr.mxu0 0.0
        %1561 = vmatpush1.msra.mxu0 0.0
        %1562 = vmatprep.subr.mxu0 0.0
        %1563 = vmatpush1.msra.mxu0 0.0
        %1564 = vmatprep.subr.mxu0 0.0
        %1565 = vmatpush1.msra.mxu0 0.0
        %1566 = vmatprep.subr.mxu0 0.0
        %1567 = vmatpush1.msra.mxu0 0.0
        %1568 = vmatprep.mubr.f32.mxu0 0.0
        %1569 = vmatmul.mubr.f32.gmra.mrb[0].mxu0 %v1502
        %v1570 = vpop.f32.mrb[0].mxu0
        %v1571 = vadd.f32 0.0, %v1570
        %v1572 = vpop.f32.mrb[0].mxu0
        %1573 = vdwg.mxu0
        %v1574 = vadd.f32 %v1489, %v1571
        %v1575 = vld [vmem:[#allocation23] sm:$0xff]
        %1577 = vset.pattern.permute.xlu0 0
        %1578 = vperm.xlu0 %1577, %v1575
        %v1579 = vpop.permute.xlu0 %1578
        %v1581 = vadd.f32 %v1574, %v1579
        %v1582 = vld [vmem:[#allocation24] sm:$0xff]
        %v1583 = vld [vmem:[#allocation26] sm:$0xff]
        %v1584 = vld [vmem:[#allocation27] sm:$0xff]
        %1585 = vadd.xlane.f32.xlu0 %v1581
        %v1586 = vpop.xlane.xlu0 %1585
        %v1587 = vmul.f32 %v1586, 0.0078125
        %v1588 = vmul.f32 %v1581, %v1581
        %1589 = vadd.xlane.f32.xlu0 %v1588
        %v1590 = vpop.xlane.xlu0 %1589
        %v1591 = vmul.f32 %v1590, 0.0078125
        %v1592 = vmul.f32 %v1587, %v1587
        %v1593 = vsub.f32 %v1591, %v1592
        %v1594 = vmax.f32 %v1593, 0.0
        %v1595 = vsub.f32 %v1581, %v1587
        %v1596 = vadd.f32 %v1594, 1e-05
        %v1597 = vrsqrt.pop %v1596
        %v1598 = vmul.f32 %v1595, %v1597
        %1600 = vset.pattern.permute.xlu0 0
        %1601 = vperm.xlu0 %1600, %v1582
        %v1602 = vpop.permute.xlu0 %1601
        %v1604 = vmul.f32 %v1598, %v1602
        %1606 = vset.pattern.permute.xlu0 0
        %1607 = vperm.xlu0 %1606, %v1583
        %v1608 = vpop.permute.xlu0 %1607
        %v1610 = vadd.f32 %v1604, %v1608
        %vm1611 = vcmp.ge.f32.partialorder %v1610, 0.0
        %1613 = vset.pattern.permute.xlu0 0
        %1614 = vperm.xlu0 %1613, %v1584
        %v1615 = vpop.permute.xlu0 %1614
        %v1617 = vmul.f32 %v1615, %v1610
        %v1618 = vsel %vm1611, %v1610, %v1617
        %s1619 = scalar_lea.vmem [#allocation2], 16
        %1620 = vst [vmem:[%s1619] sm:$0xff] %v1618
        %v1621 = vld [vmem:[%s1619] sm:$0xff]
        %v1622 = vld [vmem:[%s1619 + $0x8] sm:$0xff]
        %vm1623 = vcmp.ge.f32.partialorder %v940, 2.0
        %vm1624 = vmand %vm1623, %vm942
        %vm1625 = vmand %vm1623, %vm943
        %1626 = vrot.lane.b32.xlu0 %v1621, 33
        %v1627 = vpop.permute.xlu0 %1626
        %1628 = vrot.lane.b32.xlu0 %v1622, 33
        %v1629 = vpop.permute.xlu0 %1628
        %v1630 = vsel %vm1624, 1, 0
        %v1631 = vlaneseq
        %v1632 = vshrl.u32 %v1631, 7
        %v1633 = vsub.s32 0, %v1632
        %v1634 = vrot.slane %v1630, %v1633
        %vm1635 = vcmp.eq.s32.totalorder %v1634, 1
        %v1636 = vsel %vm1635, %v1627, 0.0
        %v1637 = vsel %vm1635, %v1629, 0.0
        %v1638 = vld [vmem:[#allocation18] sm:$0xff]
        %1639 = vrot.lane.b32.xlu0 %v1621, 32
        %v1640 = vpop.permute.xlu0 %1639
        %1641 = vrot.lane.b32.xlu0 %v1622, 32
        %v1642 = vpop.permute.xlu0 %1641
        %v1643 = vsel %vm1623, 1, 0
        %v1644 = vlaneseq
        %v1645 = vshrl.u32 %v1644, 7
        %v1646 = vsub.s32 0, %v1645
        %v1647 = vrot.slane %v1643, %v1646
        %vm1648 = vcmp.eq.s32.totalorder %v1647, 1
        %v1649 = vsel %vm1648, %v1640, 0.0
        %v1650 = vsel %vm1648, %v1642, 0.0
        %s1651 = scalar_lea.vmem [#allocation18], 8
        %v1652 = vld [vmem:[%s1651] sm:$0xff]
        %vm1653 = vcmask 130048
        %v1655 = vsel %vm1653, %v1652, 0
        %1657 = vmatprep.subr.mxu0 0.0
        %1658 = vmatpush1.msra.mxu0 %v1649
        %1659 = vmatprep.subr.mxu0 0.0
        %1660 = vmatpush1.msra.mxu0 %v1650
        %1661 = vmatprep.subr.mxu0 0.0
        %1662 = vmatpush1.msra.mxu0 0.0
        %1663 = vmatprep.subr.mxu0 0.0
        %1664 = vmatpush1.msra.mxu0 0.0
        %1665 = vmatprep.subr.mxu0 0.0
        %1666 = vmatpush1.msra.mxu0 0.0
        %1667 = vmatprep.subr.mxu0 0.0
        %1668 = vmatpush1.msra.mxu0 0.0
        %1669 = vmatprep.subr.mxu0 0.0
        %1670 = vmatpush1.msra.mxu0 0.0
        %1671 = vmatprep.subr.mxu0 0.0
        %1672 = vmatpush1.msra.mxu0 0.0
        %1673 = vmatprep.subr.mxu0 0.0
        %1674 = vmatpush1.msra.mxu0 0.0
        %1675 = vmatprep.subr.mxu0 0.0
        %1676 = vmatpush1.msra.mxu0 0.0
        %1677 = vmatprep.subr.mxu0 0.0
        %1678 = vmatpush1.msra.mxu0 0.0
        %1679 = vmatprep.subr.mxu0 0.0
        %1680 = vmatpush1.msra.mxu0 0.0
        %1681 = vmatprep.subr.mxu0 0.0
        %1682 = vmatpush1.msra.mxu0 0.0
        %1683 = vmatprep.subr.mxu0 0.0
        %1684 = vmatpush1.msra.mxu0 0.0
        %1685 = vmatprep.subr.mxu0 0.0
        %1686 = vmatpush1.msra.mxu0 0.0
        %1687 = vmatprep.subr.mxu0 0.0
        %1688 = vmatpush1.msra.mxu0 0.0
        %1689 = vmatprep.subr.mxu0 0.0
        %1690 = vmatpush1.msra.mxu0 0.0
        %1691 = vmatprep.subr.mxu0 0.0
        %1692 = vmatpush1.msra.mxu0 0.0
        %1693 = vmatprep.subr.mxu0 0.0
        %1694 = vmatpush1.msra.mxu0 0.0
        %1695 = vmatprep.subr.mxu0 0.0
        %1696 = vmatpush1.msra.mxu0 0.0
        %1697 = vmatprep.subr.mxu0 0.0
        %1698 = vmatpush1.msra.mxu0 0.0
        %1699 = vmatprep.subr.mxu0 0.0
        %1700 = vmatpush1.msra.mxu0 0.0
        %1701 = vmatprep.subr.mxu0 0.0
        %1702 = vmatpush1.msra.mxu0 0.0
        %1703 = vmatprep.subr.mxu0 0.0
        %1704 = vmatpush1.msra.mxu0 0.0
        %1705 = vmatprep.subr.mxu0 0.0
        %1706 = vmatpush1.msra.mxu0 0.0
        %1707 = vmatprep.subr.mxu0 0.0
        %1708 = vmatpush1.msra.mxu0 0.0
        %1709 = vmatprep.subr.mxu0 0.0
        %1710 = vmatpush1.msra.mxu0 0.0
        %1711 = vmatprep.subr.mxu0 0.0
        %1712 = vmatpush1.msra.mxu0 0.0
        %1713 = vmatprep.subr.mxu0 0.0
        %1714 = vmatpush1.msra.mxu0 0.0
        %1715 = vmatprep.subr.mxu0 0.0
        %1716 = vmatpush1.msra.mxu0 0.0
        %1717 = vmatprep.subr.mxu0 0.0
        %1718 = vmatpush1.msra.mxu0 0.0
        %1719 = vmatprep.subr.mxu0 0.0
        %1720 = vmatpush1.msra.mxu0 0.0
        %1721 = vmatprep.mubr.f32.mxu0 0.0
        %1722 = vmatmul.mubr.f32.gmra.mrb[0].mxu0 %v1655
        %v1723 = vpop.f32.mrb[0].mxu0
        %v1724 = vadd.f32 0.0, %v1723
        %v1725 = vpop.f32.mrb[0].mxu0
        %1726 = vdwg.mxu0
        %v1728 = vsel %vm1653, %v1638, 0
        %1730 = vmatprep.subr.mxu0 0.0
        %1731 = vmatpush1.msra.mxu0 %v1636
        %1732 = vmatprep.subr.mxu0 0.0
        %1733 = vmatpush1.msra.mxu0 %v1637
        %1734 = vmatprep.subr.mxu0 0.0
        %1735 = vmatpush1.msra.mxu0 0.0
        %1736 = vmatprep.subr.mxu0 0.0
        %1737 = vmatpush1.msra.mxu0 0.0
        %1738 = vmatprep.subr.mxu0 0.0
        %1739 = vmatpush1.msra.mxu0 0.0
        %1740 = vmatprep.subr.mxu0 0.0
        %1741 = vmatpush1.msra.mxu0 0.0
        %1742 = vmatprep.subr.mxu0 0.0
        %1743 = vmatpush1.msra.mxu0 0.0
        %1744 = vmatprep.subr.mxu0 0.0
        %1745 = vmatpush1.msra.mxu0 0.0
        %1746 = vmatprep.subr.mxu0 0.0
        %1747 = vmatpush1.msra.mxu0 0.0
        %1748 = vmatprep.subr.mxu0 0.0
        %1749 = vmatpush1.msra.mxu0 0.0
        %1750 = vmatprep.subr.mxu0 0.0
        %1751 = vmatpush1.msra.mxu0 0.0
        %1752 = vmatprep.subr.mxu0 0.0
        %1753 = vmatpush1.msra.mxu0 0.0
        %1754 = vmatprep.subr.mxu0 0.0
        %1755 = vmatpush1.msra.mxu0 0.0
        %1756 = vmatprep.subr.mxu0 0.0
        %1757 = vmatpush1.msra.mxu0 0.0
        %1758 = vmatprep.subr.mxu0 0.0
        %1759 = vmatpush1.msra.mxu0 0.0
        %1760 = vmatprep.subr.mxu0 0.0
        %1761 = vmatpush1.msra.mxu0 0.0
        %1762 = vmatprep.subr.mxu0 0.0
        %1763 = vmatpush1.msra.mxu0 0.0
        %1764 = vmatprep.subr.mxu0 0.0
        %1765 = vmatpush1.msra.mxu0 0.0
        %1766 = vmatprep.subr.mxu0 0.0
        %1767 = vmatpush1.msra.mxu0 0.0
        %1768 = vmatprep.subr.mxu0 0.0
        %1769 = vmatpush1.msra.mxu0 0.0
        %1770 = vmatprep.subr.mxu0 0.0
        %1771 = vmatpush1.msra.mxu0 0.0
        %1772 = vmatprep.subr.mxu0 0.0
        %1773 = vmatpush1.msra.mxu0 0.0
        %1774 = vmatprep.subr.mxu0 0.0
        %1775 = vmatpush1.msra.mxu0 0.0
        %1776 = vmatprep.subr.mxu0 0.0
        %1777 = vmatpush1.msra.mxu0 0.0
        %1778 = vmatprep.subr.mxu0 0.0
        %1779 = vmatpush1.msra.mxu0 0.0
        %1780 = vmatprep.subr.mxu0 0.0
        %1781 = vmatpush1.msra.mxu0 0.0
        %1782 = vmatprep.subr.mxu0 0.0
        %1783 = vmatpush1.msra.mxu0 0.0
        %1784 = vmatprep.subr.mxu0 0.0
        %1785 = vmatpush1.msra.mxu0 0.0
        %1786 = vmatprep.subr.mxu0 0.0
        %1787 = vmatpush1.msra.mxu0 0.0
        %1788 = vmatprep.subr.mxu0 0.0
        %1789 = vmatpush1.msra.mxu0 0.0
        %1790 = vmatprep.subr.mxu0 0.0
        %1791 = vmatpush1.msra.mxu0 0.0
        %1792 = vmatprep.subr.mxu0 0.0
        %1793 = vmatpush1.msra.mxu0 0.0
        %1794 = vmatprep.mubr.f32.mxu0 0.0
        %1795 = vmatmul.mubr.f32.gmra.mrb[0].mxu0 %v1728
        %v1796 = vpop.f32.mrb[0].mxu0
        %v1797 = vadd.f32 %v1724, %v1796
        %v1798 = vpop.f32.mrb[0].mxu0
        %1799 = vdwg.mxu0
        %1800 = vrot.lane.b32.xlu0 %v1621, 31
        %v1801 = vpop.permute.xlu0 %1800
        %1802 = vrot.lane.b32.xlu0 %v1622, 31
        %v1803 = vpop.permute.xlu0 %1802
        %v1804 = vsel %vm1625, 1, 0
        %v1805 = vlaneseq
        %v1806 = vshrl.u32 %v1805, 7
        %v1807 = vsub.s32 0, %v1806
        %v1808 = vrot.slane %v1804, %v1807
        %vm1809 = vcmp.eq.s32.totalorder %v1808, 1
        %v1810 = vsel %vm1809, %v1801, 0.0
        %v1811 = vsel %vm1809, %v1803, 0.0
        %s1812 = scalar_lea.vmem [#allocation18], 16
        %v1813 = vld [vmem:[%s1812] sm:$0xff]
        %v1815 = vsel %vm1653, %v1813, 0
        %1817 = vmatprep.subr.mxu0 0.0
        %1818 = vmatpush1.msra.mxu0 %v1810
        %1819 = vmatprep.subr.mxu0 0.0
        %1820 = vmatpush1.msra.mxu0 %v1811
        %1821 = vmatprep.subr.mxu0 0.0
        %1822 = vmatpush1.msra.mxu0 0.0
        %1823 = vmatprep.subr.mxu0 0.0
        %1824 = vmatpush1.msra.mxu0 0.0
        %1825 = vmatprep.subr.mxu0 0.0
        %1826 = vmatpush1.msra.mxu0 0.0
        %1827 = vmatprep.subr.mxu0 0.0
        %1828 = vmatpush1.msra.mxu0 0.0
        %1829 = vmatprep.subr.mxu0 0.0
        %1830 = vmatpush1.msra.mxu0 0.0
        %1831 = vmatprep.subr.mxu0 0.0
        %1832 = vmatpush1.msra.mxu0 0.0
        %1833 = vmatprep.subr.mxu0 0.0
        %1834 = vmatpush1.msra.mxu0 0.0
        %1835 = vmatprep.subr.mxu0 0.0
        %1836 = vmatpush1.msra.mxu0 0.0
        %1837 = vmatprep.subr.mxu0 0.0
        %1838 = vmatpush1.msra.mxu0 0.0
        %1839 = vmatprep.subr.mxu0 0.0
        %1840 = vmatpush1.msra.mxu0 0.0
        %1841 = vmatprep.subr.mxu0 0.0
        %1842 = vmatpush1.msra.mxu0 0.0
        %1843 = vmatprep.subr.mxu0 0.0
        %1844 = vmatpush1.msra.mxu0 0.0
        %1845 = vmatprep.subr.mxu0 0.0
        %1846 = vmatpush1.msra.mxu0 0.0
        %1847 = vmatprep.subr.mxu0 0.0
        %1848 = vmatpush1.msra.mxu0 0.0
        %1849 = vmatprep.subr.mxu0 0.0
        %1850 = vmatpush1.msra.mxu0 0.0
        %1851 = vmatprep.subr.mxu0 0.0
        %1852 = vmatpush1.msra.mxu0 0.0
        %1853 = vmatprep.subr.mxu0 0.0
        %1854 = vmatpush1.msra.mxu0 0.0
        %1855 = vmatprep.subr.mxu0 0.0
        %1856 = vmatpush1.msra.mxu0 0.0
        %1857 = vmatprep.subr.mxu0 0.0
        %1858 = vmatpush1.msra.mxu0 0.0
        %1859 = vmatprep.subr.mxu0 0.0
        %1860 = vmatpush1.msra.mxu0 0.0
        %1861 = vmatprep.subr.mxu0 0.0
        %1862 = vmatpush1.msra.mxu0 0.0
        %1863 = vmatprep.subr.mxu0 0.0
        %1864 = vmatpush1.msra.mxu0 0.0
        %1865 = vmatprep.subr.mxu0 0.0
        %1866 = vmatpush1.msra.mxu0 0.0
        %1867 = vmatprep.subr.mxu0 0.0
        %1868 = vmatpush1.msra.mxu0 0.0
        %1869 = vmatprep.subr.mxu0 0.0
        %1870 = vmatpush1.msra.mxu0 0.0
        %1871 = vmatprep.subr.mxu0 0.0
        %1872 = vmatpush1.msra.mxu0 0.0
        %1873 = vmatprep.subr.mxu0 0.0
        %1874 = vmatpush1.msra.mxu0 0.0
        %1875 = vmatprep.subr.mxu0 0.0
        %1876 = vmatpush1.msra.mxu0 0.0
        %1877 = vmatprep.subr.mxu0 0.0
        %1878 = vmatpush1.msra.mxu0 0.0
        %1879 = vmatprep.subr.mxu0 0.0
        %1880 = vmatpush1.msra.mxu0 0.0
        %1881 = vmatprep.mubr.f32.mxu0 0.0
        %1882 = vmatmul.mubr.f32.gmra.mrb[0].mxu0 %v1815
        %v1883 = vpop.f32.mrb[0].mxu0
        %v1884 = vadd.f32 0.0, %v1883
        %v1885 = vpop.f32.mrb[0].mxu0
        %1886 = vdwg.mxu0
        %v1887 = vadd.f32 %v1797, %v1884
        %1888 = vrot.lane.b32.xlu0 %v1621, 1
        %v1889 = vpop.permute.xlu0 %1888
        %1890 = vrot.lane.b32.xlu0 %v1622, 1
        %v1891 = vpop.permute.xlu0 %1890
        %v1892 = vsel %vm1336, %v1889, 0.0
        %v1893 = vsel %vm1336, %v1891, 0.0
        %s1894 = scalar_lea.vmem [#allocation18], 24
        %v1895 = vld [vmem:[%s1894] sm:$0xff]
        %v1897 = vsel %vm1653, %v1895, 0
        %1899 = vmatprep.subr.mxu0 0.0
        %1900 = vmatpush1.msra.mxu0 %v1892
        %1901 = vmatprep.subr.mxu0 0.0
        %1902 = vmatpush1.msra.mxu0 %v1893
        %1903 = vmatprep.subr.mxu0 0.0
        %1904 = vmatpush1.msra.mxu0 0.0
        %1905 = vmatprep.subr.mxu0 0.0
        %1906 = vmatpush1.msra.mxu0 0.0
        %1907 = vmatprep.subr.mxu0 0.0
        %1908 = vmatpush1.msra.mxu0 0.0
        %1909 = vmatprep.subr.mxu0 0.0
        %1910 = vmatpush1.msra.mxu0 0.0
        %1911 = vmatprep.subr.mxu0 0.0
        %1912 = vmatpush1.msra.mxu0 0.0
        %1913 = vmatprep.subr.mxu0 0.0
        %1914 = vmatpush1.msra.mxu0 0.0
        %1915 = vmatprep.subr.mxu0 0.0
        %1916 = vmatpush1.msra.mxu0 0.0
        %1917 = vmatprep.subr.mxu0 0.0
        %1918 = vmatpush1.msra.mxu0 0.0
        %1919 = vmatprep.subr.mxu0 0.0
        %1920 = vmatpush1.msra.mxu0 0.0
        %1921 = vmatprep.subr.mxu0 0.0
        %1922 = vmatpush1.msra.mxu0 0.0
        %1923 = vmatprep.subr.mxu0 0.0
        %1924 = vmatpush1.msra.mxu0 0.0
        %1925 = vmatprep.subr.mxu0 0.0
        %1926 = vmatpush1.msra.mxu0 0.0
        %1927 = vmatprep.subr.mxu0 0.0
        %1928 = vmatpush1.msra.mxu0 0.0
        %1929 = vmatprep.subr.mxu0 0.0
        %1930 = vmatpush1.msra.mxu0 0.0
        %1931 = vmatprep.subr.mxu0 0.0
        %1932 = vmatpush1.msra.mxu0 0.0
        %1933 = vmatprep.subr.mxu0 0.0
        %1934 = vmatpush1.msra.mxu0 0.0
        %1935 = vmatprep.subr.mxu0 0.0
        %1936 = vmatpush1.msra.mxu0 0.0
        %1937 = vmatprep.subr.mxu0 0.0
        %1938 = vmatpush1.msra.mxu0 0.0
        %1939 = vmatprep.subr.mxu0 0.0
        %1940 = vmatpush1.msra.mxu0 0.0
        %1941 = vmatprep.subr.mxu0 0.0
        %1942 = vmatpush1.msra.mxu0 0.0
        %1943 = vmatprep.subr.mxu0 0.0
        %1944 = vmatpush1.msra.mxu0 0.0
        %1945 = vmatprep.subr.mxu0 0.0
        %1946 = vmatpush1.msra.mxu0 0.0
        %1947 = vmatprep.subr.mxu0 0.0
        %1948 = vmatpush1.msra.mxu0 0.0
        %1949 = vmatprep.subr.mxu0 0.0
        %1950 = vmatpush1.msra.mxu0 0.0
        %1951 = vmatprep.subr.mxu0 0.0
        %1952 = vmatpush1.msra.mxu0 0.0
        %1953 = vmatprep.subr.mxu0 0.0
        %1954 = vmatpush1.msra.mxu0 0.0
        %1955 = vmatprep.subr.mxu0 0.0
        %1956 = vmatpush1.msra.mxu0 0.0
        %1957 = vmatprep.subr.mxu0 0.0
        %1958 = vmatpush1.msra.mxu0 0.0
        %1959 = vmatprep.subr.mxu0 0.0
        %1960 = vmatpush1.msra.mxu0 0.0
        %1961 = vmatprep.subr.mxu0 0.0
        %1962 = vmatpush1.msra.mxu0 0.0
        %1963 = vmatprep.mubr.f32.mxu0 0.0
        %1964 = vmatmul.mubr.f32.gmra.mrb[0].mxu0 %v1897
        %v1965 = vpop.f32.mrb[0].mxu0
        %v1966 = vadd.f32 0.0, %v1965
        %v1967 = vpop.f32.mrb[0].mxu0
        %1968 = vdwg.mxu0
        %v1969 = vadd.f32 %v1887, %v1966
        %s1970 = scalar_lea.vmem [#allocation18], 32
        %v1971 = vld [vmem:[%s1970] sm:$0xff]
        %v1973 = vsel %vm1653, %v1971, 0
        %1975 = vmatprep.subr.mxu0 0.0
        %1976 = vmatpush1.msra.mxu0 %v1621
        %1977 = vmatprep.subr.mxu0 0.0
        %1978 = vmatpush1.msra.mxu0 %v1622
        %1979 = vmatprep.subr.mxu0 0.0
        %1980 = vmatpush1.msra.mxu0 0.0
        %1981 = vmatprep.subr.mxu0 0.0
        %1982 = vmatpush1.msra.mxu0 0.0
        %1983 = vmatprep.subr.mxu0 0.0
        %1984 = vmatpush1.msra.mxu0 0.0
        %1985 = vmatprep.subr.mxu0 0.0
        %1986 = vmatpush1.msra.mxu0 0.0
        %1987 = vmatprep.subr.mxu0 0.0
        %1988 = vmatpush1.msra.mxu0 0.0
        %1989 = vmatprep.subr.mxu0 0.0
        %1990 = vmatpush1.msra.mxu0 0.0
        %1991 = vmatprep.subr.mxu0 0.0
        %1992 = vmatpush1.msra.mxu0 0.0
        %1993 = vmatprep.subr.mxu0 0.0
        %1994 = vmatpush1.msra.mxu0 0.0
        %1995 = vmatprep.subr.mxu0 0.0
        %1996 = vmatpush1.msra.mxu0 0.0
        %1997 = vmatprep.subr.mxu0 0.0
        %1998 = vmatpush1.msra.mxu0 0.0
        %1999 = vmatprep.subr.mxu0 0.0
        %2000 = vmatpush1.msra.mxu0 0.0
        %2001 = vmatprep.subr.mxu0 0.0
        %2002 = vmatpush1.msra.mxu0 0.0
        %2003 = vmatprep.subr.mxu0 0.0
        %2004 = vmatpush1.msra.mxu0 0.0
        %2005 = vmatprep.subr.mxu0 0.0
        %2006 = vmatpush1.msra.mxu0 0.0
        %2007 = vmatprep.subr.mxu0 0.0
        %2008 = vmatpush1.msra.mxu0 0.0
        %2009 = vmatprep.subr.mxu0 0.0
        %2010 = vmatpush1.msra.mxu0 0.0
        %2011 = vmatprep.subr.mxu0 0.0
        %2012 = vmatpush1.msra.mxu0 0.0
        %2013 = vmatprep.subr.mxu0 0.0
        %2014 = vmatpush1.msra.mxu0 0.0
        %2015 = vmatprep.subr.mxu0 0.0
        %2016 = vmatpush1.msra.mxu0 0.0
        %2017 = vmatprep.subr.mxu0 0.0
        %2018 = vmatpush1.msra.mxu0 0.0
        %2019 = vmatprep.subr.mxu0 0.0
        %2020 = vmatpush1.msra.mxu0 0.0
        %2021 = vmatprep.subr.mxu0 0.0
        %2022 = vmatpush1.msra.mxu0 0.0
        %2023 = vmatprep.subr.mxu0 0.0
        %2024 = vmatpush1.msra.mxu0 0.0
        %2025 = vmatprep.subr.mxu0 0.0
        %2026 = vmatpush1.msra.mxu0 0.0
        %2027 = vmatprep.subr.mxu0 0.0
        %2028 = vmatpush1.msra.mxu0 0.0
        %2029 = vmatprep.subr.mxu0 0.0
        %2030 = vmatpush1.msra.mxu0 0.0
        %2031 = vmatprep.subr.mxu0 0.0
        %2032 = vmatpush1.msra.mxu0 0.0
        %2033 = vmatprep.subr.mxu0 0.0
        %2034 = vmatpush1.msra.mxu0 0.0
        %2035 = vmatprep.subr.mxu0 0.0
        %2036 = vmatpush1.msra.mxu0 0.0
        %2037 = vmatprep.subr.mxu0 0.0
        %2038 = vmatpush1.msra.mxu0 0.0
        %2039 = vmatprep.mubr.f32.mxu0 0.0
        %2040 = vmatmul.mubr.f32.gmra.mrb[0].mxu0 %v1973
        %v2041 = vpop.f32.mrb[0].mxu0
        %v2042 = vadd.f32 0.0, %v2041
        %v2043 = vpop.f32.mrb[0].mxu0
        %2044 = vdwg.mxu0
        %v2045 = vadd.f32 %v1969, %v2042
        %2046 = vrot.lane.b32.xlu0 %v1621, 127
        %v2047 = vpop.permute.xlu0 %2046
        %2048 = vrot.lane.b32.xlu0 %v1622, 127
        %v2049 = vpop.permute.xlu0 %2048
        %v2050 = vsel %vm1497, %v2047, 0.0
        %v2051 = vsel %vm1497, %v2049, 0.0
        %s2052 = scalar_lea.vmem [#allocation18], 40
        %v2053 = vld [vmem:[%s2052] sm:$0xff]
        %v2055 = vsel %vm1653, %v2053, 0
        %2057 = vmatprep.subr.mxu0 0.0
        %2058 = vmatpush1.msra.mxu0 %v2050
        %2059 = vmatprep.subr.mxu0 0.0
        %2060 = vmatpush1.msra.mxu0 %v2051
        %2061 = vmatprep.subr.mxu0 0.0
        %2062 = vmatpush1.msra.mxu0 0.0
        %2063 = vmatprep.subr.mxu0 0.0
        %2064 = vmatpush1.msra.mxu0 0.0
        %2065 = vmatprep.subr.mxu0 0.0
        %2066 = vmatpush1.msra.mxu0 0.0
        %2067 = vmatprep.subr.mxu0 0.0
        %2068 = vmatpush1.msra.mxu0 0.0
        %2069 = vmatprep.subr.mxu0 0.0
        %2070 = vmatpush1.msra.mxu0 0.0
        %2071 = vmatprep.subr.mxu0 0.0
        %2072 = vmatpush1.msra.mxu0 0.0
        %2073 = vmatprep.subr.mxu0 0.0
        %2074 = vmatpush1.msra.mxu0 0.0
        %2075 = vmatprep.subr.mxu0 0.0
        %2076 = vmatpush1.msra.mxu0 0.0
        %2077 = vmatprep.subr.mxu0 0.0
        %2078 = vmatpush1.msra.mxu0 0.0
        %2079 = vmatprep.subr.mxu0 0.0
        %2080 = vmatpush1.msra.mxu0 0.0
        %2081 = vmatprep.subr.mxu0 0.0
        %2082 = vmatpush1.msra.mxu0 0.0
        %2083 = vmatprep.subr.mxu0 0.0
        %2084 = vmatpush1.msra.mxu0 0.0
        %2085 = vmatprep.subr.mxu0 0.0
        %2086 = vmatpush1.msra.mxu0 0.0
        %2087 = vmatprep.subr.mxu0 0.0
        %2088 = vmatpush1.msra.mxu0 0.0
        %2089 = vmatprep.subr.mxu0 0.0
        %2090 = vmatpush1.msra.mxu0 0.0
        %2091 = vmatprep.subr.mxu0 0.0
        %2092 = vmatpush1.msra.mxu0 0.0
        %2093 = vmatprep.subr.mxu0 0.0
        %2094 = vmatpush1.msra.mxu0 0.0
        %2095 = vmatprep.subr.mxu0 0.0
        %2096 = vmatpush1.msra.mxu0 0.0
        %2097 = vmatprep.subr.mxu0 0.0
        %2098 = vmatpush1.msra.mxu0 0.0
        %2099 = vmatprep.subr.mxu0 0.0
        %2100 = vmatpush1.msra.mxu0 0.0
        %2101 = vmatprep.subr.mxu0 0.0
        %2102 = vmatpush1.msra.mxu0 0.0
        %2103 = vmatprep.subr.mxu0 0.0
        %2104 = vmatpush1.msra.mxu0 0.0
        %2105 = vmatprep.subr.mxu0 0.0
        %2106 = vmatpush1.msra.mxu0 0.0
        %2107 = vmatprep.subr.mxu0 0.0
        %2108 = vmatpush1.msra.mxu0 0.0
        %2109 = vmatprep.subr.mxu0 0.0
        %2110 = vmatpush1.msra.mxu0 0.0
        %2111 = vmatprep.subr.mxu0 0.0
        %2112 = vmatpush1.msra.mxu0 0.0
        %2113 = vmatprep.subr.mxu0 0.0
        %2114 = vmatpush1.msra.mxu0 0.0
        %2115 = vmatprep.subr.mxu0 0.0
        %2116 = vmatpush1.msra.mxu0 0.0
        %2117 = vmatprep.subr.mxu0 0.0
        %2118 = vmatpush1.msra.mxu0 0.0
        %2119 = vmatprep.subr.mxu0 0.0
        %2120 = vmatpush1.msra.mxu0 0.0
        %2121 = vmatprep.mubr.f32.mxu0 0.0
        %2122 = vmatmul.mubr.f32.gmra.mrb[0].mxu0 %v2055
        %v2123 = vpop.f32.mrb[0].mxu0
        %v2124 = vadd.f32 0.0, %v2123
        %v2125 = vpop.f32.mrb[0].mxu0
        %2126 = vdwg.mxu0
        %v2127 = vadd.f32 %v2045, %v2124
        %s2128 = scalar_lea.vmem [#allocation23], 8
        %v2129 = vld [vmem:[%s2128] sm:$0xff]
        %2131 = vset.pattern.permute.xlu0 0
        %2132 = vperm.xlu0 %2131, %v2129
        %v2133 = vpop.permute.xlu0 %2132
        %v2135 = vadd.f32 %v2127, %v2133
        %s2136 = scalar_lea.vmem [#allocation24], 8
        %v2137 = vld [vmem:[%s2136] sm:$0xff]
        %s2138 = scalar_lea.vmem [#allocation26], 8
        %v2139 = vld [vmem:[%s2138] sm:$0xff]
        %s2140 = scalar_lea.vmem [#allocation27], 8
        %v2141 = vld [vmem:[%s2140] sm:$0xff]
        %2142 = vadd.xlane.f32.xlu0 %v2135
        %v2143 = vpop.xlane.xlu0 %2142
        %v2144 = vmul.f32 %v2143, 0.0078125
        %v2145 = vmul.f32 %v2135, %v2135
        %2146 = vadd.xlane.f32.xlu0 %v2145
        %v2147 = vpop.xlane.xlu0 %2146
        %v2148 = vmul.f32 %v2147, 0.0078125
        %v2149 = vmul.f32 %v2144, %v2144
        %v2150 = vsub.f32 %v2148, %v2149
        %v2151 = vmax.f32 %v2150, 0.0
        %v2152 = vsub.f32 %v2135, %v2144
        %v2153 = vadd.f32 %v2151, 1e-05
        %v2154 = vrsqrt.pop %v2153
        %v2155 = vmul.f32 %v2152, %v2154
        %2157 = vset.pattern.permute.xlu0 0
        %2158 = vperm.xlu0 %2157, %v2137
        %v2159 = vpop.permute.xlu0 %2158
        %v2161 = vmul.f32 %v2155, %v2159
        %2163 = vset.pattern.permute.xlu0 0
        %2164 = vperm.xlu0 %2163, %v2139
        %v2165 = vpop.permute.xlu0 %2164
        %v2167 = vadd.f32 %v2161, %v2165
        %vm2168 = vcmp.ge.f32.partialorder %v2167, 0.0
        %2170 = vset.pattern.permute.xlu0 0
        %2171 = vperm.xlu0 %2170, %v2141
        %v2172 = vpop.permute.xlu0 %2171
        %v2174 = vmul.f32 %v2172, %v2167
        %v2175 = vsel %vm2168, %v2167, %v2174
        %s2176 = scalar_lea.vmem [#allocation2], 8
        %2177 = vst [vmem:[%s2176] sm:$0xff] %v2175
        %v2178 = vld [vmem:[%s2176] sm:$0xff]
        %v2179 = vld [vmem:[%s2176 + $0x8] sm:$0xff]
        %v2180 = vld [vmem:[%s2176 + $0x10] sm:$0xff]
        %vm2181 = vcmp.ge.f32.partialorder %v940, 4.0
        %vm2182 = vmand %vm2181, %vm942
        %vm2183 = vmand %vm2181, %vm943
        %2184 = vrot.lane.b32.xlu0 %v2178, 65
        %v2185 = vpop.permute.xlu0 %2184
        %2186 = vrot.lane.b32.xlu0 %v2179, 65
        %v2187 = vpop.permute.xlu0 %2186
        %2188 = vrot.lane.b32.xlu0 %v2180, 65
        %v2189 = vpop.permute.xlu0 %2188
        %v2190 = vsel %vm2182, 1, 0
        %v2191 = vlaneseq
        %v2192 = vshrl.u32 %v2191, 7
        %v2193 = vsub.s32 0, %v2192
        %v2194 = vrot.slane %v2190, %v2193
        %vm2195 = vcmp.eq.s32.totalorder %v2194, 1
        %v2196 = vsel %vm2195, %v2185, 0.0
        %v2197 = vsel %vm2195, %v2187, 0.0
        %v2198 = vsel %vm2195, %v2189, 0.0
        %v2199 = vld [vmem:[#allocation20] sm:$0xff]
        %2200 = vrot.lane.b32.xlu0 %v2178, 64
        %v2201 = vpop.permute.xlu0 %2200
        %2202 = vrot.lane.b32.xlu0 %v2179, 64
        %v2203 = vpop.permute.xlu0 %2202
        %2204 = vrot.lane.b32.xlu0 %v2180, 64
        %v2205 = vpop.permute.xlu0 %2204
        %v2206 = vsel %vm2181, 1, 0
        %v2207 = vlaneseq
        %v2208 = vshrl.u32 %v2207, 7
        %v2209 = vsub.s32 0, %v2208
        %v2210 = vrot.slane %v2206, %v2209
        %vm2211 = vcmp.eq.s32.totalorder %v2210, 1
        %v2212 = vsel %vm2211, %v2201, 0.0
        %v2213 = vsel %vm2211, %v2203, 0.0
        %v2214 = vsel %vm2211, %v2205, 0.0
        %s2215 = scalar_lea.vmem [#allocation20], 8
        %v2216 = vld [vmem:[%s2215] sm:$0xff]
        %vm2217 = vcmask 195584
        %v2219 = vsel %vm2217, %v2216, 0
        %2221 = vmatprep.subr.mxu0 0.0
        %2222 = vmatpush1.msra.mxu0 %v2212
        %2223 = vmatprep.subr.mxu0 0.0
        %2224 = vmatpush1.msra.mxu0 %v2213
        %2225 = vmatprep.subr.mxu0 0.0
        %2226 = vmatpush1.msra.mxu0 %v2214
        %2227 = vmatprep.subr.mxu0 0.0
        %2228 = vmatpush1.msra.mxu0 0.0
        %2229 = vmatprep.subr.mxu0 0.0
        %2230 = vmatpush1.msra.mxu0 0.0
        %2231 = vmatprep.subr.mxu0 0.0
        %2232 = vmatpush1.msra.mxu0 0.0
        %2233 = vmatprep.subr.mxu0 0.0
        %2234 = vmatpush1.msra.mxu0 0.0
        %2235 = vmatprep.subr.mxu0 0.0
        %2236 = vmatpush1.msra.mxu0 0.0
        %2237 = vmatprep.subr.mxu0 0.0
        %2238 = vmatpush1.msra.mxu0 0.0
        %2239 = vmatprep.subr.mxu0 0.0
        %2240 = vmatpush1.msra.mxu0 0.0
        %2241 = vmatprep.subr.mxu0 0.0
        %2242 = vmatpush1.msra.mxu0 0.0
        %2243 = vmatprep.subr.mxu0 0.0
        %2244 = vmatpush1.msra.mxu0 0.0
        %2245 = vmatprep.subr.mxu0 0.0
        %2246 = vmatpush1.msra.mxu0 0.0
        %2247 = vmatprep.subr.mxu0 0.0
        %2248 = vmatpush1.msra.mxu0 0.0
        %2249 = vmatprep.subr.mxu0 0.0
        %2250 = vmatpush1.msra.mxu0 0.0
        %2251 = vmatprep.subr.mxu0 0.0
        %2252 = vmatpush1.msra.mxu0 0.0
        %2253 = vmatprep.subr.mxu0 0.0
        %2254 = vmatpush1.msra.mxu0 0.0
        %2255 = vmatprep.subr.mxu0 0.0
        %2256 = vmatpush1.msra.mxu0 0.0
        %2257 = vmatprep.subr.mxu0 0.0
        %2258 = vmatpush1.msra.mxu0 0.0
        %2259 = vmatprep.subr.mxu0 0.0
        %2260 = vmatpush1.msra.mxu0 0.0
        %2261 = vmatprep.subr.mxu0 0.0
        %2262 = vmatpush1.msra.mxu0 0.0
        %2263 = vmatprep.subr.mxu0 0.0
        %2264 = vmatpush1.msra.mxu0 0.0
        %2265 = vmatprep.subr.mxu0 0.0
        %2266 = vmatpush1.msra.mxu0 0.0
        %2267 = vmatprep.subr.mxu0 0.0
        %2268 = vmatpush1.msra.mxu0 0.0
        %2269 = vmatprep.subr.mxu0 0.0
        %2270 = vmatpush1.msra.mxu0 0.0
        %2271 = vmatprep.subr.mxu0 0.0
        %2272 = vmatpush1.msra.mxu0 0.0
        %2273 = vmatprep.subr.mxu0 0.0
        %2274 = vmatpush1.msra.mxu0 0.0
        %2275 = vmatprep.subr.mxu0 0.0
        %2276 = vmatpush1.msra.mxu0 0.0
        %2277 = vmatprep.subr.mxu0 0.0
        %2278 = vmatpush1.msra.mxu0 0.0
        %2279 = vmatprep.subr.mxu0 0.0
        %2280 = vmatpush1.msra.mxu0 0.0
        %2281 = vmatprep.subr.mxu0 0.0
        %2282 = vmatpush1.msra.mxu0 0.0
        %2283 = vmatprep.subr.mxu0 0.0
        %2284 = vmatpush1.msra.mxu0 0.0
        %2285 = vmatprep.mubr.f32.mxu0 0.0
        %2286 = vmatmul.mubr.f32.gmra.mrb[0].mxu0 %v2219
        %v2287 = vpop.f32.mrb[0].mxu0
        %v2288 = vadd.f32 0.0, %v2287
        %v2289 = vpop.f32.mrb[0].mxu0
        %2290 = vdwg.mxu0
        %v2292 = vsel %vm2217, %v2199, 0
        %2294 = vmatprep.subr.mxu0 0.0
        %2295 = vmatpush1.msra.mxu0 %v2196
        %2296 = vmatprep.subr.mxu0 0.0
        %2297 = vmatpush1.msra.mxu0 %v2197
        %2298 = vmatprep.subr.mxu0 0.0
        %2299 = vmatpush1.msra.mxu0 %v2198
        %2300 = vmatprep.subr.mxu0 0.0
        %2301 = vmatpush1.msra.mxu0 0.0
        %2302 = vmatprep.subr.mxu0 0.0
        %2303 = vmatpush1.msra.mxu0 0.0
        %2304 = vmatprep.subr.mxu0 0.0
        %2305 = vmatpush1.msra.mxu0 0.0
        %2306 = vmatprep.subr.mxu0 0.0
        %2307 = vmatpush1.msra.mxu0 0.0
        %2308 = vmatprep.subr.mxu0 0.0
        %2309 = vmatpush1.msra.mxu0 0.0
        %2310 = vmatprep.subr.mxu0 0.0
        %2311 = vmatpush1.msra.mxu0 0.0
        %2312 = vmatprep.subr.mxu0 0.0
        %2313 = vmatpush1.msra.mxu0 0.0
        %2314 = vmatprep.subr.mxu0 0.0
        %2315 = vmatpush1.msra.mxu0 0.0
        %2316 = vmatprep.subr.mxu0 0.0
        %2317 = vmatpush1.msra.mxu0 0.0
        %2318 = vmatprep.subr.mxu0 0.0
        %2319 = vmatpush1.msra.mxu0 0.0
        %2320 = vmatprep.subr.mxu0 0.0
        %2321 = vmatpush1.msra.mxu0 0.0
        %2322 = vmatprep.subr.mxu0 0.0
        %2323 = vmatpush1.msra.mxu0 0.0
        %2324 = vmatprep.subr.mxu0 0.0
        %2325 = vmatpush1.msra.mxu0 0.0
        %2326 = vmatprep.subr.mxu0 0.0
        %2327 = vmatpush1.msra.mxu0 0.0
        %2328 = vmatprep.subr.mxu0 0.0
        %2329 = vmatpush1.msra.mxu0 0.0
        %2330 = vmatprep.subr.mxu0 0.0
        %2331 = vmatpush1.msra.mxu0 0.0
        %2332 = vmatprep.subr.mxu0 0.0
        %2333 = vmatpush1.msra.mxu0 0.0
        %2334 = vmatprep.subr.mxu0 0.0
        %2335 = vmatpush1.msra.mxu0 0.0
        %2336 = vmatprep.subr.mxu0 0.0
        %2337 = vmatpush1.msra.mxu0 0.0
        %2338 = vmatprep.subr.mxu0 0.0
        %2339 = vmatpush1.msra.mxu0 0.0
        %2340 = vmatprep.subr.mxu0 0.0
        %2341 = vmatpush1.msra.mxu0 0.0
        %2342 = vmatprep.subr.mxu0 0.0
        %2343 = vmatpush1.msra.mxu0 0.0
        %2344 = vmatprep.subr.mxu0 0.0
        %2345 = vmatpush1.msra.mxu0 0.0
        %2346 = vmatprep.subr.mxu0 0.0
        %2347 = vmatpush1.msra.mxu0 0.0
        %2348 = vmatprep.subr.mxu0 0.0
        %2349 = vmatpush1.msra.mxu0 0.0
        %2350 = vmatprep.subr.mxu0 0.0
        %2351 = vmatpush1.msra.mxu0 0.0
        %2352 = vmatprep.subr.mxu0 0.0
        %2353 = vmatpush1.msra.mxu0 0.0
        %2354 = vmatprep.subr.mxu0 0.0
        %2355 = vmatpush1.msra.mxu0 0.0
        %2356 = vmatprep.subr.mxu0 0.0
        %2357 = vmatpush1.msra.mxu0 0.0
        %2358 = vmatprep.mubr.f32.mxu0 0.0
        %2359 = vmatmul.mubr.f32.gmra.mrb[0].mxu0 %v2292
        %v2360 = vpop.f32.mrb[0].mxu0
        %v2361 = vadd.f32 %v2288, %v2360
        %v2362 = vpop.f32.mrb[0].mxu0
        %2363 = vdwg.mxu0
        %2364 = vrot.lane.b32.xlu0 %v2178, 63
        %v2365 = vpop.permute.xlu0 %2364
        %2366 = vrot.lane.b32.xlu0 %v2179, 63
        %v2367 = vpop.permute.xlu0 %2366
        %2368 = vrot.lane.b32.xlu0 %v2180, 63
        %v2369 = vpop.permute.xlu0 %2368
        %v2370 = vsel %vm2183, 1, 0
        %v2371 = vlaneseq
        %v2372 = vshrl.u32 %v2371, 7
        %v2373 = vsub.s32 0, %v2372
        %v2374 = vrot.slane %v2370, %v2373
        %vm2375 = vcmp.eq.s32.totalorder %v2374, 1
        %v2376 = vsel %vm2375, %v2365, 0.0
        %v2377 = vsel %vm2375, %v2367, 0.0
        %v2378 = vsel %vm2375, %v2369, 0.0
        %s2379 = scalar_lea.vmem [#allocation20], 16
        %v2380 = vld [vmem:[%s2379] sm:$0xff]
        %v2382 = vsel %vm2217, %v2380, 0
        %2384 = vmatprep.subr.mxu0 0.0
        %2385 = vmatpush1.msra.mxu0 %v2376
        %2386 = vmatprep.subr.mxu0 0.0
        %2387 = vmatpush1.msra.mxu0 %v2377
        %2388 = vmatprep.subr.mxu0 0.0
        %2389 = vmatpush1.msra.mxu0 %v2378
        %2390 = vmatprep.subr.mxu0 0.0
        %2391 = vmatpush1.msra.mxu0 0.0
        %2392 = vmatprep.subr.mxu0 0.0
        %2393 = vmatpush1.msra.mxu0 0.0
        %2394 = vmatprep.subr.mxu0 0.0
        %2395 = vmatpush1.msra.mxu0 0.0
        %2396 = vmatprep.subr.mxu0 0.0
        %2397 = vmatpush1.msra.mxu0 0.0
        %2398 = vmatprep.subr.mxu0 0.0
        %2399 = vmatpush1.msra.mxu0 0.0
        %2400 = vmatprep.subr.mxu0 0.0
        %2401 = vmatpush1.msra.mxu0 0.0
        %2402 = vmatprep.subr.mxu0 0.0
        %2403 = vmatpush1.msra.mxu0 0.0
        %2404 = vmatprep.subr.mxu0 0.0
        %2405 = vmatpush1.msra.mxu0 0.0
        %2406 = vmatprep.subr.mxu0 0.0
        %2407 = vmatpush1.msra.mxu0 0.0
        %2408 = vmatprep.subr.mxu0 0.0
        %2409 = vmatpush1.msra.mxu0 0.0
        %2410 = vmatprep.subr.mxu0 0.0
        %2411 = vmatpush1.msra.mxu0 0.0
        %2412 = vmatprep.subr.mxu0 0.0
        %2413 = vmatpush1.msra.mxu0 0.0
        %2414 = vmatprep.subr.mxu0 0.0
        %2415 = vmatpush1.msra.mxu0 0.0
        %2416 = vmatprep.subr.mxu0 0.0
        %2417 = vmatpush1.msra.mxu0 0.0
        %2418 = vmatprep.subr.mxu0 0.0
        %2419 = vmatpush1.msra.mxu0 0.0
        %2420 = vmatprep.subr.mxu0 0.0
        %2421 = vmatpush1.msra.mxu0 0.0
        %2422 = vmatprep.subr.mxu0 0.0
        %2423 = vmatpush1.msra.mxu0 0.0
        %2424 = vmatprep.subr.mxu0 0.0
        %2425 = vmatpush1.msra.mxu0 0.0
        %2426 = vmatprep.subr.mxu0 0.0
        %2427 = vmatpush1.msra.mxu0 0.0
        %2428 = vmatprep.subr.mxu0 0.0
        %2429 = vmatpush1.msra.mxu0 0.0
        %2430 = vmatprep.subr.mxu0 0.0
        %2431 = vmatpush1.msra.mxu0 0.0
        %2432 = vmatprep.subr.mxu0 0.0
        %2433 = vmatpush1.msra.mxu0 0.0
        %2434 = vmatprep.subr.mxu0 0.0
        %2435 = vmatpush1.msra.mxu0 0.0
        %2436 = vmatprep.subr.mxu0 0.0
        %2437 = vmatpush1.msra.mxu0 0.0
        %2438 = vmatprep.subr.mxu0 0.0
        %2439 = vmatpush1.msra.mxu0 0.0
        %2440 = vmatprep.subr.mxu0 0.0
        %2441 = vmatpush1.msra.mxu0 0.0
        %2442 = vmatprep.subr.mxu0 0.0
        %2443 = vmatpush1.msra.mxu0 0.0
        %2444 = vmatprep.subr.mxu0 0.0
        %2445 = vmatpush1.msra.mxu0 0.0
        %2446 = vmatprep.subr.mxu0 0.0
        %2447 = vmatpush1.msra.mxu0 0.0
        %2448 = vmatprep.mubr.f32.mxu0 0.0
        %2449 = vmatmul.mubr.f32.gmra.mrb[0].mxu0 %v2382
        %v2450 = vpop.f32.mrb[0].mxu0
        %v2451 = vadd.f32 0.0, %v2450
        %v2452 = vpop.f32.mrb[0].mxu0
        %2453 = vdwg.mxu0
        %v2454 = vadd.f32 %v2361, %v2451
        %2455 = vrot.lane.b32.xlu0 %v2178, 1
        %v2456 = vpop.permute.xlu0 %2455
        %2457 = vrot.lane.b32.xlu0 %v2179, 1
        %v2458 = vpop.permute.xlu0 %2457
        %2459 = vrot.lane.b32.xlu0 %v2180, 1
        %v2460 = vpop.permute.xlu0 %2459
        %v2461 = vsel %vm1336, %v2456, 0.0
        %v2462 = vsel %vm1336, %v2458, 0.0
        %v2463 = vsel %vm1336, %v2460, 0.0
        %s2464 = scalar_lea.vmem [#allocation20], 24
        %v2465 = vld [vmem:[%s2464] sm:$0xff]
        %v2467 = vsel %vm2217, %v2465, 0
        %2469 = vmatprep.subr.mxu0 0.0
        %2470 = vmatpush1.msra.mxu0 %v2461
        %2471 = vmatprep.subr.mxu0 0.0
        %2472 = vmatpush1.msra.mxu0 %v2462
        %2473 = vmatprep.subr.mxu0 0.0
        %2474 = vmatpush1.msra.mxu0 %v2463
        %2475 = vmatprep.subr.mxu0 0.0
        %2476 = vmatpush1.msra.mxu0 0.0
        %2477 = vmatprep.subr.mxu0 0.0
        %2478 = vmatpush1.msra.mxu0 0.0
        %2479 = vmatprep.subr.mxu0 0.0
        %2480 = vmatpush1.msra.mxu0 0.0
        %2481 = vmatprep.subr.mxu0 0.0
        %2482 = vmatpush1.msra.mxu0 0.0
        %2483 = vmatprep.subr.mxu0 0.0
        %2484 = vmatpush1.msra.mxu0 0.0
        %2485 = vmatprep.subr.mxu0 0.0
        %2486 = vmatpush1.msra.mxu0 0.0
        %2487 = vmatprep.subr.mxu0 0.0
        %2488 = vmatpush1.msra.mxu0 0.0
        %2489 = vmatprep.subr.mxu0 0.0
        %2490 = vmatpush1.msra.mxu0 0.0
        %2491 = vmatprep.subr.mxu0 0.0
        %2492 = vmatpush1.msra.mxu0 0.0
        %2493 = vmatprep.subr.mxu0 0.0
        %2494 = vmatpush1.msra.mxu0 0.0
        %2495 = vmatprep.subr.mxu0 0.0
        %2496 = vmatpush1.msra.mxu0 0.0
        %2497 = vmatprep.subr.mxu0 0.0
        %2498 = vmatpush1.msra.mxu0 0.0
        %2499 = vmatprep.subr.mxu0 0.0
        %2500 = vmatpush1.msra.mxu0 0.0
        %2501 = vmatprep.subr.mxu0 0.0
        %2502 = vmatpush1.msra.mxu0 0.0
        %2503 = vmatprep.subr.mxu0 0.0
        %2504 = vmatpush1.msra.mxu0 0.0
        %2505 = vmatprep.subr.mxu0 0.0
        %2506 = vmatpush1.msra.mxu0 0.0
        %2507 = vmatprep.subr.mxu0 0.0
        %2508 = vmatpush1.msra.mxu0 0.0
        %2509 = vmatprep.subr.mxu0 0.0
        %2510 = vmatpush1.msra.mxu0 0.0
        %2511 = vmatprep.subr.mxu0 0.0
        %2512 = vmatpush1.msra.mxu0 0.0
        %2513 = vmatprep.subr.mxu0 0.0
        %2514 = vmatpush1.msra.mxu0 0.0
        %2515 = vmatprep.subr.mxu0 0.0
        %2516 = vmatpush1.msra.mxu0 0.0
        %2517 = vmatprep.subr.mxu0 0.0
        %2518 = vmatpush1.msra.mxu0 0.0
        %2519 = vmatprep.subr.mxu0 0.0
        %2520 = vmatpush1.msra.mxu0 0.0
        %2521 = vmatprep.subr.mxu0 0.0
        %2522 = vmatpush1.msra.mxu0 0.0
        %2523 = vmatprep.subr.mxu0 0.0
        %2524 = vmatpush1.msra.mxu0 0.0
        %2525 = vmatprep.subr.mxu0 0.0
        %2526 = vmatpush1.msra.mxu0 0.0
        %2527 = vmatprep.subr.mxu0 0.0
        %2528 = vmatpush1.msra.mxu0 0.0
        %2529 = vmatprep.subr.mxu0 0.0
        %2530 = vmatpush1.msra.mxu0 0.0
        %2531 = vmatprep.subr.mxu0 0.0
        %2532 = vmatpush1.msra.mxu0 0.0
        %2533 = vmatprep.mubr.f32.mxu0 0.0
        %2534 = vmatmul.mubr.f32.gmra.mrb[0].mxu0 %v2467
        %v2535 = vpop.f32.mrb[0].mxu0
        %v2536 = vadd.f32 0.0, %v2535
        %v2537 = vpop.f32.mrb[0].mxu0
        %2538 = vdwg.mxu0
        %v2539 = vadd.f32 %v2454, %v2536
        %s2540 = scalar_lea.vmem [#allocation20], 32
        %v2541 = vld [vmem:[%s2540] sm:$0xff]
        %v2543 = vsel %vm2217, %v2541, 0
        %2545 = vmatprep.subr.mxu0 0.0
        %2546 = vmatpush1.msra.mxu0 %v2178
        %2547 = vmatprep.subr.mxu0 0.0
        %2548 = vmatpush1.msra.mxu0 %v2179
        %2549 = vmatprep.subr.mxu0 0.0
        %2550 = vmatpush1.msra.mxu0 %v2180
        %2551 = vmatprep.subr.mxu0 0.0
        %2552 = vmatpush1.msra.mxu0 0.0
        %2553 = vmatprep.subr.mxu0 0.0
        %2554 = vmatpush1.msra.mxu0 0.0
        %2555 = vmatprep.subr.mxu0 0.0
        %2556 = vmatpush1.msra.mxu0 0.0
        %2557 = vmatprep.subr.mxu0 0.0
        %2558 = vmatpush1.msra.mxu0 0.0
        %2559 = vmatprep.subr.mxu0 0.0
        %2560 = vmatpush1.msra.mxu0 0.0
        %2561 = vmatprep.subr.mxu0 0.0
        %2562 = vmatpush1.msra.mxu0 0.0
        %2563 = vmatprep.subr.mxu0 0.0
        %2564 = vmatpush1.msra.mxu0 0.0
        %2565 = vmatprep.subr.mxu0 0.0
        %2566 = vmatpush1.msra.mxu0 0.0
        %2567 = vmatprep.subr.mxu0 0.0
        %2568 = vmatpush1.msra.mxu0 0.0
        %2569 = vmatprep.subr.mxu0 0.0
        %2570 = vmatpush1.msra.mxu0 0.0
        %2571 = vmatprep.subr.mxu0 0.0
        %2572 = vmatpush1.msra.mxu0 0.0
        %2573 = vmatprep.subr.mxu0 0.0
        %2574 = vmatpush1.msra.mxu0 0.0
        %2575 = vmatprep.subr.mxu0 0.0
        %2576 = vmatpush1.msra.mxu0 0.0
        %2577 = vmatprep.subr.mxu0 0.0
        %2578 = vmatpush1.msra.mxu0 0.0
        %2579 = vmatprep.subr.mxu0 0.0
        %2580 = vmatpush1.msra.mxu0 0.0
        %2581 = vmatprep.subr.mxu0 0.0
        %2582 = vmatpush1.msra.mxu0 0.0
        %2583 = vmatprep.subr.mxu0 0.0
        %2584 = vmatpush1.msra.mxu0 0.0
        %2585 = vmatprep.subr.mxu0 0.0
        %2586 = vmatpush1.msra.mxu0 0.0
        %2587 = vmatprep.subr.mxu0 0.0
        %2588 = vmatpush1.msra.mxu0 0.0
        %2589 = vmatprep.subr.mxu0 0.0
        %2590 = vmatpush1.msra.mxu0 0.0
        %2591 = vmatprep.subr.mxu0 0.0
        %2592 = vmatpush1.msra.mxu0 0.0
        %2593 = vmatprep.subr.mxu0 0.0
        %2594 = vmatpush1.msra.mxu0 0.0
        %2595 = vmatprep.subr.mxu0 0.0
        %2596 = vmatpush1.msra.mxu0 0.0
        %2597 = vmatprep.subr.mxu0 0.0
        %2598 = vmatpush1.msra.mxu0 0.0
        %2599 = vmatprep.subr.mxu0 0.0
        %2600 = vmatpush1.msra.mxu0 0.0
        %2601 = vmatprep.subr.mxu0 0.0
        %2602 = vmatpush1.msra.mxu0 0.0
        %2603 = vmatprep.subr.mxu0 0.0
        %2604 = vmatpush1.msra.mxu0 0.0
        %2605 = vmatprep.subr.mxu0 0.0
        %2606 = vmatpush1.msra.mxu0 0.0
        %2607 = vmatprep.subr.mxu0 0.0
        %2608 = vmatpush1.msra.mxu0 0.0
        %2609 = vmatprep.mubr.f32.mxu0 0.0
        %2610 = vmatmul.mubr.f32.gmra.mrb[0].mxu0 %v2543
        %v2611 = vpop.f32.mrb[0].mxu0
        %v2612 = vadd.f32 0.0, %v2611
        %v2613 = vpop.f32.mrb[0].mxu0
        %2614 = vdwg.mxu0
        %v2615 = vadd.f32 %v2539, %v2612
        %2616 = vrot.lane.b32.xlu0 %v2178, 127
        %v2617 = vpop.permute.xlu0 %2616
        %2618 = vrot.lane.b32.xlu0 %v2179, 127
        %v2619 = vpop.permute.xlu0 %2618
        %2620 = vrot.lane.b32.xlu0 %v2180, 127
        %v2621 = vpop.permute.xlu0 %2620
        %v2622 = vsel %vm1497, %v2617, 0.0
        %v2623 = vsel %vm1497, %v2619, 0.0
        %v2624 = vsel %vm1497, %v2621, 0.0
        %s2625 = scalar_lea.vmem [#allocation20], 40
        %v2626 = vld [vmem:[%s2625] sm:$0xff]
        %v2628 = vsel %vm2217, %v2626, 0
        %2630 = vmatprep.subr.mxu0 0.0
        %2631 = vmatpush1.msra.mxu0 %v2622
        %2632 = vmatprep.subr.mxu0 0.0
        %2633 = vmatpush1.msra.mxu0 %v2623
        %2634 = vmatprep.subr.mxu0 0.0
        %2635 = vmatpush1.msra.mxu0 %v2624
        %2636 = vmatprep.subr.mxu0 0.0
        %2637 = vmatpush1.msra.mxu0 0.0
        %2638 = vmatprep.subr.mxu0 0.0
        %2639 = vmatpush1.msra.mxu0 0.0
        %2640 = vmatprep.subr.mxu0 0.0
        %2641 = vmatpush1.msra.mxu0 0.0
        %2642 = vmatprep.subr.mxu0 0.0
        %2643 = vmatpush1.msra.mxu0 0.0
        %2644 = vmatprep.subr.mxu0 0.0
        %2645 = vmatpush1.msra.mxu0 0.0
        %2646 = vmatprep.subr.mxu0 0.0
        %2647 = vmatpush1.msra.mxu0 0.0
        %2648 = vmatprep.subr.mxu0 0.0
        %2649 = vmatpush1.msra.mxu0 0.0
        %2650 = vmatprep.subr.mxu0 0.0
        %2651 = vmatpush1.msra.mxu0 0.0
        %2652 = vmatprep.subr.mxu0 0.0
        %2653 = vmatpush1.msra.mxu0 0.0
        %2654 = vmatprep.subr.mxu0 0.0
        %2655 = vmatpush1.msra.mxu0 0.0
        %2656 = vmatprep.subr.mxu0 0.0
        %2657 = vmatpush1.msra.mxu0 0.0
        %2658 = vmatprep.subr.mxu0 0.0
        %2659 = vmatpush1.msra.mxu0 0.0
        %2660 = vmatprep.subr.mxu0 0.0
        %2661 = vmatpush1.msra.mxu0 0.0
        %2662 = vmatprep.subr.mxu0 0.0
        %2663 = vmatpush1.msra.mxu0 0.0
        %2664 = vmatprep.subr.mxu0 0.0
        %2665 = vmatpush1.msra.mxu0 0.0
        %2666 = vmatprep.subr.mxu0 0.0
        %2667 = vmatpush1.msra.mxu0 0.0
        %2668 = vmatprep.subr.mxu0 0.0
        %2669 = vmatpush1.msra.mxu0 0.0
        %2670 = vmatprep.subr.mxu0 0.0
        %2671 = vmatpush1.msra.mxu0 0.0
        %2672 = vmatprep.subr.mxu0 0.0
        %2673 = vmatpush1.msra.mxu0 0.0
        %2674 = vmatprep.subr.mxu0 0.0
        %2675 = vmatpush1.msra.mxu0 0.0
        %2676 = vmatprep.subr.mxu0 0.0
        %2677 = vmatpush1.msra.mxu0 0.0
        %2678 = vmatprep.subr.mxu0 0.0
        %2679 = vmatpush1.msra.mxu0 0.0
        %2680 = vmatprep.subr.mxu0 0.0
        %2681 = vmatpush1.msra.mxu0 0.0
        %2682 = vmatprep.subr.mxu0 0.0
        %2683 = vmatpush1.msra.mxu0 0.0
        %2684 = vmatprep.subr.mxu0 0.0
        %2685 = vmatpush1.msra.mxu0 0.0
        %2686 = vmatprep.subr.mxu0 0.0
        %2687 = vmatpush1.msra.mxu0 0.0
        %2688 = vmatprep.subr.mxu0 0.0
        %2689 = vmatpush1.msra.mxu0 0.0
        %2690 = vmatprep.subr.mxu0 0.0
        %2691 = vmatpush1.msra.mxu0 0.0
        %2692 = vmatprep.subr.mxu0 0.0
        %2693 = vmatpush1.msra.mxu0 0.0
        %2694 = vmatprep.mubr.f32.mxu0 0.0
        %2695 = vmatmul.mubr.f32.gmra.mrb[0].mxu0 %v2628
        %v2696 = vpop.f32.mrb[0].mxu0
        %v2697 = vadd.f32 0.0, %v2696
        %v2698 = vpop.f32.mrb[0].mxu0
        %2699 = vdwg.mxu0
        %v2700 = vadd.f32 %v2615, %v2697
        %s2701 = scalar_lea.vmem [#allocation23], 16
        %v2702 = vld [vmem:[%s2701] sm:$0xff]
        %2704 = vset.pattern.permute.xlu0 0
        %2705 = vperm.xlu0 %2704, %v2702
        %v2706 = vpop.permute.xlu0 %2705
        %v2708 = vadd.f32 %v2700, %v2706
        %s2709 = scalar_lea.vmem [#allocation24], 16
        %v2710 = vld [vmem:[%s2709] sm:$0xff]
        %s2711 = scalar_lea.vmem [#allocation26], 16
        %v2712 = vld [vmem:[%s2711] sm:$0xff]
        %s2713 = scalar_lea.vmem [#allocation27], 16
        %v2714 = vld [vmem:[%s2713] sm:$0xff]
        %2715 = vadd.xlane.f32.xlu0 %v2708
        %v2716 = vpop.xlane.xlu0 %2715
        %v2717 = vmul.f32 %v2716, 0.0078125
        %v2718 = vmul.f32 %v2708, %v2708
        %2719 = vadd.xlane.f32.xlu0 %v2718
        %v2720 = vpop.xlane.xlu0 %2719
        %v2721 = vmul.f32 %v2720, 0.0078125
        %v2722 = vmul.f32 %v2717, %v2717
        %v2723 = vsub.f32 %v2721, %v2722
        %v2724 = vmax.f32 %v2723, 0.0
        %v2725 = vsub.f32 %v2708, %v2717
        %v2726 = vadd.f32 %v2724, 1e-05
        %v2727 = vrsqrt.pop %v2726
        %v2728 = vmul.f32 %v2725, %v2727
        %2730 = vset.pattern.permute.xlu0 0
        %2731 = vperm.xlu0 %2730, %v2710
        %v2732 = vpop.permute.xlu0 %2731
        %v2734 = vmul.f32 %v2728, %v2732
        %2736 = vset.pattern.permute.xlu0 0
        %2737 = vperm.xlu0 %2736, %v2712
        %v2738 = vpop.permute.xlu0 %2737
        %v2740 = vadd.f32 %v2734, %v2738
        %vm2741 = vcmp.ge.f32.partialorder %v2740, 0.0
        %2743 = vset.pattern.permute.xlu0 0
        %2744 = vperm.xlu0 %2743, %v2714
        %v2745 = vpop.permute.xlu0 %2744
        %v2747 = vmul.f32 %v2745, %v2740
        %v2748 = vsel %vm2741, %v2740, %v2747
        %2749 = vst [vmem:[#allocation2] sm:$0xff] %v2748
        %v2750 = vld [vmem:[#allocation2] sm:$0xff]
        %v2751 = vld [vmem:[#allocation2 + $0x8] sm:$0xff]
        %v2752 = vld [vmem:[#allocation2 + $0x10] sm:$0xff]
        %v2753 = vld [vmem:[#allocation2 + $0x18] sm:$0xff]
        %vm2754 = vcmp.ge.f32.partialorder %v940, 8.0
        %vm2755 = vmand %vm2754, %vm942
        %vm2756 = vmand %vm2754, %vm943
        %2757 = vrot.lane.b32.xlu0 %v2750, 1
        %v2758 = vpop.permute.xlu0 %2757
        %2759 = vrot.lane.b32.xlu0 %v2751, 1
        %v2760 = vpop.permute.xlu0 %2759
        %2761 = vrot.lane.b32.xlu0 %v2752, 1
        %v2762 = vpop.permute.xlu0 %2761
        %2763 = vrot.lane.b32.xlu0 %v2753, 1
        %v2764 = vpop.permute.xlu0 %2763
        %v2765 = vsel %vm2755, 1, 0
        %v2766 = vlaneseq
        %v2767 = vshrl.u32 %v2766, 7
        %v2768 = vsub.s32 0, %v2767
        %v2769 = vrot.slane %v2765, %v2768
        %vm2770 = vcmp.eq.s32.totalorder %v2769, 1
        %v2771 = vsel %vm2770, %v2758, 0.0
        %v2772 = vsel %vm2770, %v2760, 0.0
        %v2773 = vsel %vm2770, %v2762, 0.0
        %v2774 = vsel %vm2770, %v2764, 0.0
        %v2775 = vld [vmem:[#allocation21] sm:$0xff]
        %v2776 = vsel %vm2754, 1, 0
        %v2777 = vlaneseq
        %v2778 = vshrl.u32 %v2777, 7
        %v2779 = vsub.s32 0, %v2778
        %v2780 = vrot.slane %v2776, %v2779
        %vm2781 = vcmp.eq.s32.totalorder %v2780, 1
        %v2782 = vsel %vm2781, %v2750, 0.0
        %v2783 = vsel %vm2781, %v2751, 0.0
        %v2784 = vsel %vm2781, %v2752, 0.0
        %v2785 = vsel %vm2781, %v2753, 0.0
        %s2786 = scalar_lea.vmem [#allocation21], 8
        %v2787 = vld [vmem:[%s2786] sm:$0xff]
        %vm2788 = vcmask 261120
        %v2790 = vsel %vm2788, %v2787, 0
        %2792 = vmatprep.subr.mxu0 0.0
        %2793 = vmatpush1.msra.mxu0 %v2782
        %2794 = vmatprep.subr.mxu0 0.0
        %2795 = vmatpush1.msra.mxu0 %v2783
        %2796 = vmatprep.subr.mxu0 0.0
        %2797 = vmatpush1.msra.mxu0 %v2784
        %2798 = vmatprep.subr.mxu0 0.0
        %2799 = vmatpush1.msra.mxu0 %v2785
        %2800 = vmatprep.subr.mxu0 0.0
        %2801 = vmatpush1.msra.mxu0 0.0
        %2802 = vmatprep.subr.mxu0 0.0
        %2803 = vmatpush1.msra.mxu0 0.0
        %2804 = vmatprep.subr.mxu0 0.0
        %2805 = vmatpush1.msra.mxu0 0.0
        %2806 = vmatprep.subr.mxu0 0.0
        %2807 = vmatpush1.msra.mxu0 0.0
        %2808 = vmatprep.subr.mxu0 0.0
        %2809 = vmatpush1.msra.mxu0 0.0
        %2810 = vmatprep.subr.mxu0 0.0
        %2811 = vmatpush1.msra.mxu0 0.0
        %2812 = vmatprep.subr.mxu0 0.0
        %2813 = vmatpush1.msra.mxu0 0.0
        %2814 = vmatprep.subr.mxu0 0.0
        %2815 = vmatpush1.msra.mxu0 0.0
        %2816 = vmatprep.subr.mxu0 0.0
        %2817 = vmatpush1.msra.mxu0 0.0
        %2818 = vmatprep.subr.mxu0 0.0
        %2819 = vmatpush1.msra.mxu0 0.0
        %2820 = vmatprep.subr.mxu0 0.0
        %2821 = vmatpush1.msra.mxu0 0.0
        %2822 = vmatprep.subr.mxu0 0.0
        %2823 = vmatpush1.msra.mxu0 0.0
        %2824 = vmatprep.subr.mxu0 0.0
        %2825 = vmatpush1.msra.mxu0 0.0
        %2826 = vmatprep.subr.mxu0 0.0
        %2827 = vmatpush1.msra.mxu0 0.0
        %2828 = vmatprep.subr.mxu0 0.0
        %2829 = vmatpush1.msra.mxu0 0.0
        %2830 = vmatprep.subr.mxu0 0.0
        %2831 = vmatpush1.msra.mxu0 0.0
        %2832 = vmatprep.subr.mxu0 0.0
        %2833 = vmatpush1.msra.mxu0 0.0
        %2834 = vmatprep.subr.mxu0 0.0
        %2835 = vmatpush1.msra.mxu0 0.0
        %2836 = vmatprep.subr.mxu0 0.0
        %2837 = vmatpush1.msra.mxu0 0.0
        %2838 = vmatprep.subr.mxu0 0.0
        %2839 = vmatpush1.msra.mxu0 0.0
        %2840 = vmatprep.subr.mxu0 0.0
        %2841 = vmatpush1.msra.mxu0 0.0
        %2842 = vmatprep.subr.mxu0 0.0
        %2843 = vmatpush1.msra.mxu0 0.0
        %2844 = vmatprep.subr.mxu0 0.0
        %2845 = vmatpush1.msra.mxu0 0.0
        %2846 = vmatprep.subr.mxu0 0.0
        %2847 = vmatpush1.msra.mxu0 0.0
        %2848 = vmatprep.subr.mxu0 0.0
        %2849 = vmatpush1.msra.mxu0 0.0
        %2850 = vmatprep.subr.mxu0 0.0
        %2851 = vmatpush1.msra.mxu0 0.0
        %2852 = vmatprep.subr.mxu0 0.0
        %2853 = vmatpush1.msra.mxu0 0.0
        %2854 = vmatprep.subr.mxu0 0.0
        %2855 = vmatpush1.msra.mxu0 0.0
        %2856 = vmatprep.mubr.f32.mxu0 0.0
        %2857 = vmatmul.mubr.f32.gmra.mrb[0].mxu0 %v2790
        %v2858 = vpop.f32.mrb[0].mxu0
        %v2859 = vadd.f32 0.0, %v2858
        %v2860 = vpop.f32.mrb[0].mxu0
        %2861 = vdwg.mxu0
        %v2863 = vsel %vm2788, %v2775, 0
        %2865 = vmatprep.subr.mxu0 0.0
        %2866 = vmatpush1.msra.mxu0 %v2771
        %2867 = vmatprep.subr.mxu0 0.0
        %2868 = vmatpush1.msra.mxu0 %v2772
        %2869 = vmatprep.subr.mxu0 0.0
        %2870 = vmatpush1.msra.mxu0 %v2773
        %2871 = vmatprep.subr.mxu0 0.0
        %2872 = vmatpush1.msra.mxu0 %v2774
        %2873 = vmatprep.subr.mxu0 0.0
        %2874 = vmatpush1.msra.mxu0 0.0
        %2875 = vmatprep.subr.mxu0 0.0
        %2876 = vmatpush1.msra.mxu0 0.0
        %2877 = vmatprep.subr.mxu0 0.0
        %2878 = vmatpush1.msra.mxu0 0.0
        %2879 = vmatprep.subr.mxu0 0.0
        %2880 = vmatpush1.msra.mxu0 0.0
        %2881 = vmatprep.subr.mxu0 0.0
        %2882 = vmatpush1.msra.mxu0 0.0
        %2883 = vmatprep.subr.mxu0 0.0
        %2884 = vmatpush1.msra.mxu0 0.0
        %2885 = vmatprep.subr.mxu0 0.0
        %2886 = vmatpush1.msra.mxu0 0.0
        %2887 = vmatprep.subr.mxu0 0.0
        %2888 = vmatpush1.msra.mxu0 0.0
        %2889 = vmatprep.subr.mxu0 0.0
        %2890 = vmatpush1.msra.mxu0 0.0
        %2891 = vmatprep.subr.mxu0 0.0
        %2892 = vmatpush1.msra.mxu0 0.0
        %2893 = vmatprep.subr.mxu0 0.0
        %2894 = vmatpush1.msra.mxu0 0.0
        %2895 = vmatprep.subr.mxu0 0.0
        %2896 = vmatpush1.msra.mxu0 0.0
        %2897 = vmatprep.subr.mxu0 0.0
        %2898 = vmatpush1.msra.mxu0 0.0
        %2899 = vmatprep.subr.mxu0 0.0
        %2900 = vmatpush1.msra.mxu0 0.0
        %2901 = vmatprep.subr.mxu0 0.0
        %2902 = vmatpush1.msra.mxu0 0.0
        %2903 = vmatprep.subr.mxu0 0.0
        %2904 = vmatpush1.msra.mxu0 0.0
        %2905 = vmatprep.subr.mxu0 0.0
        %2906 = vmatpush1.msra.mxu0 0.0
        %2907 = vmatprep.subr.mxu0 0.0
        %2908 = vmatpush1.msra.mxu0 0.0
        %2909 = vmatprep.subr.mxu0 0.0
        %2910 = vmatpush1.msra.mxu0 0.0
        %2911 = vmatprep.subr.mxu0 0.0
        %2912 = vmatpush1.msra.mxu0 0.0
        %2913 = vmatprep.subr.mxu0 0.0
        %2914 = vmatpush1.msra.mxu0 0.0
        %2915 = vmatprep.subr.mxu0 0.0
        %2916 = vmatpush1.msra.mxu0 0.0
        %2917 = vmatprep.subr.mxu0 0.0
        %2918 = vmatpush1.msra.mxu0 0.0
        %2919 = vmatprep.subr.mxu0 0.0
        %2920 = vmatpush1.msra.mxu0 0.0
        %2921 = vmatprep.subr.mxu0 0.0
        %2922 = vmatpush1.msra.mxu0 0.0
        %2923 = vmatprep.subr.mxu0 0.0
        %2924 = vmatpush1.msra.mxu0 0.0
        %2925 = vmatprep.subr.mxu0 0.0
        %2926 = vmatpush1.msra.mxu0 0.0
        %2927 = vmatprep.subr.mxu0 0.0
        %2928 = vmatpush1.msra.mxu0 0.0
        %2929 = vmatprep.mubr.f32.mxu0 0.0
        %2930 = vmatmul.mubr.f32.gmra.mrb[0].mxu0 %v2863
        %v2931 = vpop.f32.mrb[0].mxu0
        %v2932 = vadd.f32 %v2859, %v2931
        %v2933 = vpop.f32.mrb[0].mxu0
        %2934 = vdwg.mxu0
        %2935 = vrot.lane.b32.xlu0 %v2750, 127
        %v2936 = vpop.permute.xlu0 %2935
        %2937 = vrot.lane.b32.xlu0 %v2751, 127
        %v2938 = vpop.permute.xlu0 %2937
        %2939 = vrot.lane.b32.xlu0 %v2752, 127
        %v2940 = vpop.permute.xlu0 %2939
        %2941 = vrot.lane.b32.xlu0 %v2753, 127
        %v2942 = vpop.permute.xlu0 %2941
        %v2943 = vsel %vm2756, 1, 0
        %v2944 = vlaneseq
        %v2945 = vshrl.u32 %v2944, 7
        %v2946 = vsub.s32 0, %v2945
        %v2947 = vrot.slane %v2943, %v2946
        %vm2948 = vcmp.eq.s32.totalorder %v2947, 1
        %v2949 = vsel %vm2948, %v2936, 0.0
        %v2950 = vsel %vm2948, %v2938, 0.0
        %v2951 = vsel %vm2948, %v2940, 0.0
        %v2952 = vsel %vm2948, %v2942, 0.0
        %s2953 = scalar_lea.vmem [#allocation21], 16
        %v2954 = vld [vmem:[%s2953] sm:$0xff]
        %v2956 = vsel %vm2788, %v2954, 0
        %2958 = vmatprep.subr.mxu0 0.0
        %2959 = vmatpush1.msra.mxu0 %v2949
        %2960 = vmatprep.subr.mxu0 0.0
        %2961 = vmatpush1.msra.mxu0 %v2950
        %2962 = vmatprep.subr.mxu0 0.0
        %2963 = vmatpush1.msra.mxu0 %v2951
        %2964 = vmatprep.subr.mxu0 0.0
        %2965 = vmatpush1.msra.mxu0 %v2952
        %2966 = vmatprep.subr.mxu0 0.0
        %2967 = vmatpush1.msra.mxu0 0.0
        %2968 = vmatprep.subr.mxu0 0.0
        %2969 = vmatpush1.msra.mxu0 0.0
        %2970 = vmatprep.subr.mxu0 0.0
        %2971 = vmatpush1.msra.mxu0 0.0
        %2972 = vmatprep.subr.mxu0 0.0
        %2973 = vmatpush1.msra.mxu0 0.0
        %2974 = vmatprep.subr.mxu0 0.0
        %2975 = vmatpush1.msra.mxu0 0.0
        %2976 = vmatprep.subr.mxu0 0.0
        %2977 = vmatpush1.msra.mxu0 0.0
        %2978 = vmatprep.subr.mxu0 0.0
        %2979 = vmatpush1.msra.mxu0 0.0
        %2980 = vmatprep.subr.mxu0 0.0
        %2981 = vmatpush1.msra.mxu0 0.0
        %2982 = vmatprep.subr.mxu0 0.0
        %2983 = vmatpush1.msra.mxu0 0.0
        %2984 = vmatprep.subr.mxu0 0.0
        %2985 = vmatpush1.msra.mxu0 0.0
        %2986 = vmatprep.subr.mxu0 0.0
        %2987 = vmatpush1.msra.mxu0 0.0
        %2988 = vmatprep.subr.mxu0 0.0
        %2989 = vmatpush1.msra.mxu0 0.0
        %2990 = vmatprep.subr.mxu0 0.0
        %2991 = vmatpush1.msra.mxu0 0.0
        %2992 = vmatprep.subr.mxu0 0.0
        %2993 = vmatpush1.msra.mxu0 0.0
        %2994 = vmatprep.subr.mxu0 0.0
        %2995 = vmatpush1.msra.mxu0 0.0
        %2996 = vmatprep.subr.mxu0 0.0
        %2997 = vmatpush1.msra.mxu0 0.0
        %2998 = vmatprep.subr.mxu0 0.0
        %2999 = vmatpush1.msra.mxu0 0.0
        %3000 = vmatprep.subr.mxu0 0.0
        %3001 = vmatpush1.msra.mxu0 0.0
        %3002 = vmatprep.subr.mxu0 0.0
        %3003 = vmatpush1.msra.mxu0 0.0
        %3004 = vmatprep.subr.mxu0 0.0
        %3005 = vmatpush1.msra.mxu0 0.0
        %3006 = vmatprep.subr.mxu0 0.0
        %3007 = vmatpush1.msra.mxu0 0.0
        %3008 = vmatprep.subr.mxu0 0.0
        %3009 = vmatpush1.msra.mxu0 0.0
        %3010 = vmatprep.subr.mxu0 0.0
        %3011 = vmatpush1.msra.mxu0 0.0
        %3012 = vmatprep.subr.mxu0 0.0
        %3013 = vmatpush1.msra.mxu0 0.0
        %3014 = vmatprep.subr.mxu0 0.0
        %3015 = vmatpush1.msra.mxu0 0.0
        %3016 = vmatprep.subr.mxu0 0.0
        %3017 = vmatpush1.msra.mxu0 0.0
        %3018 = vmatprep.subr.mxu0 0.0
        %3019 = vmatpush1.msra.mxu0 0.0
        %3020 = vmatprep.subr.mxu0 0.0
        %3021 = vmatpush1.msra.mxu0 0.0
        %3022 = vmatprep.mubr.f32.mxu0 0.0
        %3023 = vmatmul.mubr.f32.gmra.mrb[0].mxu0 %v2956
        %v3024 = vpop.f32.mrb[0].mxu0
        %v3025 = vadd.f32 0.0, %v3024
        %v3026 = vpop.f32.mrb[0].mxu0
        %3027 = vdwg.mxu0
        %v3028 = vadd.f32 %v2932, %v3025
        %v3029 = vsel %vm1336, %v2758, 0.0
        %v3030 = vsel %vm1336, %v2760, 0.0
        %v3031 = vsel %vm1336, %v2762, 0.0
        %v3032 = vsel %vm1336, %v2764, 0.0
        %s3033 = scalar_lea.vmem [#allocation21], 24
        %v3034 = vld [vmem:[%s3033] sm:$0xff]
        %v3036 = vsel %vm2788, %v3034, 0
        %3038 = vmatprep.subr.mxu0 0.0
        %3039 = vmatpush1.msra.mxu0 %v3029
        %3040 = vmatprep.subr.mxu0 0.0
        %3041 = vmatpush1.msra.mxu0 %v3030
        %3042 = vmatprep.subr.mxu0 0.0
        %3043 = vmatpush1.msra.mxu0 %v3031
        %3044 = vmatprep.subr.mxu0 0.0
        %3045 = vmatpush1.msra.mxu0 %v3032
        %3046 = vmatprep.subr.mxu0 0.0
        %3047 = vmatpush1.msra.mxu0 0.0
        %3048 = vmatprep.subr.mxu0 0.0
        %3049 = vmatpush1.msra.mxu0 0.0
        %3050 = vmatprep.subr.mxu0 0.0
        %3051 = vmatpush1.msra.mxu0 0.0
        %3052 = vmatprep.subr.mxu0 0.0
        %3053 = vmatpush1.msra.mxu0 0.0
        %3054 = vmatprep.subr.mxu0 0.0
        %3055 = vmatpush1.msra.mxu0 0.0
        %3056 = vmatprep.subr.mxu0 0.0
        %3057 = vmatpush1.msra.mxu0 0.0
        %3058 = vmatprep.subr.mxu0 0.0
        %3059 = vmatpush1.msra.mxu0 0.0
        %3060 = vmatprep.subr.mxu0 0.0
        %3061 = vmatpush1.msra.mxu0 0.0
        %3062 = vmatprep.subr.mxu0 0.0
        %3063 = vmatpush1.msra.mxu0 0.0
        %3064 = vmatprep.subr.mxu0 0.0
        %3065 = vmatpush1.msra.mxu0 0.0
        %3066 = vmatprep.subr.mxu0 0.0
        %3067 = vmatpush1.msra.mxu0 0.0
        %3068 = vmatprep.subr.mxu0 0.0
        %3069 = vmatpush1.msra.mxu0 0.0
        %3070 = vmatprep.subr.mxu0 0.0
        %3071 = vmatpush1.msra.mxu0 0.0
        %3072 = vmatprep.subr.mxu0 0.0
        %3073 = vmatpush1.msra.mxu0 0.0
        %3074 = vmatprep.subr.mxu0 0.0
        %3075 = vmatpush1.msra.mxu0 0.0
        %3076 = vmatprep.subr.mxu0 0.0
        %3077 = vmatpush1.msra.mxu0 0.0
        %3078 = vmatprep.subr.mxu0 0.0
        %3079 = vmatpush1.msra.mxu0 0.0
        %3080 = vmatprep.subr.mxu0 0.0
        %3081 = vmatpush1.msra.mxu0 0.0
        %3082 = vmatprep.subr.mxu0 0.0
        %3083 = vmatpush1.msra.mxu0 0.0
        %3084 = vmatprep.subr.mxu0 0.0
        %3085 = vmatpush1.msra.mxu0 0.0
        %3086 = vmatprep.subr.mxu0 0.0
        %3087 = vmatpush1.msra.mxu0 0.0
        %3088 = vmatprep.subr.mxu0 0.0
        %3089 = vmatpush1.msra.mxu0 0.0
        %3090 = vmatprep.subr.mxu0 0.0
        %3091 = vmatpush1.msra.mxu0 0.0
        %3092 = vmatprep.subr.mxu0 0.0
        %3093 = vmatpush1.msra.mxu0 0.0
        %3094 = vmatprep.subr.mxu0 0.0
        %3095 = vmatpush1.msra.mxu0 0.0
        %3096 = vmatprep.subr.mxu0 0.0
        %3097 = vmatpush1.msra.mxu0 0.0
        %3098 = vmatprep.subr.mxu0 0.0
        %3099 = vmatpush1.msra.mxu0 0.0
        %3100 = vmatprep.subr.mxu0 0.0
        %3101 = vmatpush1.msra.mxu0 0.0
        %3102 = vmatprep.mubr.f32.mxu0 0.0
        %3103 = vmatmul.mubr.f32.gmra.mrb[0].mxu0 %v3036
        %v3104 = vpop.f32.mrb[0].mxu0
        %v3105 = vadd.f32 0.0, %v3104
        %v3106 = vpop.f32.mrb[0].mxu0
        %3107 = vdwg.mxu0
        %v3108 = vadd.f32 %v3028, %v3105
        %s3109 = scalar_lea.vmem [#allocation21], 32
        %v3110 = vld [vmem:[%s3109] sm:$0xff]
        %v3112 = vsel %vm2788, %v3110, 0
        %3114 = vmatprep.subr.mxu0 0.0
        %3115 = vmatpush1.msra.mxu0 %v2750
        %3116 = vmatprep.subr.mxu0 0.0
        %3117 = vmatpush1.msra.mxu0 %v2751
        %3118 = vmatprep.subr.mxu0 0.0
        %3119 = vmatpush1.msra.mxu0 %v2752
        %3120 = vmatprep.subr.mxu0 0.0
        %3121 = vmatpush1.msra.mxu0 %v2753
        %3122 = vmatprep.subr.mxu0 0.0
        %3123 = vmatpush1.msra.mxu0 0.0
        %3124 = vmatprep.subr.mxu0 0.0
        %3125 = vmatpush1.msra.mxu0 0.0
        %3126 = vmatprep.subr.mxu0 0.0
        %3127 = vmatpush1.msra.mxu0 0.0
        %3128 = vmatprep.subr.mxu0 0.0
        %3129 = vmatpush1.msra.mxu0 0.0
        %3130 = vmatprep.subr.mxu0 0.0
        %3131 = vmatpush1.msra.mxu0 0.0
        %3132 = vmatprep.subr.mxu0 0.0
        %3133 = vmatpush1.msra.mxu0 0.0
        %3134 = vmatprep.subr.mxu0 0.0
        %3135 = vmatpush1.msra.mxu0 0.0
        %3136 = vmatprep.subr.mxu0 0.0
        %3137 = vmatpush1.msra.mxu0 0.0
        %3138 = vmatprep.subr.mxu0 0.0
        %3139 = vmatpush1.msra.mxu0 0.0
        %3140 = vmatprep.subr.mxu0 0.0
        %3141 = vmatpush1.msra.mxu0 0.0
        %3142 = vmatprep.subr.mxu0 0.0
        %3143 = vmatpush1.msra.mxu0 0.0
        %3144 = vmatprep.subr.mxu0 0.0
        %3145 = vmatpush1.msra.mxu0 0.0
        %3146 = vmatprep.subr.mxu0 0.0
        %3147 = vmatpush1.msra.mxu0 0.0
        %3148 = vmatprep.subr.mxu0 0.0
        %3149 = vmatpush1.msra.mxu0 0.0
        %3150 = vmatprep.subr.mxu0 0.0
        %3151 = vmatpush1.msra.mxu0 0.0
        %3152 = vmatprep.subr.mxu0 0.0
        %3153 = vmatpush1.msra.mxu0 0.0
        %3154 = vmatprep.subr.mxu0 0.0
        %3155 = vmatpush1.msra.mxu0 0.0
        %3156 = vmatprep.subr.mxu0 0.0
        %3157 = vmatpush1.msra.mxu0 0.0
        %3158 = vmatprep.subr.mxu0 0.0
        %3159 = vmatpush1.msra.mxu0 0.0
        %3160 = vmatprep.subr.mxu0 0.0
        %3161 = vmatpush1.msra.mxu0 0.0
        %3162 = vmatprep.subr.mxu0 0.0
        %3163 = vmatpush1.msra.mxu0 0.0
        %3164 = vmatprep.subr.mxu0 0.0
        %3165 = vmatpush1.msra.mxu0 0.0
        %3166 = vmatprep.subr.mxu0 0.0
        %3167 = vmatpush1.msra.mxu0 0.0
        %3168 = vmatprep.subr.mxu0 0.0
        %3169 = vmatpush1.msra.mxu0 0.0
        %3170 = vmatprep.subr.mxu0 0.0
        %3171 = vmatpush1.msra.mxu0 0.0
        %3172 = vmatprep.subr.mxu0 0.0
        %3173 = vmatpush1.msra.mxu0 0.0
        %3174 = vmatprep.subr.mxu0 0.0
        %3175 = vmatpush1.msra.mxu0 0.0
        %3176 = vmatprep.subr.mxu0 0.0
        %3177 = vmatpush1.msra.mxu0 0.0
        %3178 = vmatprep.mubr.f32.mxu0 0.0
        %3179 = vmatmul.mubr.f32.gmra.mrb[0].mxu0 %v3112
        %v3180 = vpop.f32.mrb[0].mxu0
        %v3181 = vadd.f32 0.0, %v3180
        %v3182 = vpop.f32.mrb[0].mxu0
        %3183 = vdwg.mxu0
        %v3184 = vadd.f32 %v3108, %v3181
        %v3185 = vsel %vm1497, %v2936, 0.0
        %v3186 = vsel %vm1497, %v2938, 0.0
        %v3187 = vsel %vm1497, %v2940, 0.0
        %v3188 = vsel %vm1497, %v2942, 0.0
        %s3189 = scalar_lea.vmem [#allocation21], 40
        %v3190 = vld [vmem:[%s3189] sm:$0xff]
        %v3192 = vsel %vm2788, %v3190, 0
        %3194 = vmatprep.subr.mxu0 0.0
        %3195 = vmatpush1.msra.mxu0 %v3185
        %3196 = vmatprep.subr.mxu0 0.0
        %3197 = vmatpush1.msra.mxu0 %v3186
        %3198 = vmatprep.subr.mxu0 0.0
        %3199 = vmatpush1.msra.mxu0 %v3187
        %3200 = vmatprep.subr.mxu0 0.0
        %3201 = vmatpush1.msra.mxu0 %v3188
        %3202 = vmatprep.subr.mxu0 0.0
        %3203 = vmatpush1.msra.mxu0 0.0
        %3204 = vmatprep.subr.mxu0 0.0
        %3205 = vmatpush1.msra.mxu0 0.0
        %3206 = vmatprep.subr.mxu0 0.0
        %3207 = vmatpush1.msra.mxu0 0.0
        %3208 = vmatprep.subr.mxu0 0.0
        %3209 = vmatpush1.msra.mxu0 0.0
        %3210 = vmatprep.subr.mxu0 0.0
        %3211 = vmatpush1.msra.mxu0 0.0
        %3212 = vmatprep.subr.mxu0 0.0
        %3213 = vmatpush1.msra.mxu0 0.0
        %3214 = vmatprep.subr.mxu0 0.0
        %3215 = vmatpush1.msra.mxu0 0.0
        %3216 = vmatprep.subr.mxu0 0.0
        %3217 = vmatpush1.msra.mxu0 0.0
        %3218 = vmatprep.subr.mxu0 0.0
        %3219 = vmatpush1.msra.mxu0 0.0
        %3220 = vmatprep.subr.mxu0 0.0
        %3221 = vmatpush1.msra.mxu0 0.0
        %3222 = vmatprep.subr.mxu0 0.0
        %3223 = vmatpush1.msra.mxu0 0.0
        %3224 = vmatprep.subr.mxu0 0.0
        %3225 = vmatpush1.msra.mxu0 0.0
        %3226 = vmatprep.subr.mxu0 0.0
        %3227 = vmatpush1.msra.mxu0 0.0
        %3228 = vmatprep.subr.mxu0 0.0
        %3229 = vmatpush1.msra.mxu0 0.0
        %3230 = vmatprep.subr.mxu0 0.0
        %3231 = vmatpush1.msra.mxu0 0.0
        %3232 = vmatprep.subr.mxu0 0.0
        %3233 = vmatpush1.msra.mxu0 0.0
        %3234 = vmatprep.subr.mxu0 0.0
        %3235 = vmatpush1.msra.mxu0 0.0
        %3236 = vmatprep.subr.mxu0 0.0
        %3237 = vmatpush1.msra.mxu0 0.0
        %3238 = vmatprep.subr.mxu0 0.0
        %3239 = vmatpush1.msra.mxu0 0.0
        %3240 = vmatprep.subr.mxu0 0.0
        %3241 = vmatpush1.msra.mxu0 0.0
        %3242 = vmatprep.subr.mxu0 0.0
        %3243 = vmatpush1.msra.mxu0 0.0
        %3244 = vmatprep.subr.mxu0 0.0
        %3245 = vmatpush1.msra.mxu0 0.0
        %3246 = vmatprep.subr.mxu0 0.0
        %3247 = vmatpush1.msra.mxu0 0.0
        %3248 = vmatprep.subr.mxu0 0.0
        %3249 = vmatpush1.msra.mxu0 0.0
        %3250 = vmatprep.subr.mxu0 0.0
        %3251 = vmatpush1.msra.mxu0 0.0
        %3252 = vmatprep.subr.mxu0 0.0
        %3253 = vmatpush1.msra.mxu0 0.0
        %3254 = vmatprep.subr.mxu0 0.0
        %3255 = vmatpush1.msra.mxu0 0.0
        %3256 = vmatprep.subr.mxu0 0.0
        %3257 = vmatpush1.msra.mxu0 0.0
        %3258 = vmatprep.mubr.f32.mxu0 0.0
        %3259 = vmatmul.mubr.f32.gmra.mrb[0].mxu0 %v3192
        %v3260 = vpop.f32.mrb[0].mxu0
        %v3261 = vadd.f32 0.0, %v3260
        %v3262 = vpop.f32.mrb[0].mxu0
        %3263 = vdwg.mxu0
        %v3264 = vadd.f32 %v3184, %v3261
        %s3265 = scalar_lea.vmem [#allocation23], 24
        %v3266 = vld [vmem:[%s3265] sm:$0xff]
        %3268 = vset.pattern.permute.xlu0 0
        %3269 = vperm.xlu0 %3268, %v3266
        %v3270 = vpop.permute.xlu0 %3269
        %v3272 = vadd.f32 %v3264, %v3270
        %s3273 = scalar_lea.vmem [#allocation24], 24
        %v3274 = vld [vmem:[%s3273] sm:$0xff]
        %s3275 = scalar_lea.vmem [#allocation26], 24
        %v3276 = vld [vmem:[%s3275] sm:$0xff]
        %s3277 = scalar_lea.vmem [#allocation27], 24
        %v3278 = vld [vmem:[%s3277] sm:$0xff]
        %3279 = vadd.xlane.f32.xlu0 %v3272
        %v3280 = vpop.xlane.xlu0 %3279
        %v3281 = vmul.f32 %v3280, 0.0078125
        %v3282 = vmul.f32 %v3272, %v3272
        %3283 = vadd.xlane.f32.xlu0 %v3282
        %v3284 = vpop.xlane.xlu0 %3283
        %v3285 = vmul.f32 %v3284, 0.0078125
        %v3286 = vmul.f32 %v3281, %v3281
        %v3287 = vsub.f32 %v3285, %v3286
        %v3288 = vmax.f32 %v3287, 0.0
        %v3289 = vsub.f32 %v3272, %v3281
        %v3290 = vadd.f32 %v3288, 1e-05
        %v3291 = vrsqrt.pop %v3290
        %v3292 = vmul.f32 %v3289, %v3291
        %3294 = vset.pattern.permute.xlu0 0
        %3295 = vperm.xlu0 %3294, %v3274
        %v3296 = vpop.permute.xlu0 %3295
        %v3298 = vmul.f32 %v3292, %v3296
        %3300 = vset.pattern.permute.xlu0 0
        %3301 = vperm.xlu0 %3300, %v3276
        %v3302 = vpop.permute.xlu0 %3301
        %v3304 = vadd.f32 %v3298, %v3302
        %vm3305 = vcmp.ge.f32.partialorder %v3304, 0.0
        %3307 = vset.pattern.permute.xlu0 0
        %3308 = vperm.xlu0 %3307, %v3278
        %v3309 = vpop.permute.xlu0 %3308
        %v3311 = vmul.f32 %v3309, %v3304
        %v3312 = vsel %vm3305, %v3304, %v3311
        %3313 = vrot.lane.b32.xlu0 %v3312, 1
        %v3314 = vpop.permute.xlu0 %3313
        %v3315 = vsel %vm1336, %v3314, 0.0
        %v3316 = vld [vmem:[#allocation29] sm:$0xff]
        %s3317 = scalar_lea.vmem [#allocation29], 8
        %v3318 = vld [vmem:[%s3317] sm:$0xff]
        %v3320 = vsel %vm1097, %v3318, 0
        %3322 = vmatprep.subr.mxu0 0.0
        %3323 = vmatpush1.msra.mxu0 %v3312
        %3324 = vmatprep.subr.mxu0 0.0
        %3325 = vmatpush1.msra.mxu0 0.0
        %3326 = vmatprep.subr.mxu0 0.0
        %3327 = vmatpush1.msra.mxu0 0.0
        %3328 = vmatprep.subr.mxu0 0.0
        %3329 = vmatpush1.msra.mxu0 0.0
        %3330 = vmatprep.subr.mxu0 0.0
        %3331 = vmatpush1.msra.mxu0 0.0
        %3332 = vmatprep.subr.mxu0 0.0
        %3333 = vmatpush1.msra.mxu0 0.0
        %3334 = vmatprep.subr.mxu0 0.0
        %3335 = vmatpush1.msra.mxu0 0.0
        %3336 = vmatprep.subr.mxu0 0.0
        %3337 = vmatpush1.msra.mxu0 0.0
        %3338 = vmatprep.subr.mxu0 0.0
        %3339 = vmatpush1.msra.mxu0 0.0
        %3340 = vmatprep.subr.mxu0 0.0
        %3341 = vmatpush1.msra.mxu0 0.0
        %3342 = vmatprep.subr.mxu0 0.0
        %3343 = vmatpush1.msra.mxu0 0.0
        %3344 = vmatprep.subr.mxu0 0.0
        %3345 = vmatpush1.msra.mxu0 0.0
        %3346 = vmatprep.subr.mxu0 0.0
        %3347 = vmatpush1.msra.mxu0 0.0
        %3348 = vmatprep.subr.mxu0 0.0
        %3349 = vmatpush1.msra.mxu0 0.0
        %3350 = vmatprep.subr.mxu0 0.0
        %3351 = vmatpush1.msra.mxu0 0.0
        %3352 = vmatprep.subr.mxu0 0.0
        %3353 = vmatpush1.msra.mxu0 0.0
        %3354 = vmatprep.subr.mxu0 0.0
        %3355 = vmatpush1.msra.mxu0 0.0
        %3356 = vmatprep.subr.mxu0 0.0
        %3357 = vmatpush1.msra.mxu0 0.0
        %3358 = vmatprep.subr.mxu0 0.0
        %3359 = vmatpush1.msra.mxu0 0.0
        %3360 = vmatprep.subr.mxu0 0.0
        %3361 = vmatpush1.msra.mxu0 0.0
        %3362 = vmatprep.subr.mxu0 0.0
        %3363 = vmatpush1.msra.mxu0 0.0
        %3364 = vmatprep.subr.mxu0 0.0
        %3365 = vmatpush1.msra.mxu0 0.0
        %3366 = vmatprep.subr.mxu0 0.0
        %3367 = vmatpush1.msra.mxu0 0.0
        %3368 = vmatprep.subr.mxu0 0.0
        %3369 = vmatpush1.msra.mxu0 0.0
        %3370 = vmatprep.subr.mxu0 0.0
        %3371 = vmatpush1.msra.mxu0 0.0
        %3372 = vmatprep.subr.mxu0 0.0
        %3373 = vmatpush1.msra.mxu0 0.0
        %3374 = vmatprep.subr.mxu0 0.0
        %3375 = vmatpush1.msra.mxu0 0.0
        %3376 = vmatprep.subr.mxu0 0.0
        %3377 = vmatpush1.msra.mxu0 0.0
        %3378 = vmatprep.subr.mxu0 0.0
        %3379 = vmatpush1.msra.mxu0 0.0
        %3380 = vmatprep.subr.mxu0 0.0
        %3381 = vmatpush1.msra.mxu0 0.0
        %3382 = vmatprep.subr.mxu0 0.0
        %3383 = vmatpush1.msra.mxu0 0.0
        %3384 = vmatprep.subr.mxu0 0.0
        %3385 = vmatpush1.msra.mxu0 0.0
        %3386 = vmatprep.mubr.f32.mxu0 0.0
        %3387 = vmatmul.mubr.f32.gmra.mrb[0].mxu0 %v3320
        %v3388 = vpop.f32.mrb[0].mxu0
        %v3389 = vadd.f32 0.0, %v3388
        %v3390 = vpop.f32.mrb[0].mxu0
        %3391 = vdwg.mxu0
        %v3393 = vsel %vm1097, %v3316, 0
        %3395 = vmatprep.subr.mxu0 0.0
        %3396 = vmatpush1.msra.mxu0 %v3315
        %3397 = vmatprep.subr.mxu0 0.0
        %3398 = vmatpush1.msra.mxu0 0.0
        %3399 = vmatprep.subr.mxu0 0.0
        %3400 = vmatpush1.msra.mxu0 0.0
        %3401 = vmatprep.subr.mxu0 0.0
        %3402 = vmatpush1.msra.mxu0 0.0
        %3403 = vmatprep.subr.mxu0 0.0
        %3404 = vmatpush1.msra.mxu0 0.0
        %3405 = vmatprep.subr.mxu0 0.0
        %3406 = vmatpush1.msra.mxu0 0.0
        %3407 = vmatprep.subr.mxu0 0.0
        %3408 = vmatpush1.msra.mxu0 0.0
        %3409 = vmatprep.subr.mxu0 0.0
        %3410 = vmatpush1.msra.mxu0 0.0
        %3411 = vmatprep.subr.mxu0 0.0
        %3412 = vmatpush1.msra.mxu0 0.0
        %3413 = vmatprep.subr.mxu0 0.0
        %3414 = vmatpush1.msra.mxu0 0.0
        %3415 = vmatprep.subr.mxu0 0.0
        %3416 = vmatpush1.msra.mxu0 0.0
        %3417 = vmatprep.subr.mxu0 0.0
        %3418 = vmatpush1.msra.mxu0 0.0
        %3419 = vmatprep.subr.mxu0 0.0
        %3420 = vmatpush1.msra.mxu0 0.0
        %3421 = vmatprep.subr.mxu0 0.0
        %3422 = vmatpush1.msra.mxu0 0.0
        %3423 = vmatprep.subr.mxu0 0.0
        %3424 = vmatpush1.msra.mxu0 0.0
        %3425 = vmatprep.subr.mxu0 0.0
        %3426 = vmatpush1.msra.mxu0 0.0
        %3427 = vmatprep.subr.mxu0 0.0
        %3428 = vmatpush1.msra.mxu0 0.0
        %3429 = vmatprep.subr.mxu0 0.0
        %3430 = vmatpush1.msra.mxu0 0.0
        %3431 = vmatprep.subr.mxu0 0.0
        %3432 = vmatpush1.msra.mxu0 0.0
        %3433 = vmatprep.subr.mxu0 0.0
        %3434 = vmatpush1.msra.mxu0 0.0
        %3435 = vmatprep.subr.mxu0 0.0
        %3436 = vmatpush1.msra.mxu0 0.0
        %3437 = vmatprep.subr.mxu0 0.0
        %3438 = vmatpush1.msra.mxu0 0.0
        %3439 = vmatprep.subr.mxu0 0.0
        %3440 = vmatpush1.msra.mxu0 0.0
        %3441 = vmatprep.subr.mxu0 0.0
        %3442 = vmatpush1.msra.mxu0 0.0
        %3443 = vmatprep.subr.mxu0 0.0
        %3444 = vmatpush1.msra.mxu0 0.0
        %3445 = vmatprep.subr.mxu0 0.0
        %3446 = vmatpush1.msra.mxu0 0.0
        %3447 = vmatprep.subr.mxu0 0.0
        %3448 = vmatpush1.msra.mxu0 0.0
        %3449 = vmatprep.subr.mxu0 0.0
        %3450 = vmatpush1.msra.mxu0 0.0
        %3451 = vmatprep.subr.mxu0 0.0
        %3452 = vmatpush1.msra.mxu0 0.0
        %3453 = vmatprep.subr.mxu0 0.0
        %3454 = vmatpush1.msra.mxu0 0.0
        %3455 = vmatprep.subr.mxu0 0.0
        %3456 = vmatpush1.msra.mxu0 0.0
        %3457 = vmatprep.subr.mxu0 0.0
        %3458 = vmatpush1.msra.mxu0 0.0
        %3459 = vmatprep.mubr.f32.mxu0 0.0
        %3460 = vmatmul.mubr.f32.gmra.mrb[0].mxu0 %v3393
        %v3461 = vpop.f32.mrb[0].mxu0
        %v3462 = vadd.f32 %v3389, %v3461
        %v3463 = vpop.f32.mrb[0].mxu0
        %3464 = vdwg.mxu0
        %3465 = vrot.lane.b32.xlu0 %v3312, 127
        %v3466 = vpop.permute.xlu0 %3465
        %v3467 = vsel %vm1497, %v3466, 0.0
        %s3468 = scalar_lea.vmem [#allocation29], 16
        %v3469 = vld [vmem:[%s3468] sm:$0xff]
        %v3471 = vsel %vm1097, %v3469, 0
        %3473 = vmatprep.subr.mxu0 0.0
        %3474 = vmatpush1.msra.mxu0 %v3467
        %3475 = vmatprep.subr.mxu0 0.0
        %3476 = vmatpush1.msra.mxu0 0.0
        %3477 = vmatprep.subr.mxu0 0.0
        %3478 = vmatpush1.msra.mxu0 0.0
        %3479 = vmatprep.subr.mxu0 0.0
        %3480 = vmatpush1.msra.mxu0 0.0
        %3481 = vmatprep.subr.mxu0 0.0
        %3482 = vmatpush1.msra.mxu0 0.0
        %3483 = vmatprep.subr.mxu0 0.0
        %3484 = vmatpush1.msra.mxu0 0.0
        %3485 = vmatprep.subr.mxu0 0.0
        %3486 = vmatpush1.msra.mxu0 0.0
        %3487 = vmatprep.subr.mxu0 0.0
        %3488 = vmatpush1.msra.mxu0 0.0
        %3489 = vmatprep.subr.mxu0 0.0
        %3490 = vmatpush1.msra.mxu0 0.0
        %3491 = vmatprep.subr.mxu0 0.0
        %3492 = vmatpush1.msra.mxu0 0.0
        %3493 = vmatprep.subr.mxu0 0.0
        %3494 = vmatpush1.msra.mxu0 0.0
        %3495 = vmatprep.subr.mxu0 0.0
        %3496 = vmatpush1.msra.mxu0 0.0
        %3497 = vmatprep.subr.mxu0 0.0
        %3498 = vmatpush1.msra.mxu0 0.0
        %3499 = vmatprep.subr.mxu0 0.0
        %3500 = vmatpush1.msra.mxu0 0.0
        %3501 = vmatprep.subr.mxu0 0.0
        %3502 = vmatpush1.msra.mxu0 0.0
        %3503 = vmatprep.subr.mxu0 0.0
        %3504 = vmatpush1.msra.mxu0 0.0
        %3505 = vmatprep.subr.mxu0 0.0
        %3506 = vmatpush1.msra.mxu0 0.0
        %3507 = vmatprep.subr.mxu0 0.0
        %3508 = vmatpush1.msra.mxu0 0.0
        %3509 = vmatprep.subr.mxu0 0.0
        %3510 = vmatpush1.msra.mxu0 0.0
        %3511 = vmatprep.subr.mxu0 0.0
        %3512 = vmatpush1.msra.mxu0 0.0
        %3513 = vmatprep.subr.mxu0 0.0
        %3514 = vmatpush1.msra.mxu0 0.0
        %3515 = vmatprep.subr.mxu0 0.0
        %3516 = vmatpush1.msra.mxu0 0.0
        %3517 = vmatprep.subr.mxu0 0.0
        %3518 = vmatpush1.msra.mxu0 0.0
        %3519 = vmatprep.subr.mxu0 0.0
        %3520 = vmatpush1.msra.mxu0 0.0
        %3521 = vmatprep.subr.mxu0 0.0
        %3522 = vmatpush1.msra.mxu0 0.0
        %3523 = vmatprep.subr.mxu0 0.0
        %3524 = vmatpush1.msra.mxu0 0.0
        %3525 = vmatprep.subr.mxu0 0.0
        %3526 = vmatpush1.msra.mxu0 0.0
        %3527 = vmatprep.subr.mxu0 0.0
        %3528 = vmatpush1.msra.mxu0 0.0
        %3529 = vmatprep.subr.mxu0 0.0
        %3530 = vmatpush1.msra.mxu0 0.0
        %3531 = vmatprep.subr.mxu0 0.0
        %3532 = vmatpush1.msra.mxu0 0.0
        %3533 = vmatprep.subr.mxu0 0.0
        %3534 = vmatpush1.msra.mxu0 0.0
        %3535 = vmatprep.subr.mxu0 0.0
        %3536 = vmatpush1.msra.mxu0 0.0
        %3537 = vmatprep.mubr.f32.mxu0 0.0
        %3538 = vmatmul.mubr.f32.gmra.mrb[0].mxu0 %v3471
        %v3539 = vpop.f32.mrb[0].mxu0
        %v3540 = vadd.f32 0.0, %v3539
        %v3541 = vpop.f32.mrb[0].mxu0
        %3542 = vdwg.mxu0
        %v3543 = vadd.f32 %v3462, %v3540
        %v3544 = vld [vmem:[#allocation30] sm:$0xff]
        %3546 = vset.pattern.permute.xlu0 0
        %3547 = vperm.xlu0 %3546, %v3544
        %v3548 = vpop.permute.xlu0 %3547
        %v3550 = vadd.f32 %v3543, %v3548
        %v3551 = vld [vmem:[#allocation32] sm:$0xff]
        %v3552 = vld [vmem:[#allocation33] sm:$0xff]
        %v3553 = vld [vmem:[#allocation35] sm:$0xff]
        %v3554 = vsel %vm946, 1, 0
        %v3555 = vlaneseq
        %v3556 = vshrl.u32 %v3555, 7
        %v3557 = vsub.s32 0, %v3556
        %v3558 = vrot.slane %v3554, %v3557
        %vm3559 = vcmp.eq.s32.totalorder %v3558, 1
        %v3560 = vsel %vm3559, %v3550, 0.0
        %3561 = vadd.xlane.f32.xlu0 %v3560
        %v3562 = vpop.xlane.xlu0 %3561
        %v3563 = vmul.f32 %v3562, 0.015625
        %v3564 = vmul.f32 %v3560, %v3560
        %3565 = vadd.xlane.f32.xlu0 %v3564
        %v3566 = vpop.xlane.xlu0 %3565
        %v3567 = vmul.f32 %v3566, 0.015625
        %v3568 = vmul.f32 %v3563, %v3563
        %v3569 = vsub.f32 %v3567, %v3568
        %v3570 = vmax.f32 %v3569, 0.0
        %v3571 = vsub.f32 %v3550, %v3563
        %v3572 = vadd.f32 %v3570, 1e-05
        %v3573 = vrsqrt.pop %v3572
        %v3574 = vmul.f32 %v3571, %v3573
        %3576 = vset.pattern.permute.xlu0 0
        %3577 = vperm.xlu0 %3576, %v3551
        %v3578 = vpop.permute.xlu0 %3577
        %v3580 = vmul.f32 %v3574, %v3578
        %3582 = vset.pattern.permute.xlu0 0
        %3583 = vperm.xlu0 %3582, %v3552
        %v3584 = vpop.permute.xlu0 %3583
        %v3586 = vadd.f32 %v3580, %v3584
        %vm3587 = vcmp.ge.f32.partialorder %v3586, 0.0
        %3589 = vset.pattern.permute.xlu0 0
        %3590 = vperm.xlu0 %3589, %v3553
        %v3591 = vpop.permute.xlu0 %3590
        %v3593 = vmul.f32 %v3591, %v3586
        %v3594 = vsel %vm3587, %v3586, %v3593
        %3595 = vst [vmem:[%s939] sm:$0xff] %v3594
        %s3596 = sand.u32 %s502, 1
        %s3597 = scalar_lea.sflag [#allocation5], %s3596
        %s3598 = sand.u32 %s502, 1
        %s3599 = smul.addr %s3598, 8
        %s3600 = scalar_lea.vmem [#allocation36], %s3599
        // Predicated region
        $region189: #{_lambda_.1} parent=103 // pred_check
          %p3601 = pneg %p512
        $region190: #{_lambda_.1} parent=103 // pred_check_branch
          %3603 = sbr.rel (%p3601) target = $region192
        $region191: #{_lambda_.1} parent=103 // pred_region
          %s3605 = ssub.s32 128, 128
          %3606 = vsyncadd %s3597, %s3605
          %s3607 = smul.addr %s48, 128
          %s3608 = scalar_lea.hbm %s21, %s3607
          %s3610 = sshll.u32 %s3600, 4
          %s3611 = int_to_ptr.vmem [resolvable:$true] %s3610
          %3613 = dma.vmem_to_hbm [thread:$0]  %s3611, 128, %s3608, %s3597
        $region192: #{_lambda_.1} parent=103 // pred_fallthru
          _
      $region104: #{_lambda_.1} parent=5 // pred_fallthru
        _
      %p3614 = scmp.le.s32.totalorder 2, %s43
      // Predicated region
      $region193: #{_lambda_.1} parent=5 // pred_check
        %p3615 = pneg %p3614
      $region194: #{_lambda_.1} parent=5 // pred_check_branch
        %3617 = sbr.rel (%p3615) target = $region196
      $region195: #{_lambda_.1} parent=5 // pred_region
        %s3618 = ssub.s32 %s43, 2
        // Predicated region
        $region197: #{_lambda_.1} parent=195 // pred_check
          %p3619 = pneg %p518
        $region198: #{_lambda_.1} parent=195 // pred_check_branch
          %3621 = sbr.rel (%p3619) target = $region200
        $region199: #{_lambda_.1} parent=195 // pred_region
          %s3622 = sand.u32 %s503, 1
          %s3623 = scalar_lea.sflag [#allocation5], %s3622
          %s3624 = sand.u32 %s503, 1
          %s3625 = smul.addr %s3624, 8
          %s3626 = scalar_lea.vmem [#allocation36], %s3625
          %3627 = dma.done %s3623, 128
        $region200: #{_lambda_.1} parent=195 // pred_fallthru
          _
      $region196: #{_lambda_.1} parent=5 // pred_fallthru
        _
    $region6: #{_lambda_.1} parent=1 // loop_footer
      %s47 = sadd.s32 1, %s43
    $region7: #{_lambda_.1} parent=1 // loop_footer_branch
      %42 = sbr.rel target = $region3
    $region8: #{_lambda_.1} parent=1 // loop_exit
      _
    %3628 = vsyncpa [#allocation4], 1
    %s3629 = scalar_lea.sflag [#allocation4], 1
    %3630 = vsyncpa %s3629, 1
    %3631 = vsyncpa [#allocation7], 1
    %3632 = vsyncpa [#allocation10], 1
    %3633 = vsyncpa [#allocation13], 1
    %3634 = vsyncpa [#allocation16], 1
    %3635 = vsyncpa [#allocation19], 1
    %3636 = vsyncpa [#allocation22], 1
    %3637 = vsyncpa [#allocation25], 1
    %3638 = vsyncpa [#allocation28], 1
    %3639 = vsyncpa [#allocation31], 1
    %3640 = vsyncpa [#allocation34], 1
    %3641 = vsyncpa [#allocation5], 1
    %s3642 = scalar_lea.sflag [#allocation5], 1
    %3643 = vsyncpa %s3642, 1

</llo_original>
